<compile_context>
chip_gen: v7x
topology: tpu7x:2x2x1
jax: 0.10.0
libtpu: 0.0.40
codegen_flags: <defaults>
</compile_context>

<pallas_src>
import jax
import jax.numpy as jnp
from jax import lax
from jax.experimental import pallas as pl
from jax.experimental.pallas import tpu as pltpu

# Architecture constants (hidden/embedding scaled down from 256 for the demo).
MEL_N_CHANNELS = 40
MODEL_HIDDEN_SIZE = 32
MODEL_EMBED_SIZE = 32
MODEL_NUM_LAYERS = 3  # handled explicitly as 3 fused LSTM layers below

TIME_CHUNK_CAP = 32   # max LSTM steps resident per chunk (bounds VMEM at large T)


def _round_up(x, m):
    return ((x + m - 1) // m) * m


def _largest_divisor_leq(n, cap):
    for d in range(min(n, cap), 0, -1):
        if n % d == 0:
            return d
    return n


def _permute_gates(w):
    """Permute gate columns from PyTorch [i|f|g|o] to [i|f|o|g] (last axis = 4H)."""
    H = w.shape[-1] // 4
    return jnp.concatenate([w[..., :2 * H], w[..., 3 * H:], w[..., 2 * H:3 * H]], axis=-1)


def _padded_bytes(shape, dtype):
    """VMEM footprint of an array padded to (8, 128) granules on its minor dims."""
    s = tuple(shape) if len(shape) >= 2 else (1,) + tuple(shape)
    lead = 1
    for d in s[:-2]:
        lead *= d
    return lead * _round_up(s[-2], 8) * _round_up(s[-1], 128) * jnp.dtype(dtype).itemsize


def speaker_encoder_kernel(x_ref,               # (tc*Bb, C)  f32, time-major chunk
                           w_ih0,               # (C, 4H)     bf16, gate cols [i|f|o|g]
                           w_hh0, b0,           # (H, 4H), (1, 4H)   f32
                           w1f, b1,             # (2H, 4H), (1, 4H)  fused [ih; hh], layer 1
                           w2f, b2,             # (2H, 4H), (1, 4H)  fused [ih; hh], layer 2
                           w_lin, b_lin,        # (H, E), (1, E)
                           out_ref,             # (Bb, E)
                           xproj_ref,           # VMEM scratch (tc*Bb, 4H) f32
                           state_ref):          # VMEM scratch (6, Bb, H) f32: h0,c0,h1,c1,h2,c2
    t_blk = pl.program_id(1)
    Bb = out_ref.shape[0]
    H = w_hh0.shape[0]
    TC = x_ref.shape[0] // Bb

    # Zero the carried LSTM state at the first time chunk of this batch block
    # (matches PyTorch's default hidden_init=None).
    @pl.when(t_blk == 0)
    def _():
        state_ref[...] = jnp.zeros_like(state_ref)

    # ---- Hoisted layer-0 input projection: one bf16 MXU matmul over the whole chunk
    # (f32 accumulation), bias folded in. Only recurrent matmuls stay on the serial path.
    xproj_ref[...] = (
        jnp.dot(x_ref[...].astype(jnp.bfloat16), w_ih0[...],
                preferred_element_type=jnp.float32) + b0[...])

    # Loop-invariant weight / bias loads (hoisted out of the recurrence).
    w_hh0_v = w_hh0[...]
    w1_v, b1_v = w1f[...], b1[...]
    w2_v, b2_v = w2f[...], b2[...]

    def lstm_cell(gates, c):
        """gates: (Bb, 4H) pre-activations with columns [i|f|o|g]; c: (Bb, H)."""
        # 3H sigmoid + H tanh (columns pre-permuted in the wrapper) instead of
        # full-width sigmoid AND tanh -> half the EUP work per cell.
        sig = jax.nn.sigmoid(gates[:, :3 * H])
        g_g = jnp.tanh(gates[:, 3 * H:])
        i_g = sig[:, 0 * H:1 * H]
        f_g = sig[:, 1 * H:2 * H]
        o_g = sig[:, 2 * H:3 * H]
        c_new = f_g * c + i_g * g_g
        h_new = o_g * jnp.tanh(c_new)
        return h_new, c_new

    def step(s, carry):
        h0, c0, h1, c1, h2, c2 = carry
        row = pl.multiple_of(s * Bb, Bb)                  # sublane-aligned dynamic slice
        xp = xproj_ref[pl.ds(row, Bb), :]                 # (Bb, 4H) precomputed x-proj
        # Layer 0: only the recurrent matmul (input projection + bias already in xp).
        g0 = xp + jnp.dot(h0, w_hh0_v, preferred_element_type=jnp.float32)
        h0, c0 = lstm_cell(g0, c0)
        # Layers 1/2: one fused (Bb, 2H) @ (2H, 4H) matmul each (ih + hh fused).
        g1 = jnp.dot(jnp.concatenate([h0, h1], axis=1), w1_v,
                     preferred_element_type=jnp.float32) + b1_v
        h1, c1 = lstm_cell(g1, c1)
        g2 = jnp.dot(jnp.concatenate([h1, h2], axis=1), w2_v,
                     preferred_element_type=jnp.float32) + b2_v
        h2, c2 = lstm_cell(g2, c2)
        return (h0, c0, h1, c1, h2, c2)

    carry = tuple(state_ref[i] for i in range(6))
    # Partial unroll: keeps cross-step MXU/EUP overlap visible to the scheduler
    # without exploding vreg live ranges / compile time at production chunk lengths.
    carry = lax.fori_loop(0, TC, step, carry, unroll=min(TC, 8))
    for i in range(6):
        state_ref[i] = carry[i]

    # Finalize on the last time chunk: Linear -> ReLU -> L2 normalize (rsqrt on EUP).
    @pl.when(t_blk == pl.num_programs(1) - 1)
    def _():
        h_last = carry[4]                                  # hidden[-1] of the top layer
        embeds_raw = jnp.maximum(
            jnp.dot(h_last, w_lin[...], preferred_element_type=jnp.float32) + b_lin[...],
            0.0)
        sumsq = jnp.sum(embeds_raw * embeds_raw, axis=1, keepdims=True)
        out_ref[...] = embeds_raw * lax.rsqrt(jnp.maximum(sumsq, 1e-12))


def speaker_encoder_forward(utterances, params, *, time_chunk_cap=TIME_CHUNK_CAP):
    """utterances: (B, T, C) float32, batch-first like the PyTorch module."""
    B, T, C = utterances.shape
    H, E = MODEL_HIDDEN_SIZE, MODEL_EMBED_SIZE

    # ---- batch padding / blocking -------------------------------------------------
    Bp = _round_up(B, 8)
    nb = 2 if Bp >= 16 else 1           # >=2 blocks lets v7x shard rows over its 2 TCs
    Bp = _round_up(Bp, 8 * nb)
    Bb = Bp // nb

    # ---- time chunking (largest divisor of T up to the cap; worst case = T) --------
    tc = _largest_divisor_leq(T, time_chunk_cap)
    nt = T // tc

    # ---- input layout: (B,T,C) -> (nb, nt, tc*Bb, C), time-major inside a chunk ----
    x = jnp.transpose(utterances, (1, 0, 2))               # (T, B, C)
    if Bp != B:
        x = jnp.pad(x, ((0, 0), (0, Bp - B), (0, 0)))
    x = (x.reshape(nt, tc, nb, Bb, C)
          .transpose(2, 0, 1, 3, 4)
          .reshape(nb, nt, tc * Bb, C))

    # ---- weight prep (permute gate cols, fuse ih/hh, bf16 feed for the hoisted matmul).
    # In a serving pipeline do this once per model, not per call.
    w_ih0 = _permute_gates(params["w_ih0"]).astype(jnp.bfloat16)
    w_hh0 = _permute_gates(params["w_hh0"])
    b0 = _permute_gates(params["b0"])
    w1f = jnp.concatenate([_permute_gates(params["w_ih1"]),
                           _permute_gates(params["w_hh1"])], axis=0)
    b1 = _permute_gates(params["b1"])
    w2f = jnp.concatenate([_permute_gates(params["w_ih2"]),
                           _permute_gates(params["w_hh2"])], axis=0)
    b2 = _permute_gates(params["b2"])
    w_lin, b_lin = params["w_lin"], params["b_lin"]

    args = (x, w_ih0, w_hh0, b0, w1f, b1, w2f, b2, w_lin, b_lin)

    def const_spec(shape):
        return pl.BlockSpec(shape, lambda b, t: (0,) * len(shape))

    in_specs = [
        pl.BlockSpec((None, None, tc * Bb, C), lambda b, t: (b, t, 0, 0)),  # x chunk
        const_spec((C, 4 * H)),       # w_ih0 (bf16)
        const_spec((H, 4 * H)),       # w_hh0
        const_spec((1, 4 * H)),       # b0
        const_spec((2 * H, 4 * H)),   # w1f
        const_spec((1, 4 * H)),       # b1
        const_spec((2 * H, 4 * H)),   # w2f
        const_spec((1, 4 * H)),       # b2
        const_spec((H, E)),           # w_lin
        const_spec((1, E)),           # b_lin
    ]

    # ---- VMEM budget sized from the actual chunk requirement (not a blind constant).
    est = 2 * _padded_bytes((tc * Bb, C), jnp.float32)            # x chunk (double-buffered)
    est += 2 * _padded_bytes((Bb, E), jnp.float32)                # out block
    est += 2 * (_padded_bytes((C, 4 * H), jnp.bfloat16)
                + _padded_bytes((H, 4 * H), jnp.float32)
                + 2 * _padded_bytes((2 * H, 4 * H), jnp.float32)
                + 3 * _padded_bytes((1, 4 * H), jnp.float32)
                + _padded_bytes((H, E), jnp.float32)
                + _padded_bytes((1, E), jnp.float32))
    est += _padded_bytes((tc * Bb, 4 * H), jnp.float32)           # xproj scratch
    est += _padded_bytes((6, Bb, H), jnp.float32)                 # carried LSTM state
    vmem_limit = int(min(max(2 * est, 32 << 20), 64 << 20))       # stay under v7x physical

    out = pl.pallas_call(
        speaker_encoder_kernel,
        out_shape=jax.ShapeDtypeStruct((Bp, E), jnp.float32),
        grid_spec=pltpu.PrefetchScalarGridSpec(
            num_scalar_prefetch=0,
            grid=(nb, nt),                                        # time (carried) innermost
            in_specs=in_specs,
            out_specs=pl.BlockSpec((Bb, E), lambda b, t: (b, 0)),
            scratch_shapes=[pltpu.VMEM((tc * Bb, 4 * H), jnp.float32),
                            pltpu.VMEM((6, Bb, H), jnp.float32)]),
        compiler_params=pltpu.CompilerParams(
            dimension_semantics=("parallel", "arbitrary"),
            vmem_limit_bytes=vmem_limit),
    )(*args)
    return out[:B]


def init_params(key):
    """Deterministic init matching PyTorch shapes (stored transposed for x @ W,
    gate columns in PyTorch order [i|f|g|o]; the wrapper re-permutes/fuses them)."""
    H, E, C = MODEL_HIDDEN_SIZE, MODEL_EMBED_SIZE, MEL_N_CHANNELS
    k = 1.0 / jnp.sqrt(jnp.float32(H))
    keys = jax.random.split(key, 14)

    def u(kk, shape):
        return jax.random.uniform(kk, shape, jnp.float32, -k, k)

    params = {}
    in_sizes = [C, H, H]
    for layer in range(MODEL_NUM_LAYERS):
        i0 = layer * 4
        params[f"w_ih{layer}"] = u(keys[i0 + 0], (in_sizes[layer], 4 * H))
        params[f"w_hh{layer}"] = u(keys[i0 + 1], (H, 4 * H))
        # bias_ih + bias_hh fused into a single bias per layer.
        params[f"b{layer}"] = (u(keys[i0 + 2], (1, 4 * H)) + u(keys[i0 + 3], (1, 4 * H)))
    params["w_lin"] = u(keys[12], (H, E))
    params["b_lin"] = u(keys[13], (1, E))
    return params


def speaker_encoder_reference(utterances, params):
    """Pure-JAX f32 reference of the same forward pass (PyTorch gate order), for validation."""
    H = MODEL_HIDDEN_SIZE
    B, T, _ = utterances.shape
    seq = utterances
    h_last = None
    for layer in range(MODEL_NUM_LAYERS):
        w_ih, w_hh, b = params[f"w_ih{layer}"], params[f"w_hh{layer}"], params[f"b{layer}"]
        h = jnp.zeros((B, H), jnp.float32)
        c = jnp.zeros((B, H), jnp.float32)
        outs = []
        for t in range(T):
            gates = seq[:, t, :] @ w_ih + h @ w_hh + b
            i_g = jax.nn.sigmoid(gates[:, 0 * H:1 * H])
            f_g = jax.nn.sigmoid(gates[:, 1 * H:2 * H])
            g_g = jnp.tanh(gates[:, 2 * H:3 * H])
            o_g = jax.nn.sigmoid(gates[:, 3 * H:4 * H])
            c = f_g * c + i_g * g_g
            h = o_g * jnp.tanh(c)
            outs.append(h)
        seq = jnp.stack(outs, axis=1)
        h_last = h
    embeds_raw = jnp.maximum(h_last @ params["w_lin"] + params["b_lin"], 0.0)
    return embeds_raw / jnp.linalg.norm(embeds_raw, axis=1, keepdims=True)


if __name__ == "__main__":
    key = jax.random.PRNGKey(0)
    k_param, k_data = jax.random.split(key)

    B, T, C = 4, 8, MEL_N_CHANNELS                      # small demo shapes
    utterances = jax.random.normal(k_data, (B, T, C), jnp.float32)
    params = init_params(k_param)

    embeds = speaker_encoder_forward(utterances, params)
    embeds = jax.block_until_ready(embeds)

    ref = speaker_encoder_reference(utterances, params)
    assert embeds.shape == (B, MODEL_EMBED_SIZE)
    # bf16 feed on the hoisted layer-0 projection (f32 accumulation) vs the pure-f32
    # reference: tolerance widened from 2e-3 accordingly.
    assert jnp.allclose(embeds, ref, rtol=3e-2, atol=3e-2), "mismatch vs JAX reference"

    print("KERNEL_OK")
</pallas_src>

<mosaic_0001>
module attributes {stable_mosaic.version = 11 : i64} {
  func.func @speaker_encoder_kernel(%arg0: i32, %arg1: i32, %arg2: memref<1x1x64x40xf32, #tpu.memory_space<vmem>>, %arg3: memref<40x128xbf16, #tpu.memory_space<vmem>>, %arg4: memref<32x128xf32, #tpu.memory_space<vmem>>, %arg5: memref<1x128xf32, #tpu.memory_space<vmem>>, %arg6: memref<64x128xf32, #tpu.memory_space<vmem>>, %arg7: memref<1x128xf32, #tpu.memory_space<vmem>>, %arg8: memref<64x128xf32, #tpu.memory_space<vmem>>, %arg9: memref<1x128xf32, #tpu.memory_space<vmem>>, %arg10: memref<32x32xf32, #tpu.memory_space<vmem>>, %arg11: memref<1x32xf32, #tpu.memory_space<vmem>>, %arg12: memref<8x32xf32, #tpu.memory_space<vmem>>, %arg13: memref<64x128xf32, #tpu.memory_space<vmem>>, %arg14: memref<6x8x32xf32, #tpu.memory_space<vmem>>) attributes {dimension_semantics = [#tpu.dimension_semantics<parallel>, #tpu.dimension_semantics<arbitrary>], iteration_bounds = array<i64: 1, 1>, scalar_prefetch = 0 : i64, scratch_operands = 2 : i64, tpu.core_type = #tpu.core_type<tc>, window_params = [{transform_indices = @transform_0, window_bounds = array<i64: 1, 1, 64, 40>}, {pipeline_mode = #tpu.pipeline_mode<synchronous>, transform_indices = @transform_1, window_bounds = array<i64: 40, 128>}, {pipeline_mode = #tpu.pipeline_mode<synchronous>, transform_indices = @transform_2, window_bounds = array<i64: 32, 128>}, {pipeline_mode = #tpu.pipeline_mode<synchronous>, transform_indices = @transform_3, window_bounds = array<i64: 1, 128>}, {pipeline_mode = #tpu.pipeline_mode<synchronous>, transform_indices = @transform_4, window_bounds = array<i64: 64, 128>}, {pipeline_mode = #tpu.pipeline_mode<synchronous>, transform_indices = @transform_5, window_bounds = array<i64: 1, 128>}, {pipeline_mode = #tpu.pipeline_mode<synchronous>, transform_indices = @transform_6, window_bounds = array<i64: 64, 128>}, {pipeline_mode = #tpu.pipeline_mode<synchronous>, transform_indices = @transform_7, window_bounds = array<i64: 1, 128>}, {pipeline_mode = #tpu.pipeline_mode<synchronous>, transform_indices = @transform_8, window_bounds = array<i64: 32, 32>}, {pipeline_mode = #tpu.pipeline_mode<synchronous>, transform_indices = @transform_9, window_bounds = array<i64: 1, 32>}, {transform_indices = @transform_10, window_bounds = array<i64: 8, 32>}]} {
    %c0_i32 = arith.constant 0 : i32
    %0 = arith.cmpi eq, %arg1, %c0_i32 : i32
    %1 = arith.extui %0 : i1 to i32
    %c0_i32_0 = arith.constant 0 : i32
    %2 = arith.cmpi ne, %1, %c0_i32_0 : i32
    scf.if %2 {
      %cst_118 = arith.constant 0.000000e+00 : f32
      %546 = vector.broadcast %cst_118 : f32 to vector<6x8x32xf32>
      %c0_119 = arith.constant 0 : index
      %c0_120 = arith.constant 0 : index
      %c0_121 = arith.constant 0 : index
      %547 = vector.load %arg14[%c0_119, %c0_120, %c0_121] : memref<6x8x32xf32, #tpu.memory_space<vmem>>, vector<6x8x32xf32>
      tpu.vector_store %arg14[%c0_119, %c0_120, %c0_121], %546 {strides = array<i32>} : memref<6x8x32xf32, #tpu.memory_space<vmem>>, vector<6x8x32xf32>,
    } else {
    }
    %c0 = arith.constant 0 : index
    %c0_1 = arith.constant 0 : index
    %c0_2 = arith.constant 0 : index
    %c0_3 = arith.constant 0 : index
    %3 = vector.load %arg2[%c0, %c0_1, %c0_2, %c0_3] : memref<1x1x64x40xf32, #tpu.memory_space<vmem>>, vector<1x1x64x40xf32>
    %4 = vector.shape_cast %3 : vector<1x1x64x40xf32> to vector<64x40xf32>
    %5 = arith.truncf %4 : vector<64x40xf32> to vector<64x40xbf16>
    %c0_4 = arith.constant 0 : index
    %c0_5 = arith.constant 0 : index
    %6 = vector.load %arg3[%c0_4, %c0_5] : memref<40x128xbf16, #tpu.memory_space<vmem>>, vector<40x128xbf16>
    %cst = arith.constant dense<0.000000e+00> : vector<64x128xf32>
    %7 = tpu.matmul %5, %6, %cst {dimension_numbers = #tpu.dot_dimension_numbers<[1], [0], [0], [1], [0, 0, 1, 1], [], []>} : vector<64x40xbf16>, vector<40x128xbf16>, vector<64x128xf32> -> vector<64x128xf32>
    %c0_6 = arith.constant 0 : index
    %c0_7 = arith.constant 0 : index
    %8 = vector.load %arg5[%c0_6, %c0_7] : memref<1x128xf32, #tpu.memory_space<vmem>>, vector<1x128xf32>
    %9 = vector.broadcast %8 : vector<1x128xf32> to vector<64x128xf32>
    %10 = arith.addf %7, %9 : vector<64x128xf32>
    %c0_8 = arith.constant 0 : index
    %c0_9 = arith.constant 0 : index
    %11 = vector.load %arg13[%c0_8, %c0_9] : memref<64x128xf32, #tpu.memory_space<vmem>>, vector<64x128xf32>
    tpu.vector_store %arg13[%c0_8, %c0_9], %10 {strides = array<i32>} : memref<64x128xf32, #tpu.memory_space<vmem>>, vector<64x128xf32>,
    %c0_10 = arith.constant 0 : index
    %c0_11 = arith.constant 0 : index
    %12 = vector.load %arg4[%c0_10, %c0_11] : memref<32x128xf32, #tpu.memory_space<vmem>>, vector<32x128xf32>
    %c0_12 = arith.constant 0 : index
    %c0_13 = arith.constant 0 : index
    %13 = vector.load %arg6[%c0_12, %c0_13] : memref<64x128xf32, #tpu.memory_space<vmem>>, vector<64x128xf32>
    %c0_14 = arith.constant 0 : index
    %c0_15 = arith.constant 0 : index
    %14 = vector.load %arg7[%c0_14, %c0_15] : memref<1x128xf32, #tpu.memory_space<vmem>>, vector<1x128xf32>
    %c0_16 = arith.constant 0 : index
    %c0_17 = arith.constant 0 : index
    %15 = vector.load %arg8[%c0_16, %c0_17] : memref<64x128xf32, #tpu.memory_space<vmem>>, vector<64x128xf32>
    %c0_18 = arith.constant 0 : index
    %c0_19 = arith.constant 0 : index
    %16 = vector.load %arg9[%c0_18, %c0_19] : memref<1x128xf32, #tpu.memory_space<vmem>>, vector<1x128xf32>
    %c0_20 = arith.constant 0 : index
    %c0_21 = arith.constant 0 : index
    %c0_22 = arith.constant 0 : index
    %17 = vector.load %arg14[%c0_20, %c0_21, %c0_22] : memref<6x8x32xf32, #tpu.memory_space<vmem>>, vector<1x8x32xf32>
    %18 = vector.shape_cast %17 : vector<1x8x32xf32> to vector<8x32xf32>
    %c1 = arith.constant 1 : index
    %c0_23 = arith.constant 0 : index
    %c0_24 = arith.constant 0 : index
    %19 = vector.load %arg14[%c1, %c0_23, %c0_24] : memref<6x8x32xf32, #tpu.memory_space<vmem>>, vector<1x8x32xf32>
    %20 = vector.shape_cast %19 : vector<1x8x32xf32> to vector<8x32xf32>
    %c2 = arith.constant 2 : index
    %c0_25 = arith.constant 0 : index
    %c0_26 = arith.constant 0 : index
    %21 = vector.load %arg14[%c2, %c0_25, %c0_26] : memref<6x8x32xf32, #tpu.memory_space<vmem>>, vector<1x8x32xf32>
    %22 = vector.shape_cast %21 : vector<1x8x32xf32> to vector<8x32xf32>
    %c3 = arith.constant 3 : index
    %c0_27 = arith.constant 0 : index
    %c0_28 = arith.constant 0 : index
    %23 = vector.load %arg14[%c3, %c0_27, %c0_28] : memref<6x8x32xf32, #tpu.memory_space<vmem>>, vector<1x8x32xf32>
    %24 = vector.shape_cast %23 : vector<1x8x32xf32> to vector<8x32xf32>
    %c4 = arith.constant 4 : index
    %c0_29 = arith.constant 0 : index
    %c0_30 = arith.constant 0 : index
    %25 = vector.load %arg14[%c4, %c0_29, %c0_30] : memref<6x8x32xf32, #tpu.memory_space<vmem>>, vector<1x8x32xf32>
    %26 = vector.shape_cast %25 : vector<1x8x32xf32> to vector<8x32xf32>
    %c5 = arith.constant 5 : index
    %c0_31 = arith.constant 0 : index
    %c0_32 = arith.constant 0 : index
    %27 = vector.load %arg14[%c5, %c0_31, %c0_32] : memref<6x8x32xf32, #tpu.memory_space<vmem>>, vector<1x8x32xf32>
    %28 = vector.shape_cast %27 : vector<1x8x32xf32> to vector<8x32xf32>
    %c0_i32_33 = arith.constant 0 : i32
    %c8_i32 = arith.constant 8 : i32
    %29 = arith.muli %c0_i32_33, %c8_i32 : i32
    %30 = tpu.assume_multiple %29, 8 : i32
    %31 = arith.index_cast %30 : i32 to index
    %c0_34 = arith.constant 0 : index
    %32 = vector.load %arg13[%31, %c0_34] : memref<64x128xf32, #tpu.memory_space<vmem>>, vector<8x128xf32>
    %cst_35 = arith.constant dense<0.000000e+00> : vector<8x128xf32>
    %33 = tpu.matmul %18, %12, %cst_35 {dimension_numbers = #tpu.dot_dimension_numbers<[1], [0], [0], [1], [0, 0, 1, 1], [], []>} : vector<8x32xf32>, vector<32x128xf32>, vector<8x128xf32> -> vector<8x128xf32>
    %34 = arith.addf %32, %33 : vector<8x128xf32>
    %35 = vector.extract_strided_slice %34 {offsets = [0, 0], sizes = [8, 96], strides = [1, 1]} : vector<8x128xf32> to vector<8x96xf32>
    %36 = arith.negf %35 : vector<8x96xf32>
    %37 = math.exp %36 : vector<8x96xf32>
    %cst_36 = arith.constant 1.000000e+00 : f32
    %38 = vector.broadcast %cst_36 : f32 to vector<8x96xf32>
    %39 = arith.addf %38, %37 : vector<8x96xf32>
    %40 = arith.divf %38, %39 : vector<8x96xf32>
    %41 = vector.extract_strided_slice %34 {offsets = [0, 96], sizes = [8, 32], strides = [1, 1]} : vector<8x128xf32> to vector<8x32xf32>
    %42 = math.tanh %41 : vector<8x32xf32>
    %43 = vector.extract_strided_slice %40 {offsets = [0, 0], sizes = [8, 32], strides = [1, 1]} : vector<8x96xf32> to vector<8x32xf32>
    %44 = vector.extract_strided_slice %40 {offsets = [0, 32], sizes = [8, 32], strides = [1, 1]} : vector<8x96xf32> to vector<8x32xf32>
    %45 = vector.extract_strided_slice %40 {offsets = [0, 64], sizes = [8, 32], strides = [1, 1]} : vector<8x96xf32> to vector<8x32xf32>
    %46 = arith.mulf %44, %20 : vector<8x32xf32>
    %47 = arith.mulf %43, %42 : vector<8x32xf32>
    %48 = arith.addf %46, %47 : vector<8x32xf32>
    %49 = math.tanh %48 : vector<8x32xf32>
    %50 = arith.mulf %45, %49 : vector<8x32xf32>
    %51 = tpu.concatenate %50, %22 in 1 : vector<8x32xf32>, vector<8x32xf32> -> vector<8x64xf32>
    %cst_37 = arith.constant dense<0.000000e+00> : vector<8x128xf32>
    %52 = tpu.matmul %51, %13, %cst_37 {dimension_numbers = #tpu.dot_dimension_numbers<[1], [0], [0], [1], [0, 0, 1, 1], [], []>} : vector<8x64xf32>, vector<64x128xf32>, vector<8x128xf32> -> vector<8x128xf32>
    %53 = vector.broadcast %14 : vector<1x128xf32> to vector<8x128xf32>
    %54 = arith.addf %52, %53 : vector<8x128xf32>
    %55 = vector.extract_strided_slice %54 {offsets = [0, 0], sizes = [8, 96], strides = [1, 1]} : vector<8x128xf32> to vector<8x96xf32>
    %56 = arith.negf %55 : vector<8x96xf32>
    %57 = math.exp %56 : vector<8x96xf32>
    %cst_38 = arith.constant 1.000000e+00 : f32
    %58 = vector.broadcast %cst_38 : f32 to vector<8x96xf32>
    %59 = arith.addf %58, %57 : vector<8x96xf32>
    %60 = arith.divf %58, %59 : vector<8x96xf32>
    %61 = vector.extract_strided_slice %54 {offsets = [0, 96], sizes = [8, 32], strides = [1, 1]} : vector<8x128xf32> to vector<8x32xf32>
    %62 = math.tanh %61 : vector<8x32xf32>
    %63 = vector.extract_strided_slice %60 {offsets = [0, 0], sizes = [8, 32], strides = [1, 1]} : vector<8x96xf32> to vector<8x32xf32>
    %64 = vector.extract_strided_slice %60 {offsets = [0, 32], sizes = [8, 32], strides = [1, 1]} : vector<8x96xf32> to vector<8x32xf32>
    %65 = vector.extract_strided_slice %60 {offsets = [0, 64], sizes = [8, 32], strides = [1, 1]} : vector<8x96xf32> to vector<8x32xf32>
    %66 = arith.mulf %64, %24 : vector<8x32xf32>
    %67 = arith.mulf %63, %62 : vector<8x32xf32>
    %68 = arith.addf %66, %67 : vector<8x32xf32>
    %69 = math.tanh %68 : vector<8x32xf32>
    %70 = arith.mulf %65, %69 : vector<8x32xf32>
    %71 = tpu.concatenate %70, %26 in 1 : vector<8x32xf32>, vector<8x32xf32> -> vector<8x64xf32>
    %cst_39 = arith.constant dense<0.000000e+00> : vector<8x128xf32>
    %72 = tpu.matmul %71, %15, %cst_39 {dimension_numbers = #tpu.dot_dimension_numbers<[1], [0], [0], [1], [0, 0, 1, 1], [], []>} : vector<8x64xf32>, vector<64x128xf32>, vector<8x128xf32> -> vector<8x128xf32>
    %73 = vector.broadcast %16 : vector<1x128xf32> to vector<8x128xf32>
    %74 = arith.addf %72, %73 : vector<8x128xf32>
    %75 = vector.extract_strided_slice %74 {offsets = [0, 0], sizes = [8, 96], strides = [1, 1]} : vector<8x128xf32> to vector<8x96xf32>
    %76 = arith.negf %75 : vector<8x96xf32>
    %77 = math.exp %76 : vector<8x96xf32>
    %cst_40 = arith.constant 1.000000e+00 : f32
    %78 = vector.broadcast %cst_40 : f32 to vector<8x96xf32>
    %79 = arith.addf %78, %77 : vector<8x96xf32>
    %80 = arith.divf %78, %79 : vector<8x96xf32>
    %81 = vector.extract_strided_slice %74 {offsets = [0, 96], sizes = [8, 32], strides = [1, 1]} : vector<8x128xf32> to vector<8x32xf32>
    %82 = math.tanh %81 : vector<8x32xf32>
    %83 = vector.extract_strided_slice %80 {offsets = [0, 0], sizes = [8, 32], strides = [1, 1]} : vector<8x96xf32> to vector<8x32xf32>
    %84 = vector.extract_strided_slice %80 {offsets = [0, 32], sizes = [8, 32], strides = [1, 1]} : vector<8x96xf32> to vector<8x32xf32>
    %85 = vector.extract_strided_slice %80 {offsets = [0, 64], sizes = [8, 32], strides = [1, 1]} : vector<8x96xf32> to vector<8x32xf32>
    %86 = arith.mulf %84, %28 : vector<8x32xf32>
    %87 = arith.mulf %83, %82 : vector<8x32xf32>
    %88 = arith.addf %86, %87 : vector<8x32xf32>
    %89 = math.tanh %88 : vector<8x32xf32>
    %90 = arith.mulf %85, %89 : vector<8x32xf32>
    %c1_i32 = arith.constant 1 : i32
    %c8_i32_41 = arith.constant 8 : i32
    %91 = arith.muli %c1_i32, %c8_i32_41 : i32
    %92 = tpu.assume_multiple %91, 8 : i32
    %93 = arith.index_cast %92 : i32 to index
    %c0_42 = arith.constant 0 : index
    %94 = vector.load %arg13[%93, %c0_42] : memref<64x128xf32, #tpu.memory_space<vmem>>, vector<8x128xf32>
    %cst_43 = arith.constant dense<0.000000e+00> : vector<8x128xf32>
    %95 = tpu.matmul %50, %12, %cst_43 {dimension_numbers = #tpu.dot_dimension_numbers<[1], [0], [0], [1], [0, 0, 1, 1], [], []>} : vector<8x32xf32>, vector<32x128xf32>, vector<8x128xf32> -> vector<8x128xf32>
    %96 = arith.addf %94, %95 : vector<8x128xf32>
    %97 = vector.extract_strided_slice %96 {offsets = [0, 0], sizes = [8, 96], strides = [1, 1]} : vector<8x128xf32> to vector<8x96xf32>
    %98 = arith.negf %97 : vector<8x96xf32>
    %99 = math.exp %98 : vector<8x96xf32>
    %cst_44 = arith.constant 1.000000e+00 : f32
    %100 = vector.broadcast %cst_44 : f32 to vector<8x96xf32>
    %101 = arith.addf %100, %99 : vector<8x96xf32>
    %102 = arith.divf %100, %101 : vector<8x96xf32>
    %103 = vector.extract_strided_slice %96 {offsets = [0, 96], sizes = [8, 32], strides = [1, 1]} : vector<8x128xf32> to vector<8x32xf32>
    %104 = math.tanh %103 : vector<8x32xf32>
    %105 = vector.extract_strided_slice %102 {offsets = [0, 0], sizes = [8, 32], strides = [1, 1]} : vector<8x96xf32> to vector<8x32xf32>
    %106 = vector.extract_strided_slice %102 {offsets = [0, 32], sizes = [8, 32], strides = [1, 1]} : vector<8x96xf32> to vector<8x32xf32>
    %107 = vector.extract_strided_slice %102 {offsets = [0, 64], sizes = [8, 32], strides = [1, 1]} : vector<8x96xf32> to vector<8x32xf32>
    %108 = arith.mulf %106, %48 : vector<8x32xf32>
    %109 = arith.mulf %105, %104 : vector<8x32xf32>
    %110 = arith.addf %108, %109 : vector<8x32xf32>
    %111 = math.tanh %110 : vector<8x32xf32>
    %112 = arith.mulf %107, %111 : vector<8x32xf32>
    %113 = tpu.concatenate %112, %70 in 1 : vector<8x32xf32>, vector<8x32xf32> -> vector<8x64xf32>
    %cst_45 = arith.constant dense<0.000000e+00> : vector<8x128xf32>
    %114 = tpu.matmul %113, %13, %cst_45 {dimension_numbers = #tpu.dot_dimension_numbers<[1], [0], [0], [1], [0, 0, 1, 1], [], []>} : vector<8x64xf32>, vector<64x128xf32>, vector<8x128xf32> -> vector<8x128xf32>
    %115 = vector.broadcast %14 : vector<1x128xf32> to vector<8x128xf32>
    %116 = arith.addf %114, %115 : vector<8x128xf32>
    %117 = vector.extract_strided_slice %116 {offsets = [0, 0], sizes = [8, 96], strides = [1, 1]} : vector<8x128xf32> to vector<8x96xf32>
    %118 = arith.negf %117 : vector<8x96xf32>
    %119 = math.exp %118 : vector<8x96xf32>
    %cst_46 = arith.constant 1.000000e+00 : f32
    %120 = vector.broadcast %cst_46 : f32 to vector<8x96xf32>
    %121 = arith.addf %120, %119 : vector<8x96xf32>
    %122 = arith.divf %120, %121 : vector<8x96xf32>
    %123 = vector.extract_strided_slice %116 {offsets = [0, 96], sizes = [8, 32], strides = [1, 1]} : vector<8x128xf32> to vector<8x32xf32>
    %124 = math.tanh %123 : vector<8x32xf32>
    %125 = vector.extract_strided_slice %122 {offsets = [0, 0], sizes = [8, 32], strides = [1, 1]} : vector<8x96xf32> to vector<8x32xf32>
    %126 = vector.extract_strided_slice %122 {offsets = [0, 32], sizes = [8, 32], strides = [1, 1]} : vector<8x96xf32> to vector<8x32xf32>
    %127 = vector.extract_strided_slice %122 {offsets = [0, 64], sizes = [8, 32], strides = [1, 1]} : vector<8x96xf32> to vector<8x32xf32>
    %128 = arith.mulf %126, %68 : vector<8x32xf32>
    %129 = arith.mulf %125, %124 : vector<8x32xf32>
    %130 = arith.addf %128, %129 : vector<8x32xf32>
    %131 = math.tanh %130 : vector<8x32xf32>
    %132 = arith.mulf %127, %131 : vector<8x32xf32>
    %133 = tpu.concatenate %132, %90 in 1 : vector<8x32xf32>, vector<8x32xf32> -> vector<8x64xf32>
    %cst_47 = arith.constant dense<0.000000e+00> : vector<8x128xf32>
    %134 = tpu.matmul %133, %15, %cst_47 {dimension_numbers = #tpu.dot_dimension_numbers<[1], [0], [0], [1], [0, 0, 1, 1], [], []>} : vector<8x64xf32>, vector<64x128xf32>, vector<8x128xf32> -> vector<8x128xf32>
    %135 = vector.broadcast %16 : vector<1x128xf32> to vector<8x128xf32>
    %136 = arith.addf %134, %135 : vector<8x128xf32>
    %137 = vector.extract_strided_slice %136 {offsets = [0, 0], sizes = [8, 96], strides = [1, 1]} : vector<8x128xf32> to vector<8x96xf32>
    %138 = arith.negf %137 : vector<8x96xf32>
    %139 = math.exp %138 : vector<8x96xf32>
    %cst_48 = arith.constant 1.000000e+00 : f32
    %140 = vector.broadcast %cst_48 : f32 to vector<8x96xf32>
    %141 = arith.addf %140, %139 : vector<8x96xf32>
    %142 = arith.divf %140, %141 : vector<8x96xf32>
    %143 = vector.extract_strided_slice %136 {offsets = [0, 96], sizes = [8, 32], strides = [1, 1]} : vector<8x128xf32> to vector<8x32xf32>
    %144 = math.tanh %143 : vector<8x32xf32>
    %145 = vector.extract_strided_slice %142 {offsets = [0, 0], sizes = [8, 32], strides = [1, 1]} : vector<8x96xf32> to vector<8x32xf32>
    %146 = vector.extract_strided_slice %142 {offsets = [0, 32], sizes = [8, 32], strides = [1, 1]} : vector<8x96xf32> to vector<8x32xf32>
    %147 = vector.extract_strided_slice %142 {offsets = [0, 64], sizes = [8, 32], strides = [1, 1]} : vector<8x96xf32> to vector<8x32xf32>
    %148 = arith.mulf %146, %88 : vector<8x32xf32>
    %149 = arith.mulf %145, %144 : vector<8x32xf32>
    %150 = arith.addf %148, %149 : vector<8x32xf32>
    %151 = math.tanh %150 : vector<8x32xf32>
    %152 = arith.mulf %147, %151 : vector<8x32xf32>
    %c2_i32 = arith.constant 2 : i32
    %c8_i32_49 = arith.constant 8 : i32
    %153 = arith.muli %c2_i32, %c8_i32_49 : i32
    %154 = tpu.assume_multiple %153, 8 : i32
    %155 = arith.index_cast %154 : i32 to index
    %c0_50 = arith.constant 0 : index
    %156 = vector.load %arg13[%155, %c0_50] : memref<64x128xf32, #tpu.memory_space<vmem>>, vector<8x128xf32>
    %cst_51 = arith.constant dense<0.000000e+00> : vector<8x128xf32>
    %157 = tpu.matmul %112, %12, %cst_51 {dimension_numbers = #tpu.dot_dimension_numbers<[1], [0], [0], [1], [0, 0, 1, 1], [], []>} : vector<8x32xf32>, vector<32x128xf32>, vector<8x128xf32> -> vector<8x128xf32>
    %158 = arith.addf %156, %157 : vector<8x128xf32>
    %159 = vector.extract_strided_slice %158 {offsets = [0, 0], sizes = [8, 96], strides = [1, 1]} : vector<8x128xf32> to vector<8x96xf32>
    %160 = arith.negf %159 : vector<8x96xf32>
    %161 = math.exp %160 : vector<8x96xf32>
    %cst_52 = arith.constant 1.000000e+00 : f32
    %162 = vector.broadcast %cst_52 : f32 to vector<8x96xf32>
    %163 = arith.addf %162, %161 : vector<8x96xf32>
    %164 = arith.divf %162, %163 : vector<8x96xf32>
    %165 = vector.extract_strided_slice %158 {offsets = [0, 96], sizes = [8, 32], strides = [1, 1]} : vector<8x128xf32> to vector<8x32xf32>
    %166 = math.tanh %165 : vector<8x32xf32>
    %167 = vector.extract_strided_slice %164 {offsets = [0, 0], sizes = [8, 32], strides = [1, 1]} : vector<8x96xf32> to vector<8x32xf32>
    %168 = vector.extract_strided_slice %164 {offsets = [0, 32], sizes = [8, 32], strides = [1, 1]} : vector<8x96xf32> to vector<8x32xf32>
    %169 = vector.extract_strided_slice %164 {offsets = [0, 64], sizes = [8, 32], strides = [1, 1]} : vector<8x96xf32> to vector<8x32xf32>
    %170 = arith.mulf %168, %110 : vector<8x32xf32>
    %171 = arith.mulf %167, %166 : vector<8x32xf32>
    %172 = arith.addf %170, %171 : vector<8x32xf32>
    %173 = math.tanh %172 : vector<8x32xf32>
    %174 = arith.mulf %169, %173 : vector<8x32xf32>
    %175 = tpu.concatenate %174, %132 in 1 : vector<8x32xf32>, vector<8x32xf32> -> vector<8x64xf32>
    %cst_53 = arith.constant dense<0.000000e+00> : vector<8x128xf32>
    %176 = tpu.matmul %175, %13, %cst_53 {dimension_numbers = #tpu.dot_dimension_numbers<[1], [0], [0], [1], [0, 0, 1, 1], [], []>} : vector<8x64xf32>, vector<64x128xf32>, vector<8x128xf32> -> vector<8x128xf32>
    %177 = vector.broadcast %14 : vector<1x128xf32> to vector<8x128xf32>
    %178 = arith.addf %176, %177 : vector<8x128xf32>
    %179 = vector.extract_strided_slice %178 {offsets = [0, 0], sizes = [8, 96], strides = [1, 1]} : vector<8x128xf32> to vector<8x96xf32>
    %180 = arith.negf %179 : vector<8x96xf32>
    %181 = math.exp %180 : vector<8x96xf32>
    %cst_54 = arith.constant 1.000000e+00 : f32
    %182 = vector.broadcast %cst_54 : f32 to vector<8x96xf32>
    %183 = arith.addf %182, %181 : vector<8x96xf32>
    %184 = arith.divf %182, %183 : vector<8x96xf32>
    %185 = vector.extract_strided_slice %178 {offsets = [0, 96], sizes = [8, 32], strides = [1, 1]} : vector<8x128xf32> to vector<8x32xf32>
    %186 = math.tanh %185 : vector<8x32xf32>
    %187 = vector.extract_strided_slice %184 {offsets = [0, 0], sizes = [8, 32], strides = [1, 1]} : vector<8x96xf32> to vector<8x32xf32>
    %188 = vector.extract_strided_slice %184 {offsets = [0, 32], sizes = [8, 32], strides = [1, 1]} : vector<8x96xf32> to vector<8x32xf32>
    %189 = vector.extract_strided_slice %184 {offsets = [0, 64], sizes = [8, 32], strides = [1, 1]} : vector<8x96xf32> to vector<8x32xf32>
    %190 = arith.mulf %188, %130 : vector<8x32xf32>
    %191 = arith.mulf %187, %186 : vector<8x32xf32>
    %192 = arith.addf %190, %191 : vector<8x32xf32>
    %193 = math.tanh %192 : vector<8x32xf32>
    %194 = arith.mulf %189, %193 : vector<8x32xf32>
    %195 = tpu.concatenate %194, %152 in 1 : vector<8x32xf32>, vector<8x32xf32> -> vector<8x64xf32>
    %cst_55 = arith.constant dense<0.000000e+00> : vector<8x128xf32>
    %196 = tpu.matmul %195, %15, %cst_55 {dimension_numbers = #tpu.dot_dimension_numbers<[1], [0], [0], [1], [0, 0, 1, 1], [], []>} : vector<8x64xf32>, vector<64x128xf32>, vector<8x128xf32> -> vector<8x128xf32>
    %197 = vector.broadcast %16 : vector<1x128xf32> to vector<8x128xf32>
    %198 = arith.addf %196, %197 : vector<8x128xf32>
    %199 = vector.extract_strided_slice %198 {offsets = [0, 0], sizes = [8, 96], strides = [1, 1]} : vector<8x128xf32> to vector<8x96xf32>
    %200 = arith.negf %199 : vector<8x96xf32>
    %201 = math.exp %200 : vector<8x96xf32>
    %cst_56 = arith.constant 1.000000e+00 : f32
    %202 = vector.broadcast %cst_56 : f32 to vector<8x96xf32>
    %203 = arith.addf %202, %201 : vector<8x96xf32>
    %204 = arith.divf %202, %203 : vector<8x96xf32>
    %205 = vector.extract_strided_slice %198 {offsets = [0, 96], sizes = [8, 32], strides = [1, 1]} : vector<8x128xf32> to vector<8x32xf32>
    %206 = math.tanh %205 : vector<8x32xf32>
    %207 = vector.extract_strided_slice %204 {offsets = [0, 0], sizes = [8, 32], strides = [1, 1]} : vector<8x96xf32> to vector<8x32xf32>
    %208 = vector.extract_strided_slice %204 {offsets = [0, 32], sizes = [8, 32], strides = [1, 1]} : vector<8x96xf32> to vector<8x32xf32>
    %209 = vector.extract_strided_slice %204 {offsets = [0, 64], sizes = [8, 32], strides = [1, 1]} : vector<8x96xf32> to vector<8x32xf32>
    %210 = arith.mulf %208, %150 : vector<8x32xf32>
    %211 = arith.mulf %207, %206 : vector<8x32xf32>
    %212 = arith.addf %210, %211 : vector<8x32xf32>
    %213 = math.tanh %212 : vector<8x32xf32>
    %214 = arith.mulf %209, %213 : vector<8x32xf32>
    %c3_i32 = arith.constant 3 : i32
    %c8_i32_57 = arith.constant 8 : i32
    %215 = arith.muli %c3_i32, %c8_i32_57 : i32
    %216 = tpu.assume_multiple %215, 8 : i32
    %217 = arith.index_cast %216 : i32 to index
    %c0_58 = arith.constant 0 : index
    %218 = vector.load %arg13[%217, %c0_58] : memref<64x128xf32, #tpu.memory_space<vmem>>, vector<8x128xf32>
    %cst_59 = arith.constant dense<0.000000e+00> : vector<8x128xf32>
    %219 = tpu.matmul %174, %12, %cst_59 {dimension_numbers = #tpu.dot_dimension_numbers<[1], [0], [0], [1], [0, 0, 1, 1], [], []>} : vector<8x32xf32>, vector<32x128xf32>, vector<8x128xf32> -> vector<8x128xf32>
    %220 = arith.addf %218, %219 : vector<8x128xf32>
    %221 = vector.extract_strided_slice %220 {offsets = [0, 0], sizes = [8, 96], strides = [1, 1]} : vector<8x128xf32> to vector<8x96xf32>
    %222 = arith.negf %221 : vector<8x96xf32>
    %223 = math.exp %222 : vector<8x96xf32>
    %cst_60 = arith.constant 1.000000e+00 : f32
    %224 = vector.broadcast %cst_60 : f32 to vector<8x96xf32>
    %225 = arith.addf %224, %223 : vector<8x96xf32>
    %226 = arith.divf %224, %225 : vector<8x96xf32>
    %227 = vector.extract_strided_slice %220 {offsets = [0, 96], sizes = [8, 32], strides = [1, 1]} : vector<8x128xf32> to vector<8x32xf32>
    %228 = math.tanh %227 : vector<8x32xf32>
    %229 = vector.extract_strided_slice %226 {offsets = [0, 0], sizes = [8, 32], strides = [1, 1]} : vector<8x96xf32> to vector<8x32xf32>
    %230 = vector.extract_strided_slice %226 {offsets = [0, 32], sizes = [8, 32], strides = [1, 1]} : vector<8x96xf32> to vector<8x32xf32>
    %231 = vector.extract_strided_slice %226 {offsets = [0, 64], sizes = [8, 32], strides = [1, 1]} : vector<8x96xf32> to vector<8x32xf32>
    %232 = arith.mulf %230, %172 : vector<8x32xf32>
    %233 = arith.mulf %229, %228 : vector<8x32xf32>
    %234 = arith.addf %232, %233 : vector<8x32xf32>
    %235 = math.tanh %234 : vector<8x32xf32>
    %236 = arith.mulf %231, %235 : vector<8x32xf32>
    %237 = tpu.concatenate %236, %194 in 1 : vector<8x32xf32>, vector<8x32xf32> -> vector<8x64xf32>
    %cst_61 = arith.constant dense<0.000000e+00> : vector<8x128xf32>
    %238 = tpu.matmul %237, %13, %cst_61 {dimension_numbers = #tpu.dot_dimension_numbers<[1], [0], [0], [1], [0, 0, 1, 1], [], []>} : vector<8x64xf32>, vector<64x128xf32>, vector<8x128xf32> -> vector<8x128xf32>
    %239 = vector.broadcast %14 : vector<1x128xf32> to vector<8x128xf32>
    %240 = arith.addf %238, %239 : vector<8x128xf32>
    %241 = vector.extract_strided_slice %240 {offsets = [0, 0], sizes = [8, 96], strides = [1, 1]} : vector<8x128xf32> to vector<8x96xf32>
    %242 = arith.negf %241 : vector<8x96xf32>
    %243 = math.exp %242 : vector<8x96xf32>
    %cst_62 = arith.constant 1.000000e+00 : f32
    %244 = vector.broadcast %cst_62 : f32 to vector<8x96xf32>
    %245 = arith.addf %244, %243 : vector<8x96xf32>
    %246 = arith.divf %244, %245 : vector<8x96xf32>
    %247 = vector.extract_strided_slice %240 {offsets = [0, 96], sizes = [8, 32], strides = [1, 1]} : vector<8x128xf32> to vector<8x32xf32>
    %248 = math.tanh %247 : vector<8x32xf32>
    %249 = vector.extract_strided_slice %246 {offsets = [0, 0], sizes = [8, 32], strides = [1, 1]} : vector<8x96xf32> to vector<8x32xf32>
    %250 = vector.extract_strided_slice %246 {offsets = [0, 32], sizes = [8, 32], strides = [1, 1]} : vector<8x96xf32> to vector<8x32xf32>
    %251 = vector.extract_strided_slice %246 {offsets = [0, 64], sizes = [8, 32], strides = [1, 1]} : vector<8x96xf32> to vector<8x32xf32>
    %252 = arith.mulf %250, %192 : vector<8x32xf32>
    %253 = arith.mulf %249, %248 : vector<8x32xf32>
    %254 = arith.addf %252, %253 : vector<8x32xf32>
    %255 = math.tanh %254 : vector<8x32xf32>
    %256 = arith.mulf %251, %255 : vector<8x32xf32>
    %257 = tpu.concatenate %256, %214 in 1 : vector<8x32xf32>, vector<8x32xf32> -> vector<8x64xf32>
    %cst_63 = arith.constant dense<0.000000e+00> : vector<8x128xf32>
    %258 = tpu.matmul %257, %15, %cst_63 {dimension_numbers = #tpu.dot_dimension_numbers<[1], [0], [0], [1], [0, 0, 1, 1], [], []>} : vector<8x64xf32>, vector<64x128xf32>, vector<8x128xf32> -> vector<8x128xf32>
    %259 = vector.broadcast %16 : vector<1x128xf32> to vector<8x128xf32>
    %260 = arith.addf %258, %259 : vector<8x128xf32>
    %261 = vector.extract_strided_slice %260 {offsets = [0, 0], sizes = [8, 96], strides = [1, 1]} : vector<8x128xf32> to vector<8x96xf32>
    %262 = arith.negf %261 : vector<8x96xf32>
    %263 = math.exp %262 : vector<8x96xf32>
    %cst_64 = arith.constant 1.000000e+00 : f32
    %264 = vector.broadcast %cst_64 : f32 to vector<8x96xf32>
    %265 = arith.addf %264, %263 : vector<8x96xf32>
    %266 = arith.divf %264, %265 : vector<8x96xf32>
    %267 = vector.extract_strided_slice %260 {offsets = [0, 96], sizes = [8, 32], strides = [1, 1]} : vector<8x128xf32> to vector<8x32xf32>
    %268 = math.tanh %267 : vector<8x32xf32>
    %269 = vector.extract_strided_slice %266 {offsets = [0, 0], sizes = [8, 32], strides = [1, 1]} : vector<8x96xf32> to vector<8x32xf32>
    %270 = vector.extract_strided_slice %266 {offsets = [0, 32], sizes = [8, 32], strides = [1, 1]} : vector<8x96xf32> to vector<8x32xf32>
    %271 = vector.extract_strided_slice %266 {offsets = [0, 64], sizes = [8, 32], strides = [1, 1]} : vector<8x96xf32> to vector<8x32xf32>
    %272 = arith.mulf %270, %212 : vector<8x32xf32>
    %273 = arith.mulf %269, %268 : vector<8x32xf32>
    %274 = arith.addf %272, %273 : vector<8x32xf32>
    %275 = math.tanh %274 : vector<8x32xf32>
    %276 = arith.mulf %271, %275 : vector<8x32xf32>
    %c4_i32 = arith.constant 4 : i32
    %c8_i32_65 = arith.constant 8 : i32
    %277 = arith.muli %c4_i32, %c8_i32_65 : i32
    %278 = tpu.assume_multiple %277, 8 : i32
    %279 = arith.index_cast %278 : i32 to index
    %c0_66 = arith.constant 0 : index
    %280 = vector.load %arg13[%279, %c0_66] : memref<64x128xf32, #tpu.memory_space<vmem>>, vector<8x128xf32>
    %cst_67 = arith.constant dense<0.000000e+00> : vector<8x128xf32>
    %281 = tpu.matmul %236, %12, %cst_67 {dimension_numbers = #tpu.dot_dimension_numbers<[1], [0], [0], [1], [0, 0, 1, 1], [], []>} : vector<8x32xf32>, vector<32x128xf32>, vector<8x128xf32> -> vector<8x128xf32>
    %282 = arith.addf %280, %281 : vector<8x128xf32>
    %283 = vector.extract_strided_slice %282 {offsets = [0, 0], sizes = [8, 96], strides = [1, 1]} : vector<8x128xf32> to vector<8x96xf32>
    %284 = arith.negf %283 : vector<8x96xf32>
    %285 = math.exp %284 : vector<8x96xf32>
    %cst_68 = arith.constant 1.000000e+00 : f32
    %286 = vector.broadcast %cst_68 : f32 to vector<8x96xf32>
    %287 = arith.addf %286, %285 : vector<8x96xf32>
    %288 = arith.divf %286, %287 : vector<8x96xf32>
    %289 = vector.extract_strided_slice %282 {offsets = [0, 96], sizes = [8, 32], strides = [1, 1]} : vector<8x128xf32> to vector<8x32xf32>
    %290 = math.tanh %289 : vector<8x32xf32>
    %291 = vector.extract_strided_slice %288 {offsets = [0, 0], sizes = [8, 32], strides = [1, 1]} : vector<8x96xf32> to vector<8x32xf32>
    %292 = vector.extract_strided_slice %288 {offsets = [0, 32], sizes = [8, 32], strides = [1, 1]} : vector<8x96xf32> to vector<8x32xf32>
    %293 = vector.extract_strided_slice %288 {offsets = [0, 64], sizes = [8, 32], strides = [1, 1]} : vector<8x96xf32> to vector<8x32xf32>
    %294 = arith.mulf %292, %234 : vector<8x32xf32>
    %295 = arith.mulf %291, %290 : vector<8x32xf32>
    %296 = arith.addf %294, %295 : vector<8x32xf32>
    %297 = math.tanh %296 : vector<8x32xf32>
    %298 = arith.mulf %293, %297 : vector<8x32xf32>
    %299 = tpu.concatenate %298, %256 in 1 : vector<8x32xf32>, vector<8x32xf32> -> vector<8x64xf32>
    %cst_69 = arith.constant dense<0.000000e+00> : vector<8x128xf32>
    %300 = tpu.matmul %299, %13, %cst_69 {dimension_numbers = #tpu.dot_dimension_numbers<[1], [0], [0], [1], [0, 0, 1, 1], [], []>} : vector<8x64xf32>, vector<64x128xf32>, vector<8x128xf32> -> vector<8x128xf32>
    %301 = vector.broadcast %14 : vector<1x128xf32> to vector<8x128xf32>
    %302 = arith.addf %300, %301 : vector<8x128xf32>
    %303 = vector.extract_strided_slice %302 {offsets = [0, 0], sizes = [8, 96], strides = [1, 1]} : vector<8x128xf32> to vector<8x96xf32>
    %304 = arith.negf %303 : vector<8x96xf32>
    %305 = math.exp %304 : vector<8x96xf32>
    %cst_70 = arith.constant 1.000000e+00 : f32
    %306 = vector.broadcast %cst_70 : f32 to vector<8x96xf32>
    %307 = arith.addf %306, %305 : vector<8x96xf32>
    %308 = arith.divf %306, %307 : vector<8x96xf32>
    %309 = vector.extract_strided_slice %302 {offsets = [0, 96], sizes = [8, 32], strides = [1, 1]} : vector<8x128xf32> to vector<8x32xf32>
    %310 = math.tanh %309 : vector<8x32xf32>
    %311 = vector.extract_strided_slice %308 {offsets = [0, 0], sizes = [8, 32], strides = [1, 1]} : vector<8x96xf32> to vector<8x32xf32>
    %312 = vector.extract_strided_slice %308 {offsets = [0, 32], sizes = [8, 32], strides = [1, 1]} : vector<8x96xf32> to vector<8x32xf32>
    %313 = vector.extract_strided_slice %308 {offsets = [0, 64], sizes = [8, 32], strides = [1, 1]} : vector<8x96xf32> to vector<8x32xf32>
    %314 = arith.mulf %312, %254 : vector<8x32xf32>
    %315 = arith.mulf %311, %310 : vector<8x32xf32>
    %316 = arith.addf %314, %315 : vector<8x32xf32>
    %317 = math.tanh %316 : vector<8x32xf32>
    %318 = arith.mulf %313, %317 : vector<8x32xf32>
    %319 = tpu.concatenate %318, %276 in 1 : vector<8x32xf32>, vector<8x32xf32> -> vector<8x64xf32>
    %cst_71 = arith.constant dense<0.000000e+00> : vector<8x128xf32>
    %320 = tpu.matmul %319, %15, %cst_71 {dimension_numbers = #tpu.dot_dimension_numbers<[1], [0], [0], [1], [0, 0, 1, 1], [], []>} : vector<8x64xf32>, vector<64x128xf32>, vector<8x128xf32> -> vector<8x128xf32>
    %321 = vector.broadcast %16 : vector<1x128xf32> to vector<8x128xf32>
    %322 = arith.addf %320, %321 : vector<8x128xf32>
    %323 = vector.extract_strided_slice %322 {offsets = [0, 0], sizes = [8, 96], strides = [1, 1]} : vector<8x128xf32> to vector<8x96xf32>
    %324 = arith.negf %323 : vector<8x96xf32>
    %325 = math.exp %324 : vector<8x96xf32>
    %cst_72 = arith.constant 1.000000e+00 : f32
    %326 = vector.broadcast %cst_72 : f32 to vector<8x96xf32>
    %327 = arith.addf %326, %325 : vector<8x96xf32>
    %328 = arith.divf %326, %327 : vector<8x96xf32>
    %329 = vector.extract_strided_slice %322 {offsets = [0, 96], sizes = [8, 32], strides = [1, 1]} : vector<8x128xf32> to vector<8x32xf32>
    %330 = math.tanh %329 : vector<8x32xf32>
    %331 = vector.extract_strided_slice %328 {offsets = [0, 0], sizes = [8, 32], strides = [1, 1]} : vector<8x96xf32> to vector<8x32xf32>
    %332 = vector.extract_strided_slice %328 {offsets = [0, 32], sizes = [8, 32], strides = [1, 1]} : vector<8x96xf32> to vector<8x32xf32>
    %333 = vector.extract_strided_slice %328 {offsets = [0, 64], sizes = [8, 32], strides = [1, 1]} : vector<8x96xf32> to vector<8x32xf32>
    %334 = arith.mulf %332, %274 : vector<8x32xf32>
    %335 = arith.mulf %331, %330 : vector<8x32xf32>
    %336 = arith.addf %334, %335 : vector<8x32xf32>
    %337 = math.tanh %336 : vector<8x32xf32>
    %338 = arith.mulf %333, %337 : vector<8x32xf32>
    %c5_i32 = arith.constant 5 : i32
    %c8_i32_73 = arith.constant 8 : i32
    %339 = arith.muli %c5_i32, %c8_i32_73 : i32
    %340 = tpu.assume_multiple %339, 8 : i32
    %341 = arith.index_cast %340 : i32 to index
    %c0_74 = arith.constant 0 : index
    %342 = vector.load %arg13[%341, %c0_74] : memref<64x128xf32, #tpu.memory_space<vmem>>, vector<8x128xf32>
    %cst_75 = arith.constant dense<0.000000e+00> : vector<8x128xf32>
    %343 = tpu.matmul %298, %12, %cst_75 {dimension_numbers = #tpu.dot_dimension_numbers<[1], [0], [0], [1], [0, 0, 1, 1], [], []>} : vector<8x32xf32>, vector<32x128xf32>, vector<8x128xf32> -> vector<8x128xf32>
    %344 = arith.addf %342, %343 : vector<8x128xf32>
    %345 = vector.extract_strided_slice %344 {offsets = [0, 0], sizes = [8, 96], strides = [1, 1]} : vector<8x128xf32> to vector<8x96xf32>
    %346 = arith.negf %345 : vector<8x96xf32>
    %347 = math.exp %346 : vector<8x96xf32>
    %cst_76 = arith.constant 1.000000e+00 : f32
    %348 = vector.broadcast %cst_76 : f32 to vector<8x96xf32>
    %349 = arith.addf %348, %347 : vector<8x96xf32>
    %350 = arith.divf %348, %349 : vector<8x96xf32>
    %351 = vector.extract_strided_slice %344 {offsets = [0, 96], sizes = [8, 32], strides = [1, 1]} : vector<8x128xf32> to vector<8x32xf32>
    %352 = math.tanh %351 : vector<8x32xf32>
    %353 = vector.extract_strided_slice %350 {offsets = [0, 0], sizes = [8, 32], strides = [1, 1]} : vector<8x96xf32> to vector<8x32xf32>
    %354 = vector.extract_strided_slice %350 {offsets = [0, 32], sizes = [8, 32], strides = [1, 1]} : vector<8x96xf32> to vector<8x32xf32>
    %355 = vector.extract_strided_slice %350 {offsets = [0, 64], sizes = [8, 32], strides = [1, 1]} : vector<8x96xf32> to vector<8x32xf32>
    %356 = arith.mulf %354, %296 : vector<8x32xf32>
    %357 = arith.mulf %353, %352 : vector<8x32xf32>
    %358 = arith.addf %356, %357 : vector<8x32xf32>
    %359 = math.tanh %358 : vector<8x32xf32>
    %360 = arith.mulf %355, %359 : vector<8x32xf32>
    %361 = tpu.concatenate %360, %318 in 1 : vector<8x32xf32>, vector<8x32xf32> -> vector<8x64xf32>
    %cst_77 = arith.constant dense<0.000000e+00> : vector<8x128xf32>
    %362 = tpu.matmul %361, %13, %cst_77 {dimension_numbers = #tpu.dot_dimension_numbers<[1], [0], [0], [1], [0, 0, 1, 1], [], []>} : vector<8x64xf32>, vector<64x128xf32>, vector<8x128xf32> -> vector<8x128xf32>
    %363 = vector.broadcast %14 : vector<1x128xf32> to vector<8x128xf32>
    %364 = arith.addf %362, %363 : vector<8x128xf32>
    %365 = vector.extract_strided_slice %364 {offsets = [0, 0], sizes = [8, 96], strides = [1, 1]} : vector<8x128xf32> to vector<8x96xf32>
    %366 = arith.negf %365 : vector<8x96xf32>
    %367 = math.exp %366 : vector<8x96xf32>
    %cst_78 = arith.constant 1.000000e+00 : f32
    %368 = vector.broadcast %cst_78 : f32 to vector<8x96xf32>
    %369 = arith.addf %368, %367 : vector<8x96xf32>
    %370 = arith.divf %368, %369 : vector<8x96xf32>
    %371 = vector.extract_strided_slice %364 {offsets = [0, 96], sizes = [8, 32], strides = [1, 1]} : vector<8x128xf32> to vector<8x32xf32>
    %372 = math.tanh %371 : vector<8x32xf32>
    %373 = vector.extract_strided_slice %370 {offsets = [0, 0], sizes = [8, 32], strides = [1, 1]} : vector<8x96xf32> to vector<8x32xf32>
    %374 = vector.extract_strided_slice %370 {offsets = [0, 32], sizes = [8, 32], strides = [1, 1]} : vector<8x96xf32> to vector<8x32xf32>
    %375 = vector.extract_strided_slice %370 {offsets = [0, 64], sizes = [8, 32], strides = [1, 1]} : vector<8x96xf32> to vector<8x32xf32>
    %376 = arith.mulf %374, %316 : vector<8x32xf32>
    %377 = arith.mulf %373, %372 : vector<8x32xf32>
    %378 = arith.addf %376, %377 : vector<8x32xf32>
    %379 = math.tanh %378 : vector<8x32xf32>
    %380 = arith.mulf %375, %379 : vector<8x32xf32>
    %381 = tpu.concatenate %380, %338 in 1 : vector<8x32xf32>, vector<8x32xf32> -> vector<8x64xf32>
    %cst_79 = arith.constant dense<0.000000e+00> : vector<8x128xf32>
    %382 = tpu.matmul %381, %15, %cst_79 {dimension_numbers = #tpu.dot_dimension_numbers<[1], [0], [0], [1], [0, 0, 1, 1], [], []>} : vector<8x64xf32>, vector<64x128xf32>, vector<8x128xf32> -> vector<8x128xf32>
    %383 = vector.broadcast %16 : vector<1x128xf32> to vector<8x128xf32>
    %384 = arith.addf %382, %383 : vector<8x128xf32>
    %385 = vector.extract_strided_slice %384 {offsets = [0, 0], sizes = [8, 96], strides = [1, 1]} : vector<8x128xf32> to vector<8x96xf32>
    %386 = arith.negf %385 : vector<8x96xf32>
    %387 = math.exp %386 : vector<8x96xf32>
    %cst_80 = arith.constant 1.000000e+00 : f32
    %388 = vector.broadcast %cst_80 : f32 to vector<8x96xf32>
    %389 = arith.addf %388, %387 : vector<8x96xf32>
    %390 = arith.divf %388, %389 : vector<8x96xf32>
    %391 = vector.extract_strided_slice %384 {offsets = [0, 96], sizes = [8, 32], strides = [1, 1]} : vector<8x128xf32> to vector<8x32xf32>
    %392 = math.tanh %391 : vector<8x32xf32>
    %393 = vector.extract_strided_slice %390 {offsets = [0, 0], sizes = [8, 32], strides = [1, 1]} : vector<8x96xf32> to vector<8x32xf32>
    %394 = vector.extract_strided_slice %390 {offsets = [0, 32], sizes = [8, 32], strides = [1, 1]} : vector<8x96xf32> to vector<8x32xf32>
    %395 = vector.extract_strided_slice %390 {offsets = [0, 64], sizes = [8, 32], strides = [1, 1]} : vector<8x96xf32> to vector<8x32xf32>
    %396 = arith.mulf %394, %336 : vector<8x32xf32>
    %397 = arith.mulf %393, %392 : vector<8x32xf32>
    %398 = arith.addf %396, %397 : vector<8x32xf32>
    %399 = math.tanh %398 : vector<8x32xf32>
    %400 = arith.mulf %395, %399 : vector<8x32xf32>
    %c6_i32 = arith.constant 6 : i32
    %c8_i32_81 = arith.constant 8 : i32
    %401 = arith.muli %c6_i32, %c8_i32_81 : i32
    %402 = tpu.assume_multiple %401, 8 : i32
    %403 = arith.index_cast %402 : i32 to index
    %c0_82 = arith.constant 0 : index
    %404 = vector.load %arg13[%403, %c0_82] : memref<64x128xf32, #tpu.memory_space<vmem>>, vector<8x128xf32>
    %cst_83 = arith.constant dense<0.000000e+00> : vector<8x128xf32>
    %405 = tpu.matmul %360, %12, %cst_83 {dimension_numbers = #tpu.dot_dimension_numbers<[1], [0], [0], [1], [0, 0, 1, 1], [], []>} : vector<8x32xf32>, vector<32x128xf32>, vector<8x128xf32> -> vector<8x128xf32>
    %406 = arith.addf %404, %405 : vector<8x128xf32>
    %407 = vector.extract_strided_slice %406 {offsets = [0, 0], sizes = [8, 96], strides = [1, 1]} : vector<8x128xf32> to vector<8x96xf32>
    %408 = arith.negf %407 : vector<8x96xf32>
    %409 = math.exp %408 : vector<8x96xf32>
    %cst_84 = arith.constant 1.000000e+00 : f32
    %410 = vector.broadcast %cst_84 : f32 to vector<8x96xf32>
    %411 = arith.addf %410, %409 : vector<8x96xf32>
    %412 = arith.divf %410, %411 : vector<8x96xf32>
    %413 = vector.extract_strided_slice %406 {offsets = [0, 96], sizes = [8, 32], strides = [1, 1]} : vector<8x128xf32> to vector<8x32xf32>
    %414 = math.tanh %413 : vector<8x32xf32>
    %415 = vector.extract_strided_slice %412 {offsets = [0, 0], sizes = [8, 32], strides = [1, 1]} : vector<8x96xf32> to vector<8x32xf32>
    %416 = vector.extract_strided_slice %412 {offsets = [0, 32], sizes = [8, 32], strides = [1, 1]} : vector<8x96xf32> to vector<8x32xf32>
    %417 = vector.extract_strided_slice %412 {offsets = [0, 64], sizes = [8, 32], strides = [1, 1]} : vector<8x96xf32> to vector<8x32xf32>
    %418 = arith.mulf %416, %358 : vector<8x32xf32>
    %419 = arith.mulf %415, %414 : vector<8x32xf32>
    %420 = arith.addf %418, %419 : vector<8x32xf32>
    %421 = math.tanh %420 : vector<8x32xf32>
    %422 = arith.mulf %417, %421 : vector<8x32xf32>
    %423 = tpu.concatenate %422, %380 in 1 : vector<8x32xf32>, vector<8x32xf32> -> vector<8x64xf32>
    %cst_85 = arith.constant dense<0.000000e+00> : vector<8x128xf32>
    %424 = tpu.matmul %423, %13, %cst_85 {dimension_numbers = #tpu.dot_dimension_numbers<[1], [0], [0], [1], [0, 0, 1, 1], [], []>} : vector<8x64xf32>, vector<64x128xf32>, vector<8x128xf32> -> vector<8x128xf32>
    %425 = vector.broadcast %14 : vector<1x128xf32> to vector<8x128xf32>
    %426 = arith.addf %424, %425 : vector<8x128xf32>
    %427 = vector.extract_strided_slice %426 {offsets = [0, 0], sizes = [8, 96], strides = [1, 1]} : vector<8x128xf32> to vector<8x96xf32>
    %428 = arith.negf %427 : vector<8x96xf32>
    %429 = math.exp %428 : vector<8x96xf32>
    %cst_86 = arith.constant 1.000000e+00 : f32
    %430 = vector.broadcast %cst_86 : f32 to vector<8x96xf32>
    %431 = arith.addf %430, %429 : vector<8x96xf32>
    %432 = arith.divf %430, %431 : vector<8x96xf32>
    %433 = vector.extract_strided_slice %426 {offsets = [0, 96], sizes = [8, 32], strides = [1, 1]} : vector<8x128xf32> to vector<8x32xf32>
    %434 = math.tanh %433 : vector<8x32xf32>
    %435 = vector.extract_strided_slice %432 {offsets = [0, 0], sizes = [8, 32], strides = [1, 1]} : vector<8x96xf32> to vector<8x32xf32>
    %436 = vector.extract_strided_slice %432 {offsets = [0, 32], sizes = [8, 32], strides = [1, 1]} : vector<8x96xf32> to vector<8x32xf32>
    %437 = vector.extract_strided_slice %432 {offsets = [0, 64], sizes = [8, 32], strides = [1, 1]} : vector<8x96xf32> to vector<8x32xf32>
    %438 = arith.mulf %436, %378 : vector<8x32xf32>
    %439 = arith.mulf %435, %434 : vector<8x32xf32>
    %440 = arith.addf %438, %439 : vector<8x32xf32>
    %441 = math.tanh %440 : vector<8x32xf32>
    %442 = arith.mulf %437, %441 : vector<8x32xf32>
    %443 = tpu.concatenate %442, %400 in 1 : vector<8x32xf32>, vector<8x32xf32> -> vector<8x64xf32>
    %cst_87 = arith.constant dense<0.000000e+00> : vector<8x128xf32>
    %444 = tpu.matmul %443, %15, %cst_87 {dimension_numbers = #tpu.dot_dimension_numbers<[1], [0], [0], [1], [0, 0, 1, 1], [], []>} : vector<8x64xf32>, vector<64x128xf32>, vector<8x128xf32> -> vector<8x128xf32>
    %445 = vector.broadcast %16 : vector<1x128xf32> to vector<8x128xf32>
    %446 = arith.addf %444, %445 : vector<8x128xf32>
    %447 = vector.extract_strided_slice %446 {offsets = [0, 0], sizes = [8, 96], strides = [1, 1]} : vector<8x128xf32> to vector<8x96xf32>
    %448 = arith.negf %447 : vector<8x96xf32>
    %449 = math.exp %448 : vector<8x96xf32>
    %cst_88 = arith.constant 1.000000e+00 : f32
    %450 = vector.broadcast %cst_88 : f32 to vector<8x96xf32>
    %451 = arith.addf %450, %449 : vector<8x96xf32>
    %452 = arith.divf %450, %451 : vector<8x96xf32>
    %453 = vector.extract_strided_slice %446 {offsets = [0, 96], sizes = [8, 32], strides = [1, 1]} : vector<8x128xf32> to vector<8x32xf32>
    %454 = math.tanh %453 : vector<8x32xf32>
    %455 = vector.extract_strided_slice %452 {offsets = [0, 0], sizes = [8, 32], strides = [1, 1]} : vector<8x96xf32> to vector<8x32xf32>
    %456 = vector.extract_strided_slice %452 {offsets = [0, 32], sizes = [8, 32], strides = [1, 1]} : vector<8x96xf32> to vector<8x32xf32>
    %457 = vector.extract_strided_slice %452 {offsets = [0, 64], sizes = [8, 32], strides = [1, 1]} : vector<8x96xf32> to vector<8x32xf32>
    %458 = arith.mulf %456, %398 : vector<8x32xf32>
    %459 = arith.mulf %455, %454 : vector<8x32xf32>
    %460 = arith.addf %458, %459 : vector<8x32xf32>
    %461 = math.tanh %460 : vector<8x32xf32>
    %462 = arith.mulf %457, %461 : vector<8x32xf32>
    %c7_i32 = arith.constant 7 : i32
    %c8_i32_89 = arith.constant 8 : i32
    %463 = arith.muli %c7_i32, %c8_i32_89 : i32
    %464 = tpu.assume_multiple %463, 8 : i32
    %465 = arith.index_cast %464 : i32 to index
    %c0_90 = arith.constant 0 : index
    %466 = vector.load %arg13[%465, %c0_90] : memref<64x128xf32, #tpu.memory_space<vmem>>, vector<8x128xf32>
    %cst_91 = arith.constant dense<0.000000e+00> : vector<8x128xf32>
    %467 = tpu.matmul %422, %12, %cst_91 {dimension_numbers = #tpu.dot_dimension_numbers<[1], [0], [0], [1], [0, 0, 1, 1], [], []>} : vector<8x32xf32>, vector<32x128xf32>, vector<8x128xf32> -> vector<8x128xf32>
    %468 = arith.addf %466, %467 : vector<8x128xf32>
    %469 = vector.extract_strided_slice %468 {offsets = [0, 0], sizes = [8, 96], strides = [1, 1]} : vector<8x128xf32> to vector<8x96xf32>
    %470 = arith.negf %469 : vector<8x96xf32>
    %471 = math.exp %470 : vector<8x96xf32>
    %cst_92 = arith.constant 1.000000e+00 : f32
    %472 = vector.broadcast %cst_92 : f32 to vector<8x96xf32>
    %473 = arith.addf %472, %471 : vector<8x96xf32>
    %474 = arith.divf %472, %473 : vector<8x96xf32>
    %475 = vector.extract_strided_slice %468 {offsets = [0, 96], sizes = [8, 32], strides = [1, 1]} : vector<8x128xf32> to vector<8x32xf32>
    %476 = math.tanh %475 : vector<8x32xf32>
    %477 = vector.extract_strided_slice %474 {offsets = [0, 0], sizes = [8, 32], strides = [1, 1]} : vector<8x96xf32> to vector<8x32xf32>
    %478 = vector.extract_strided_slice %474 {offsets = [0, 32], sizes = [8, 32], strides = [1, 1]} : vector<8x96xf32> to vector<8x32xf32>
    %479 = vector.extract_strided_slice %474 {offsets = [0, 64], sizes = [8, 32], strides = [1, 1]} : vector<8x96xf32> to vector<8x32xf32>
    %480 = arith.mulf %478, %420 : vector<8x32xf32>
    %481 = arith.mulf %477, %476 : vector<8x32xf32>
    %482 = arith.addf %480, %481 : vector<8x32xf32>
    %483 = math.tanh %482 : vector<8x32xf32>
    %484 = arith.mulf %479, %483 : vector<8x32xf32>
    %485 = tpu.concatenate %484, %442 in 1 : vector<8x32xf32>, vector<8x32xf32> -> vector<8x64xf32>
    %cst_93 = arith.constant dense<0.000000e+00> : vector<8x128xf32>
    %486 = tpu.matmul %485, %13, %cst_93 {dimension_numbers = #tpu.dot_dimension_numbers<[1], [0], [0], [1], [0, 0, 1, 1], [], []>} : vector<8x64xf32>, vector<64x128xf32>, vector<8x128xf32> -> vector<8x128xf32>
    %487 = vector.broadcast %14 : vector<1x128xf32> to vector<8x128xf32>
    %488 = arith.addf %486, %487 : vector<8x128xf32>
    %489 = vector.extract_strided_slice %488 {offsets = [0, 0], sizes = [8, 96], strides = [1, 1]} : vector<8x128xf32> to vector<8x96xf32>
    %490 = arith.negf %489 : vector<8x96xf32>
    %491 = math.exp %490 : vector<8x96xf32>
    %cst_94 = arith.constant 1.000000e+00 : f32
    %492 = vector.broadcast %cst_94 : f32 to vector<8x96xf32>
    %493 = arith.addf %492, %491 : vector<8x96xf32>
    %494 = arith.divf %492, %493 : vector<8x96xf32>
    %495 = vector.extract_strided_slice %488 {offsets = [0, 96], sizes = [8, 32], strides = [1, 1]} : vector<8x128xf32> to vector<8x32xf32>
    %496 = math.tanh %495 : vector<8x32xf32>
    %497 = vector.extract_strided_slice %494 {offsets = [0, 0], sizes = [8, 32], strides = [1, 1]} : vector<8x96xf32> to vector<8x32xf32>
    %498 = vector.extract_strided_slice %494 {offsets = [0, 32], sizes = [8, 32], strides = [1, 1]} : vector<8x96xf32> to vector<8x32xf32>
    %499 = vector.extract_strided_slice %494 {offsets = [0, 64], sizes = [8, 32], strides = [1, 1]} : vector<8x96xf32> to vector<8x32xf32>
    %500 = arith.mulf %498, %440 : vector<8x32xf32>
    %501 = arith.mulf %497, %496 : vector<8x32xf32>
    %502 = arith.addf %500, %501 : vector<8x32xf32>
    %503 = math.tanh %502 : vector<8x32xf32>
    %504 = arith.mulf %499, %503 : vector<8x32xf32>
    %505 = tpu.concatenate %504, %462 in 1 : vector<8x32xf32>, vector<8x32xf32> -> vector<8x64xf32>
    %cst_95 = arith.constant dense<0.000000e+00> : vector<8x128xf32>
    %506 = tpu.matmul %505, %15, %cst_95 {dimension_numbers = #tpu.dot_dimension_numbers<[1], [0], [0], [1], [0, 0, 1, 1], [], []>} : vector<8x64xf32>, vector<64x128xf32>, vector<8x128xf32> -> vector<8x128xf32>
    %507 = vector.broadcast %16 : vector<1x128xf32> to vector<8x128xf32>
    %508 = arith.addf %506, %507 : vector<8x128xf32>
    %509 = vector.extract_strided_slice %508 {offsets = [0, 0], sizes = [8, 96], strides = [1, 1]} : vector<8x128xf32> to vector<8x96xf32>
    %510 = arith.negf %509 : vector<8x96xf32>
    %511 = math.exp %510 : vector<8x96xf32>
    %cst_96 = arith.constant 1.000000e+00 : f32
    %512 = vector.broadcast %cst_96 : f32 to vector<8x96xf32>
    %513 = arith.addf %512, %511 : vector<8x96xf32>
    %514 = arith.divf %512, %513 : vector<8x96xf32>
    %515 = vector.extract_strided_slice %508 {offsets = [0, 96], sizes = [8, 32], strides = [1, 1]} : vector<8x128xf32> to vector<8x32xf32>
    %516 = math.tanh %515 : vector<8x32xf32>
    %517 = vector.extract_strided_slice %514 {offsets = [0, 0], sizes = [8, 32], strides = [1, 1]} : vector<8x96xf32> to vector<8x32xf32>
    %518 = vector.extract_strided_slice %514 {offsets = [0, 32], sizes = [8, 32], strides = [1, 1]} : vector<8x96xf32> to vector<8x32xf32>
    %519 = vector.extract_strided_slice %514 {offsets = [0, 64], sizes = [8, 32], strides = [1, 1]} : vector<8x96xf32> to vector<8x32xf32>
    %520 = arith.mulf %518, %460 : vector<8x32xf32>
    %521 = arith.mulf %517, %516 : vector<8x32xf32>
    %522 = arith.addf %520, %521 : vector<8x32xf32>
    %523 = math.tanh %522 : vector<8x32xf32>
    %524 = arith.mulf %519, %523 : vector<8x32xf32>
    %c8_i32_97 = arith.constant 8 : i32
    %c0_98 = arith.constant 0 : index
    %c0_99 = arith.constant 0 : index
    %c0_100 = arith.constant 0 : index
    %525 = vector.load %arg14[%c0_98, %c0_99, %c0_100] : memref<6x8x32xf32, #tpu.memory_space<vmem>>, vector<1x8x32xf32>
    %526 = vector.shape_cast %525 : vector<1x8x32xf32> to vector<8x32xf32>
    %527 = vector.shape_cast %484 : vector<8x32xf32> to vector<1x8x32xf32>
    tpu.vector_store %arg14[%c0_98, %c0_99, %c0_100], %527 {strides = array<i32>} : memref<6x8x32xf32, #tpu.memory_space<vmem>>, vector<1x8x32xf32>,
    %c1_101 = arith.constant 1 : index
    %c0_102 = arith.constant 0 : index
    %c0_103 = arith.constant 0 : index
    %528 = vector.load %arg14[%c1_101, %c0_102, %c0_103] : memref<6x8x32xf32, #tpu.memory_space<vmem>>, vector<1x8x32xf32>
    %529 = vector.shape_cast %528 : vector<1x8x32xf32> to vector<8x32xf32>
    %530 = vector.shape_cast %482 : vector<8x32xf32> to vector<1x8x32xf32>
    tpu.vector_store %arg14[%c1_101, %c0_102, %c0_103], %530 {strides = array<i32>} : memref<6x8x32xf32, #tpu.memory_space<vmem>>, vector<1x8x32xf32>,
    %c2_104 = arith.constant 2 : index
    %c0_105 = arith.constant 0 : index
    %c0_106 = arith.constant 0 : index
    %531 = vector.load %arg14[%c2_104, %c0_105, %c0_106] : memref<6x8x32xf32, #tpu.memory_space<vmem>>, vector<1x8x32xf32>
    %532 = vector.shape_cast %531 : vector<1x8x32xf32> to vector<8x32xf32>
    %533 = vector.shape_cast %504 : vector<8x32xf32> to vector<1x8x32xf32>
    tpu.vector_store %arg14[%c2_104, %c0_105, %c0_106], %533 {strides = array<i32>} : memref<6x8x32xf32, #tpu.memory_space<vmem>>, vector<1x8x32xf32>,
    %c3_107 = arith.constant 3 : index
    %c0_108 = arith.constant 0 : index
    %c0_109 = arith.constant 0 : index
    %534 = vector.load %arg14[%c3_107, %c0_108, %c0_109] : memref<6x8x32xf32, #tpu.memory_space<vmem>>, vector<1x8x32xf32>
    %535 = vector.shape_cast %534 : vector<1x8x32xf32> to vector<8x32xf32>
    %536 = vector.shape_cast %502 : vector<8x32xf32> to vector<1x8x32xf32>
    tpu.vector_store %arg14[%c3_107, %c0_108, %c0_109], %536 {strides = array<i32>} : memref<6x8x32xf32, #tpu.memory_space<vmem>>, vector<1x8x32xf32>,
    %c4_110 = arith.constant 4 : index
    %c0_111 = arith.constant 0 : index
    %c0_112 = arith.constant 0 : index
    %537 = vector.load %arg14[%c4_110, %c0_111, %c0_112] : memref<6x8x32xf32, #tpu.memory_space<vmem>>, vector<1x8x32xf32>
    %538 = vector.shape_cast %537 : vector<1x8x32xf32> to vector<8x32xf32>
    %539 = vector.shape_cast %524 : vector<8x32xf32> to vector<1x8x32xf32>
    tpu.vector_store %arg14[%c4_110, %c0_111, %c0_112], %539 {strides = array<i32>} : memref<6x8x32xf32, #tpu.memory_space<vmem>>, vector<1x8x32xf32>,
    %c5_113 = arith.constant 5 : index
    %c0_114 = arith.constant 0 : index
    %c0_115 = arith.constant 0 : index
    %540 = vector.load %arg14[%c5_113, %c0_114, %c0_115] : memref<6x8x32xf32, #tpu.memory_space<vmem>>, vector<1x8x32xf32>
    %541 = vector.shape_cast %540 : vector<1x8x32xf32> to vector<8x32xf32>
    %542 = vector.shape_cast %522 : vector<8x32xf32> to vector<1x8x32xf32>
    tpu.vector_store %arg14[%c5_113, %c0_114, %c0_115], %542 {strides = array<i32>} : memref<6x8x32xf32, #tpu.memory_space<vmem>>, vector<1x8x32xf32>,
    %c0_i32_116 = arith.constant 0 : i32
    %543 = arith.cmpi eq, %arg1, %c0_i32_116 : i32
    %544 = arith.extui %543 : i1 to i32
    %c0_i32_117 = arith.constant 0 : i32
    %545 = arith.cmpi ne, %544, %c0_i32_117 : i32
    scf.if %545 {
      %c0_118 = arith.constant 0 : index
      %c0_119 = arith.constant 0 : index
      %546 = vector.load %arg10[%c0_118, %c0_119] : memref<32x32xf32, #tpu.memory_space<vmem>>, vector<32x32xf32>
      %cst_120 = arith.constant dense<0.000000e+00> : vector<8x32xf32>
      %547 = tpu.matmul %524, %546, %cst_120 {dimension_numbers = #tpu.dot_dimension_numbers<[1], [0], [0], [1], [0, 0, 1, 1], [], []>} : vector<8x32xf32>, vector<32x32xf32>, vector<8x32xf32> -> vector<8x32xf32>
      %c0_121 = arith.constant 0 : index
      %c0_122 = arith.constant 0 : index
      %548 = vector.load %arg11[%c0_121, %c0_122] : memref<1x32xf32, #tpu.memory_space<vmem>>, vector<1x32xf32>
      %549 = vector.broadcast %548 : vector<1x32xf32> to vector<8x32xf32>
      %550 = arith.addf %547, %549 : vector<8x32xf32>
      %cst_123 = arith.constant 0.000000e+00 : f32
      %551 = vector.broadcast %cst_123 : f32 to vector<8x32xf32>
      %552 = arith.maximumf %550, %551 : vector<8x32xf32>
      %553 = arith.mulf %552, %552 : vector<8x32xf32>
      %cst_124 = arith.constant dense<0.000000e+00> : vector<8xf32>
      %554 = vector.multi_reduction <add>, %553, %cst_124 [1] : vector<8x32xf32> to vector<8xf32>
      %555 = vector.shape_cast %554 : vector<8xf32> to vector<8x1xf32>
      %cst_125 = arith.constant 9.99999996E-13 : f32
      %556 = vector.broadcast %cst_125 : f32 to vector<8x1xf32>
      %557 = arith.maximumf %555, %556 : vector<8x1xf32>
      %558 = math.rsqrt %557 : vector<8x1xf32>
      %559 = vector.broadcast %558 : vector<8x1xf32> to vector<8x32xf32>
      %560 = arith.mulf %552, %559 : vector<8x32xf32>
      %c0_126 = arith.constant 0 : index
      %c0_127 = arith.constant 0 : index
      %561 = vector.load %arg12[%c0_126, %c0_127] : memref<8x32xf32, #tpu.memory_space<vmem>>, vector<8x32xf32>
      tpu.vector_store %arg12[%c0_126, %c0_127], %560 {strides = array<i32>} : memref<8x32xf32, #tpu.memory_space<vmem>>, vector<8x32xf32>,
    } else {
    }
    return
  }
  func.func @transform_0(%arg0: i32, %arg1: i32) -> (i32, i32, i32, i32) {
    %c0_i32 = arith.constant 0 : i32
    %c0_i32_0 = arith.constant 0 : i32
    %c0_i32_1 = arith.constant 0 : i32
    return %arg0, %arg1, %c0_i32, %c0_i32_0 : i32, i32, i32, i32
  }
  func.func @transform_1(%arg0: i32, %arg1: i32) -> (i32, i32) {
    %c0_i32 = arith.constant 0 : i32
    %c0_i32_0 = arith.constant 0 : i32
    %c0_i32_1 = arith.constant 0 : i32
    return %c0_i32, %c0_i32_0 : i32, i32
  }
  func.func @transform_2(%arg0: i32, %arg1: i32) -> (i32, i32) {
    %c0_i32 = arith.constant 0 : i32
    %c0_i32_0 = arith.constant 0 : i32
    %c0_i32_1 = arith.constant 0 : i32
    return %c0_i32, %c0_i32_0 : i32, i32
  }
  func.func @transform_3(%arg0: i32, %arg1: i32) -> (i32, i32) {
    %c0_i32 = arith.constant 0 : i32
    %c0_i32_0 = arith.constant 0 : i32
    %c0_i32_1 = arith.constant 0 : i32
    return %c0_i32, %c0_i32_0 : i32, i32
  }
  func.func @transform_4(%arg0: i32, %arg1: i32) -> (i32, i32) {
    %c0_i32 = arith.constant 0 : i32
    %c0_i32_0 = arith.constant 0 : i32
    %c0_i32_1 = arith.constant 0 : i32
    return %c0_i32, %c0_i32_0 : i32, i32
  }
  func.func @transform_5(%arg0: i32, %arg1: i32) -> (i32, i32) {
    %c0_i32 = arith.constant 0 : i32
    %c0_i32_0 = arith.constant 0 : i32
    %c0_i32_1 = arith.constant 0 : i32
    return %c0_i32, %c0_i32_0 : i32, i32
  }
  func.func @transform_6(%arg0: i32, %arg1: i32) -> (i32, i32) {
    %c0_i32 = arith.constant 0 : i32
    %c0_i32_0 = arith.constant 0 : i32
    %c0_i32_1 = arith.constant 0 : i32
    return %c0_i32, %c0_i32_0 : i32, i32
  }
  func.func @transform_7(%arg0: i32, %arg1: i32) -> (i32, i32) {
    %c0_i32 = arith.constant 0 : i32
    %c0_i32_0 = arith.constant 0 : i32
    %c0_i32_1 = arith.constant 0 : i32
    return %c0_i32, %c0_i32_0 : i32, i32
  }
  func.func @transform_8(%arg0: i32, %arg1: i32) -> (i32, i32) {
    %c0_i32 = arith.constant 0 : i32
    %c0_i32_0 = arith.constant 0 : i32
    %c0_i32_1 = arith.constant 0 : i32
    return %c0_i32, %c0_i32_0 : i32, i32
  }
  func.func @transform_9(%arg0: i32, %arg1: i32) -> (i32, i32) {
    %c0_i32 = arith.constant 0 : i32
    %c0_i32_0 = arith.constant 0 : i32
    %c0_i32_1 = arith.constant 0 : i32
    return %c0_i32, %c0_i32_0 : i32, i32
  }
  func.func @transform_10(%arg0: i32, %arg1: i32) -> (i32, i32) {
    %c0_i32 = arith.constant 0 : i32
    %c0_i32_0 = arith.constant 0 : i32
    return %arg0, %c0_i32 : i32, i32
  }
}

</mosaic_0001>

<llo_original>
// kernel: tpu_custom_call.1
$region0: #{tpu_custom_call.1}
  #allocation0 [shape = 'u32[]', space=smem, size = 0x4, offset = 0x4, fixed_abs, tag = 'smem constant byte address 0x4 - core index']
  #allocation1 [shape = 'u32[144,128]{1,0:T(1,128)}', space=vmem, size = 0x12000, scoped, tag = 'internal scratch']
  #allocation2 [shape = 'f32[64,128]{1,0:T(8,128)}', space=vmem, size = 0x8000, scoped, tag = 'scratch operand']
  #allocation3 [shape = 'f32[6,8,32]{2,1,0:T(8,128)}', space=vmem, size = 0x6000, scoped, tag = 'scratch operand']
  %s0 = inlined_call_operand.vmem [shape: f32[1,1,64,40], index: 0, kind: input, shape index: {}]
  %s1 = inlined_call_operand.hbm [shape: bf16[40,128], index: 1, kind: input, shape index: {}]
  %s2 = inlined_call_operand.vmem [shape: f32[32,128], index: 2, kind: input, shape index: {}]
  %s3 = inlined_call_operand.vmem [shape: f32[1,128], index: 3, kind: input, shape index: {}]
  %s4 = inlined_call_operand.vmem [shape: f32[64,128], index: 4, kind: input, shape index: {}]
  %s5 = inlined_call_operand.vmem [shape: f32[1,128], index: 5, kind: input, shape index: {}]
  %s6 = inlined_call_operand.hbm [shape: f32[64,128], index: 6, kind: input, shape index: {}]
  %s7 = inlined_call_operand.hbm [shape: f32[1,128], index: 7, kind: input, shape index: {}]
  %s8 = inlined_call_operand.vmem [shape: f32[32,32], index: 8, kind: input, shape index: {}]
  %s9 = inlined_call_operand.vmem [shape: f32[1,32], index: 9, kind: input, shape index: {}]
  %s10 = inlined_call_operand.hbm [shape: f32[8,32], index: 10, kind: output, shape index: {}]
  %s11 = sld [smem:[#allocation0]]
  $region70: #{tpu_custom_call.1} parent=0
    _
  %s13 = ssub.s32 1, %s11
  %s14 = scalar_select 0, %s13, %s11
  $region1: #{tpu_custom_call.1} parent=0
    #allocation4 [shape = 'u8[10240]{0}', space=vmem, size = 0x2800, scoped, tag = 'input window, operand 1, single buffered']
    #allocation5 [shape = 's32[1]{0}', space=sflag, size = 0x4, scoped, tag = 'scoped memory for tpu_custom_call.1']
    #allocation6 [shape = 's32[1]{0}', space=sflag, size = 0x4, scoped, tag = 'scoped memory for tpu_custom_call.1']
    #allocation7 [shape = 'u8[32768]{0}', space=vmem, size = 0x8000, scoped, tag = 'input window, operand 6, single buffered']
    #allocation8 [shape = 's32[1]{0}', space=sflag, size = 0x4, scoped, tag = 'scoped memory for tpu_custom_call.1']
    #allocation9 [shape = 'u8[512]{0}', space=vmem, size = 0x400, scoped, tag = 'input window, operand 7, single buffered']
    #allocation10 [shape = 'u8[4096]{0}', space=vmem, size = 0x1000, scoped, tag = 'output window, operand 0, single buffered']
    %15 = vsyncpa [#allocation5], 0
    %16 = vsyncpa [#allocation8], 0
    %17 = vsyncpa [#allocation6], 0
    // Predicated region
    $region2: #{tpu_custom_call.1} parent=1 // pred_check
      _
    $region3: #{tpu_custom_call.1} parent=1 // pred_check_branch
      %19 = sbr.rel (0) target = $region5
    $region4: #{tpu_custom_call.1} parent=1 // pred_region
      _
    $region5: #{tpu_custom_call.1} parent=1 // pred_fallthru
      _
    // Predicated region
    $region6: #{tpu_custom_call.1} parent=1 // pred_check
      _
    $region7: #{tpu_custom_call.1} parent=1 // pred_check_branch
      %21 = sbr.rel (0) target = $region9
    $region8: #{tpu_custom_call.1} parent=1 // pred_region
      %s23 = ssub.s32 320, 320
      %24 = vsyncadd [#allocation5], %s23
      %s25 = sshll.u32 [#allocation4], 4
      %s26 = int_to_ptr.vmem [resolvable:$true] %s25
      %31 = dma.hbm_to_vmem [thread:$0]  %s1, 320, %s26, [#allocation5], 64, 64, 4
    $region9: #{tpu_custom_call.1} parent=1 // pred_fallthru
      _
    // Predicated region
    $region10: #{tpu_custom_call.1} parent=1 // pred_check
      _
    $region11: #{tpu_custom_call.1} parent=1 // pred_check_branch
      %33 = sbr.rel (0) target = $region13
    $region12: #{tpu_custom_call.1} parent=1 // pred_region
      _
    $region13: #{tpu_custom_call.1} parent=1 // pred_fallthru
      _
    // Predicated region
    $region14: #{tpu_custom_call.1} parent=1 // pred_check
      _
    $region15: #{tpu_custom_call.1} parent=1 // pred_check_branch
      %35 = sbr.rel (0) target = $region17
    $region16: #{tpu_custom_call.1} parent=1 // pred_region
      _
    $region17: #{tpu_custom_call.1} parent=1 // pred_fallthru
      _
    // Predicated region
    $region18: #{tpu_custom_call.1} parent=1 // pred_check
      _
    $region19: #{tpu_custom_call.1} parent=1 // pred_check_branch
      %37 = sbr.rel (0) target = $region21
    $region20: #{tpu_custom_call.1} parent=1 // pred_region
      _
    $region21: #{tpu_custom_call.1} parent=1 // pred_fallthru
      _
    // Predicated region
    $region22: #{tpu_custom_call.1} parent=1 // pred_check
      _
    $region23: #{tpu_custom_call.1} parent=1 // pred_check_branch
      %39 = sbr.rel (0) target = $region25
    $region24: #{tpu_custom_call.1} parent=1 // pred_region
      _
    $region25: #{tpu_custom_call.1} parent=1 // pred_fallthru
      _
    // Predicated region
    $region26: #{tpu_custom_call.1} parent=1 // pred_check
      _
    $region27: #{tpu_custom_call.1} parent=1 // pred_check_branch
      %41 = sbr.rel (0) target = $region29
    $region28: #{tpu_custom_call.1} parent=1 // pred_region
      %s43 = ssub.s32 1024, 1024
      %44 = vsyncadd [#allocation8], %s43
      %s45 = sshll.u32 [#allocation7], 4
      %s46 = int_to_ptr.vmem [resolvable:$true] %s45
      %51 = dma.hbm_to_vmem [thread:$0]  %s6, 1024, %s46, [#allocation8], 128, 128, 8
    $region29: #{tpu_custom_call.1} parent=1 // pred_fallthru
      _
    // Predicated region
    $region30: #{tpu_custom_call.1} parent=1 // pred_check
      _
    $region31: #{tpu_custom_call.1} parent=1 // pred_check_branch
      %53 = sbr.rel (0) target = $region33
    $region32: #{tpu_custom_call.1} parent=1 // pred_region
      %s55 = ssub.s32 16, 16
      %56 = vsyncadd [#allocation8], %s55
      %s58 = sshll.u32 [#allocation9], 4
      %s59 = int_to_ptr.vmem [resolvable:$true] %s58
      %61 = dma.hbm_to_vmem [thread:$0]  %s7, 16, %s59, [#allocation8]
    $region33: #{tpu_custom_call.1} parent=1 // pred_fallthru
      _
    // Predicated region
    $region34: #{tpu_custom_call.1} parent=1 // pred_check
      _
    $region35: #{tpu_custom_call.1} parent=1 // pred_check_branch
      %63 = sbr.rel (0) target = $region37
    $region36: #{tpu_custom_call.1} parent=1 // pred_region
      _
    $region37: #{tpu_custom_call.1} parent=1 // pred_fallthru
      _
    // Predicated region
    $region38: #{tpu_custom_call.1} parent=1 // pred_check
      _
    $region39: #{tpu_custom_call.1} parent=1 // pred_check_branch
      %65 = sbr.rel (0) target = $region41
    $region40: #{tpu_custom_call.1} parent=1 // pred_region
      _
    $region41: #{tpu_custom_call.1} parent=1 // pred_fallthru
      _
    // Predicated region
    $region42: #{tpu_custom_call.1} parent=1 // pred_check
      _
    $region43: #{tpu_custom_call.1} parent=1 // pred_check_branch
      %67 = sbr.rel (0) target = $region45
    $region44: #{tpu_custom_call.1} parent=1 // pred_region
      %68 = dma.done [#allocation5], 320
    $region45: #{tpu_custom_call.1} parent=1 // pred_fallthru
      _
    // Predicated region
    $region46: #{tpu_custom_call.1} parent=1 // pred_check
      _
    $region47: #{tpu_custom_call.1} parent=1 // pred_check_branch
      %70 = sbr.rel (0) target = $region49
    $region48: #{tpu_custom_call.1} parent=1 // pred_region
      %71 = dma.done [#allocation8], 1024
    $region49: #{tpu_custom_call.1} parent=1 // pred_fallthru
      _
    // Predicated region
    $region50: #{tpu_custom_call.1} parent=1 // pred_check
      _
    $region51: #{tpu_custom_call.1} parent=1 // pred_check_branch
      %73 = sbr.rel (0) target = $region53
    $region52: #{tpu_custom_call.1} parent=1 // pred_region
      %74 = dma.done [#allocation8], 16
    $region53: #{tpu_custom_call.1} parent=1 // pred_fallthru
      _
    %p76 = scmp.eq.s32.totalorder 0, 0
    // Predicated region
    $region54: #{tpu_custom_call.1} parent=1 // pred_check
      %p77 = pneg %p76
    $region55: #{tpu_custom_call.1} parent=1 // pred_check_branch
      %79 = sbr.rel (%p77) target = $region57
    $region56: #{tpu_custom_call.1} parent=1 // pred_region
      %vm80 = vcmask 261120
      %81 = vst.msk [vmem:[#allocation3] sm:$0xff] %vm80, 0.0
      %82 = vst.msk [vmem:[#allocation3 + $0x8] sm:$0xff] %vm80, 0.0
      %83 = vst.msk [vmem:[#allocation3 + $0x10] sm:$0xff] %vm80, 0.0
      %84 = vst.msk [vmem:[#allocation3 + $0x18] sm:$0xff] %vm80, 0.0
      %85 = vst.msk [vmem:[#allocation3 + $0x20] sm:$0xff] %vm80, 0.0
      %86 = vst.msk [vmem:[#allocation3 + $0x28] sm:$0xff] %vm80, 0.0
    $region57: #{tpu_custom_call.1} parent=1 // pred_fallthru
      _
    %v87 = vld [vmem:[%s0] sm:$0xff]
    %v88 = vld [vmem:[%s0 + $0x8] sm:$0xff]
    %v89 = vld [vmem:[%s0 + $0x10] sm:$0xff]
    %v90 = vld [vmem:[%s0 + $0x18] sm:$0xff]
    %v91 = vld [vmem:[%s0 + $0x20] sm:$0xff]
    %v92 = vld [vmem:[%s0 + $0x28] sm:$0xff]
    %v93 = vld [vmem:[%s0 + $0x30] sm:$0xff]
    %v94 = vld [vmem:[%s0 + $0x38] sm:$0xff]
    %v95 = vpack.c.bf16 %v88, %v87
    %v96 = vpack.c.bf16 %v90, %v89
    %v97 = vpack.c.bf16 %v92, %v91
    %v98 = vpack.c.bf16 %v94, %v93
    %v99 = vld [vmem:[#allocation4] sm:$0xf]
    %v100 = vld [vmem:[#allocation4 + $0x4] sm:$0xf]
    %v101 = vld [vmem:[#allocation4 + $0x8] sm:$0xf]
    %v102 = vld [vmem:[#allocation4 + $0xc] sm:$0xf]
    %v103 = vld [vmem:[#allocation4 + $0x10] sm:$0xf]
    %v104 = vld [vmem:[%s3] sm:$0x1]
    %v106 = vlaneseq
    %v107 = vshrl.u32 %v106, 7
    %v108 = vsub.s32 0, %v107
    %v109 = vrot.slane %v104, %v108
    %v116 = vunpack.c.l.b16 %v99
    %v117 = vunpack.c.l.b16 %v100
    %v118 = vunpack.c.l.b16 %v101
    %v119 = vunpack.c.l.b16 %v102
    %v120 = vunpack.c.l.b16 %v103
    %v121 = vpack.c.b16 %v117, %v116
    %v122 = vpack.c.b16 %v119, %v118
    %v123 = vpack.c.b16 %v120, %v120
    %vm126 = vcmask 326656
    %v128 = vsel %vm126, %v95, 0
    %v131 = vsel %vm126, %v96, 0
    %v134 = vsel %vm126, %v97, 0
    %v137 = vsel %vm126, %v98, 0
    %vm139 = vcmask 1043456
    %v141 = vsel %vm139, %v123, 0
    %143 = vmatprep.subr.bf16.mxu0 0
    %144 = vmatpush1.bf16.msra.mxu0 %v121
    %145 = vmatprep.subr.bf16.mxu0 0
    %146 = vmatpush1.bf16.msra.mxu0 %v122
    %147 = vmatprep.subr.bf16.mxu0 0
    %148 = vmatpush1.bf16.msra.mxu0 %v141
    %149 = vmatprep.subr.bf16.mxu0 0
    %150 = vmatpush1.bf16.msra.mxu0 0
    %151 = vmatprep.subr.bf16.mxu0 0
    %152 = vmatpush1.bf16.msra.mxu0 0
    %153 = vmatprep.subr.bf16.mxu0 0
    %154 = vmatpush1.bf16.msra.mxu0 0
    %155 = vmatprep.subr.bf16.mxu0 0
    %156 = vmatpush1.bf16.msra.mxu0 0
    %157 = vmatprep.subr.bf16.mxu0 0
    %158 = vmatpush1.bf16.msra.mxu0 0
    %159 = vmatprep.subr.bf16.mxu0 0
    %160 = vmatpush1.bf16.msra.mxu0 0
    %161 = vmatprep.subr.bf16.mxu0 0
    %162 = vmatpush1.bf16.msra.mxu0 0
    %163 = vmatprep.subr.bf16.mxu0 0
    %164 = vmatpush1.bf16.msra.mxu0 0
    %165 = vmatprep.subr.bf16.mxu0 0
    %166 = vmatpush1.bf16.msra.mxu0 0
    %167 = vmatprep.subr.bf16.mxu0 0
    %168 = vmatpush1.bf16.msra.mxu0 0
    %169 = vmatprep.subr.bf16.mxu0 0
    %170 = vmatpush1.bf16.msra.mxu0 0
    %171 = vmatprep.subr.bf16.mxu0 0
    %172 = vmatpush1.bf16.msra.mxu0 0
    %173 = vmatprep.subr.bf16.mxu0 0
    %174 = vmatpush1.bf16.msra.mxu0 0
    %175 = vmatprep.mubr.bf16.mxu0 0
    %176 = vmatmul.mubr.bf16.gmra.mrb[0].mxu0 %v128
    %v177 = vpop.f32.mrb[0].mxu0
    %v178 = vadd.f32 %v109, %v177
    %v179 = vpop.f32.mrb[0].mxu0
    %v180 = vpop.f32.mrb[0].mxu0
    %v181 = vadd.f32 %v109, %v180
    %v182 = vpop.f32.mrb[0].mxu0
    %183 = vmatprep.mubr.bf16.mxu0 0
    %184 = vmatmul.mubr.bf16.gmra.mrb[0].mxu0 %v131
    %v185 = vpop.f32.mrb[0].mxu0
    %v186 = vadd.f32 %v109, %v185
    %v187 = vpop.f32.mrb[0].mxu0
    %v188 = vpop.f32.mrb[0].mxu0
    %v189 = vadd.f32 %v109, %v188
    %v190 = vpop.f32.mrb[0].mxu0
    %191 = vmatprep.mubr.bf16.mxu0 0
    %192 = vmatmul.mubr.bf16.gmra.mrb[0].mxu0 %v134
    %v193 = vpop.f32.mrb[0].mxu0
    %v194 = vadd.f32 %v109, %v193
    %v195 = vpop.f32.mrb[0].mxu0
    %v196 = vpop.f32.mrb[0].mxu0
    %v197 = vadd.f32 %v109, %v196
    %v198 = vpop.f32.mrb[0].mxu0
    %199 = vmatprep.mubr.bf16.mxu0 0
    %200 = vmatmul.mubr.bf16.gmra.mrb[0].mxu0 %v137
    %v201 = vpop.f32.mrb[0].mxu0
    %v202 = vadd.f32 %v109, %v201
    %v203 = vpop.f32.mrb[0].mxu0
    %v204 = vpop.f32.mrb[0].mxu0
    %v205 = vadd.f32 %v109, %v204
    %v206 = vpop.f32.mrb[0].mxu0
    %207 = vdwg.mxu0
    %208 = vst [vmem:[#allocation2] sm:$0xff] %v178
    %209 = vst [vmem:[#allocation2 + $0x8] sm:$0xff] %v181
    %210 = vst [vmem:[#allocation2 + $0x10] sm:$0xff] %v186
    %211 = vst [vmem:[#allocation2 + $0x18] sm:$0xff] %v189
    %212 = vst [vmem:[#allocation2 + $0x20] sm:$0xff] %v194
    %213 = vst [vmem:[#allocation2 + $0x28] sm:$0xff] %v197
    %214 = vst [vmem:[#allocation2 + $0x30] sm:$0xff] %v202
    %215 = vst [vmem:[#allocation2 + $0x38] sm:$0xff] %v205
    %v216 = vld [vmem:[%s2] sm:$0xff]
    %v217 = vld [vmem:[%s2 + $0x8] sm:$0xff]
    %v218 = vld [vmem:[%s2 + $0x10] sm:$0xff]
    %v219 = vld [vmem:[%s2 + $0x18] sm:$0xff]
    %v220 = vld [vmem:[%s4] sm:$0xff]
    %v221 = vld [vmem:[%s4 + $0x8] sm:$0xff]
    %v222 = vld [vmem:[%s4 + $0x10] sm:$0xff]
    %v223 = vld [vmem:[%s4 + $0x18] sm:$0xff]
    %v224 = vld [vmem:[%s4 + $0x20] sm:$0xff]
    %v225 = vld [vmem:[%s4 + $0x28] sm:$0xff]
    %v226 = vld [vmem:[%s4 + $0x30] sm:$0xff]
    %v227 = vld [vmem:[%s4 + $0x38] sm:$0xff]
    %v228 = vld [vmem:[%s5] sm:$0x1]
    %v229 = vld [vmem:[#allocation7] sm:$0xff]
    %v230 = vld [vmem:[#allocation7 + $0x8] sm:$0xff]
    %v231 = vld [vmem:[#allocation7 + $0x10] sm:$0xff]
    %v232 = vld [vmem:[#allocation7 + $0x18] sm:$0xff]
    %v233 = vld [vmem:[#allocation7 + $0x20] sm:$0xff]
    %v234 = vld [vmem:[#allocation7 + $0x28] sm:$0xff]
    %v235 = vld [vmem:[#allocation7 + $0x30] sm:$0xff]
    %v236 = vld [vmem:[#allocation7 + $0x38] sm:$0xff]
    %v237 = vld [vmem:[#allocation9] sm:$0x1]
    %v238 = vld [vmem:[#allocation3] sm:$0xff]
    %s239 = scalar_lea.vmem [#allocation3], 8
    %v240 = vld [vmem:[%s239] sm:$0xff]
    %s241 = scalar_lea.vmem [#allocation3], 16
    %v242 = vld [vmem:[%s241] sm:$0xff]
    %s243 = scalar_lea.vmem [#allocation3], 24
    %v244 = vld [vmem:[%s243] sm:$0xff]
    %s245 = scalar_lea.vmem [#allocation3], 32
    %v246 = vld [vmem:[%s245] sm:$0xff]
    %s247 = scalar_lea.vmem [#allocation3], 40
    %v248 = vld [vmem:[%s247] sm:$0xff]
    %v249 = vld [vmem:[#allocation2] sm:$0xff]
    %vm250 = vcmask 261120
    %v252 = vsel %vm250, %v238, 0
    %254 = vmatprep.subr.mxu0 0.0
    %255 = vmatpush1.msra.mxu0 %v216
    %256 = vmatprep.subr.mxu0 0.0
    %257 = vmatpush1.msra.mxu0 %v217
    %258 = vmatprep.subr.mxu0 0.0
    %259 = vmatpush1.msra.mxu0 %v218
    %260 = vmatprep.subr.mxu0 0.0
    %261 = vmatpush1.msra.mxu0 %v219
    %262 = vmatprep.subr.mxu0 0.0
    %263 = vmatpush1.msra.mxu0 0.0
    %264 = vmatprep.subr.mxu0 0.0
    %265 = vmatpush1.msra.mxu0 0.0
    %266 = vmatprep.subr.mxu0 0.0
    %267 = vmatpush1.msra.mxu0 0.0
    %268 = vmatprep.subr.mxu0 0.0
    %269 = vmatpush1.msra.mxu0 0.0
    %270 = vmatprep.subr.mxu0 0.0
    %271 = vmatpush1.msra.mxu0 0.0
    %272 = vmatprep.subr.mxu0 0.0
    %273 = vmatpush1.msra.mxu0 0.0
    %274 = vmatprep.subr.mxu0 0.0
    %275 = vmatpush1.msra.mxu0 0.0
    %276 = vmatprep.subr.mxu0 0.0
    %277 = vmatpush1.msra.mxu0 0.0
    %278 = vmatprep.subr.mxu0 0.0
    %279 = vmatpush1.msra.mxu0 0.0
    %280 = vmatprep.subr.mxu0 0.0
    %281 = vmatpush1.msra.mxu0 0.0
    %282 = vmatprep.subr.mxu0 0.0
    %283 = vmatpush1.msra.mxu0 0.0
    %284 = vmatprep.subr.mxu0 0.0
    %285 = vmatpush1.msra.mxu0 0.0
    %286 = vmatprep.subr.mxu0 0.0
    %287 = vmatpush1.msra.mxu0 0.0
    %288 = vmatprep.subr.mxu0 0.0
    %289 = vmatpush1.msra.mxu0 0.0
    %290 = vmatprep.subr.mxu0 0.0
    %291 = vmatpush1.msra.mxu0 0.0
    %292 = vmatprep.subr.mxu0 0.0
    %293 = vmatpush1.msra.mxu0 0.0
    %294 = vmatprep.subr.mxu0 0.0
    %295 = vmatpush1.msra.mxu0 0.0
    %296 = vmatprep.subr.mxu0 0.0
    %297 = vmatpush1.msra.mxu0 0.0
    %298 = vmatprep.subr.mxu0 0.0
    %299 = vmatpush1.msra.mxu0 0.0
    %300 = vmatprep.subr.mxu0 0.0
    %301 = vmatpush1.msra.mxu0 0.0
    %302 = vmatprep.subr.mxu0 0.0
    %303 = vmatpush1.msra.mxu0 0.0
    %304 = vmatprep.subr.mxu0 0.0
    %305 = vmatpush1.msra.mxu0 0.0
    %306 = vmatprep.subr.mxu0 0.0
    %307 = vmatpush1.msra.mxu0 0.0
    %308 = vmatprep.subr.mxu0 0.0
    %309 = vmatpush1.msra.mxu0 0.0
    %310 = vmatprep.subr.mxu0 0.0
    %311 = vmatpush1.msra.mxu0 0.0
    %312 = vmatprep.subr.mxu0 0.0
    %313 = vmatpush1.msra.mxu0 0.0
    %314 = vmatprep.subr.mxu0 0.0
    %315 = vmatpush1.msra.mxu0 0.0
    %316 = vmatprep.subr.mxu0 0.0
    %317 = vmatpush1.msra.mxu0 0.0
    %318 = vmatprep.mubr.f32.mxu0 0.0
    %319 = vmatmul.mubr.f32.gmra.mrb[0].mxu0 %v252
    %v320 = vpop.f32.mrb[0].mxu0
    %v321 = vadd.f32 0.0, %v320
    %v322 = vpop.f32.mrb[0].mxu0
    %323 = vdwg.mxu0
    %v324 = vadd.f32 %v249, %v321
    %v325 = vxor.u32 %v324, 2147483648
    %v326 = vmul.f32 %v325, 1.442695
    %v327 = vpow.pop %v326
    %v328 = vadd.f32 %v327, 1.0
    %v329 = vrcp.pop %v328
    %v330 = vmul.f32 1.0, %v329
    %v331 = vtanh.pop %v324
    %333 = vrot.lane.b32.xlu0 %v240, 32
    %v334 = vpop.permute.xlu0 %333
    %v336 = vmul.f32 %v330, %v334
    %338 = vrot.lane.b32.xlu0 %v331, 32
    %v339 = vpop.permute.xlu0 %338
    %v341 = vmul.f32 %v330, %v339
    %343 = vrot.lane.b32.xlu0 %v341, 32
    %v344 = vpop.permute.xlu0 %343
    %v346 = vadd.f32 %v336, %v344
    %v347 = vtanh.pop %v346
    %349 = vrot.lane.b32.xlu0 %v347, 32
    %v350 = vpop.permute.xlu0 %349
    %v352 = vmul.f32 %v330, %v350
    %354 = vrot.lane.b32.xlu0 %v352, 64
    %v355 = vpop.permute.xlu0 %354
    %358 = vrot.lane.b32.xlu0 %v242, 32
    %v359 = vpop.permute.xlu0 %358
    %v361 = vsel %vm250, %v355, %v359
    %v363 = vlaneseq
    %v364 = vshrl.u32 %v363, 7
    %v365 = vsub.s32 0, %v364
    %v366 = vrot.slane %v228, %v365
    %vm368 = vcmask 523264
    %v370 = vsel %vm368, %v361, 0
    %372 = vmatprep.subr.mxu0 0.0
    %373 = vmatpush1.msra.mxu0 %v220
    %374 = vmatprep.subr.mxu0 0.0
    %375 = vmatpush1.msra.mxu0 %v221
    %376 = vmatprep.subr.mxu0 0.0
    %377 = vmatpush1.msra.mxu0 %v222
    %378 = vmatprep.subr.mxu0 0.0
    %379 = vmatpush1.msra.mxu0 %v223
    %380 = vmatprep.subr.mxu0 0.0
    %381 = vmatpush1.msra.mxu0 %v224
    %382 = vmatprep.subr.mxu0 0.0
    %383 = vmatpush1.msra.mxu0 %v225
    %384 = vmatprep.subr.mxu0 0.0
    %385 = vmatpush1.msra.mxu0 %v226
    %386 = vmatprep.subr.mxu0 0.0
    %387 = vmatpush1.msra.mxu0 %v227
    %388 = vmatprep.subr.mxu0 0.0
    %389 = vmatpush1.msra.mxu0 0.0
    %390 = vmatprep.subr.mxu0 0.0
    %391 = vmatpush1.msra.mxu0 0.0
    %392 = vmatprep.subr.mxu0 0.0
    %393 = vmatpush1.msra.mxu0 0.0
    %394 = vmatprep.subr.mxu0 0.0
    %395 = vmatpush1.msra.mxu0 0.0
    %396 = vmatprep.subr.mxu0 0.0
    %397 = vmatpush1.msra.mxu0 0.0
    %398 = vmatprep.subr.mxu0 0.0
    %399 = vmatpush1.msra.mxu0 0.0
    %400 = vmatprep.subr.mxu0 0.0
    %401 = vmatpush1.msra.mxu0 0.0
    %402 = vmatprep.subr.mxu0 0.0
    %403 = vmatpush1.msra.mxu0 0.0
    %404 = vmatprep.subr.mxu0 0.0
    %405 = vmatpush1.msra.mxu0 0.0
    %406 = vmatprep.subr.mxu0 0.0
    %407 = vmatpush1.msra.mxu0 0.0
    %408 = vmatprep.subr.mxu0 0.0
    %409 = vmatpush1.msra.mxu0 0.0
    %410 = vmatprep.subr.mxu0 0.0
    %411 = vmatpush1.msra.mxu0 0.0
    %412 = vmatprep.subr.mxu0 0.0
    %413 = vmatpush1.msra.mxu0 0.0
    %414 = vmatprep.subr.mxu0 0.0
    %415 = vmatpush1.msra.mxu0 0.0
    %416 = vmatprep.subr.mxu0 0.0
    %417 = vmatpush1.msra.mxu0 0.0
    %418 = vmatprep.subr.mxu0 0.0
    %419 = vmatpush1.msra.mxu0 0.0
    %420 = vmatprep.subr.mxu0 0.0
    %421 = vmatpush1.msra.mxu0 0.0
    %422 = vmatprep.subr.mxu0 0.0
    %423 = vmatpush1.msra.mxu0 0.0
    %424 = vmatprep.subr.mxu0 0.0
    %425 = vmatpush1.msra.mxu0 0.0
    %426 = vmatprep.subr.mxu0 0.0
    %427 = vmatpush1.msra.mxu0 0.0
    %428 = vmatprep.subr.mxu0 0.0
    %429 = vmatpush1.msra.mxu0 0.0
    %430 = vmatprep.subr.mxu0 0.0
    %431 = vmatpush1.msra.mxu0 0.0
    %432 = vmatprep.subr.mxu0 0.0
    %433 = vmatpush1.msra.mxu0 0.0
    %434 = vmatprep.subr.mxu0 0.0
    %435 = vmatpush1.msra.mxu0 0.0
    %436 = vmatprep.mubr.f32.mxu0 0.0
    %437 = vmatmul.mubr.f32.gmra.mrb[0].mxu0 %v370
    %v438 = vpop.f32.mrb[0].mxu0
    %v439 = vadd.f32 %v366, %v438
    %v440 = vpop.f32.mrb[0].mxu0
    %441 = vdwg.mxu0
    %v442 = vxor.u32 %v439, 2147483648
    %v443 = vmul.f32 %v442, 1.442695
    %v444 = vpow.pop %v443
    %v445 = vadd.f32 %v444, 1.0
    %v446 = vrcp.pop %v445
    %v447 = vmul.f32 1.0, %v446
    %v448 = vtanh.pop %v439
    %450 = vrot.lane.b32.xlu0 %v244, 32
    %v451 = vpop.permute.xlu0 %450
    %v453 = vmul.f32 %v447, %v451
    %455 = vrot.lane.b32.xlu0 %v448, 32
    %v456 = vpop.permute.xlu0 %455
    %v458 = vmul.f32 %v447, %v456
    %460 = vrot.lane.b32.xlu0 %v458, 32
    %v461 = vpop.permute.xlu0 %460
    %v463 = vadd.f32 %v453, %v461
    %v464 = vtanh.pop %v463
    %466 = vrot.lane.b32.xlu0 %v464, 32
    %v467 = vpop.permute.xlu0 %466
    %v469 = vmul.f32 %v447, %v467
    %471 = vrot.lane.b32.xlu0 %v469, 64
    %v472 = vpop.permute.xlu0 %471
    %475 = vrot.lane.b32.xlu0 %v246, 32
    %v476 = vpop.permute.xlu0 %475
    %v478 = vsel %vm250, %v472, %v476
    %v480 = vlaneseq
    %v481 = vshrl.u32 %v480, 7
    %v482 = vsub.s32 0, %v481
    %v483 = vrot.slane %v237, %v482
    %v486 = vsel %vm368, %v478, 0
    %488 = vmatprep.subr.mxu0 0.0
    %489 = vmatpush1.msra.mxu0 %v229
    %490 = vmatprep.subr.mxu0 0.0
    %491 = vmatpush1.msra.mxu0 %v230
    %492 = vmatprep.subr.mxu0 0.0
    %493 = vmatpush1.msra.mxu0 %v231
    %494 = vmatprep.subr.mxu0 0.0
    %495 = vmatpush1.msra.mxu0 %v232
    %496 = vmatprep.subr.mxu0 0.0
    %497 = vmatpush1.msra.mxu0 %v233
    %498 = vmatprep.subr.mxu0 0.0
    %499 = vmatpush1.msra.mxu0 %v234
    %500 = vmatprep.subr.mxu0 0.0
    %501 = vmatpush1.msra.mxu0 %v235
    %502 = vmatprep.subr.mxu0 0.0
    %503 = vmatpush1.msra.mxu0 %v236
    %504 = vmatprep.subr.mxu0 0.0
    %505 = vmatpush1.msra.mxu0 0.0
    %506 = vmatprep.subr.mxu0 0.0
    %507 = vmatpush1.msra.mxu0 0.0
    %508 = vmatprep.subr.mxu0 0.0
    %509 = vmatpush1.msra.mxu0 0.0
    %510 = vmatprep.subr.mxu0 0.0
    %511 = vmatpush1.msra.mxu0 0.0
    %512 = vmatprep.subr.mxu0 0.0
    %513 = vmatpush1.msra.mxu0 0.0
    %514 = vmatprep.subr.mxu0 0.0
    %515 = vmatpush1.msra.mxu0 0.0
    %516 = vmatprep.subr.mxu0 0.0
    %517 = vmatpush1.msra.mxu0 0.0
    %518 = vmatprep.subr.mxu0 0.0
    %519 = vmatpush1.msra.mxu0 0.0
    %520 = vmatprep.subr.mxu0 0.0
    %521 = vmatpush1.msra.mxu0 0.0
    %522 = vmatprep.subr.mxu0 0.0
    %523 = vmatpush1.msra.mxu0 0.0
    %524 = vmatprep.subr.mxu0 0.0
    %525 = vmatpush1.msra.mxu0 0.0
    %526 = vmatprep.subr.mxu0 0.0
    %527 = vmatpush1.msra.mxu0 0.0
    %528 = vmatprep.subr.mxu0 0.0
    %529 = vmatpush1.msra.mxu0 0.0
    %530 = vmatprep.subr.mxu0 0.0
    %531 = vmatpush1.msra.mxu0 0.0
    %532 = vmatprep.subr.mxu0 0.0
    %533 = vmatpush1.msra.mxu0 0.0
    %534 = vmatprep.subr.mxu0 0.0
    %535 = vmatpush1.msra.mxu0 0.0
    %536 = vmatprep.subr.mxu0 0.0
    %537 = vmatpush1.msra.mxu0 0.0
    %538 = vmatprep.subr.mxu0 0.0
    %539 = vmatpush1.msra.mxu0 0.0
    %540 = vmatprep.subr.mxu0 0.0
    %541 = vmatpush1.msra.mxu0 0.0
    %542 = vmatprep.subr.mxu0 0.0
    %543 = vmatpush1.msra.mxu0 0.0
    %544 = vmatprep.subr.mxu0 0.0
    %545 = vmatpush1.msra.mxu0 0.0
    %546 = vmatprep.subr.mxu0 0.0
    %547 = vmatpush1.msra.mxu0 0.0
    %548 = vmatprep.subr.mxu0 0.0
    %549 = vmatpush1.msra.mxu0 0.0
    %550 = vmatprep.subr.mxu0 0.0
    %551 = vmatpush1.msra.mxu0 0.0
    %552 = vmatprep.mubr.f32.mxu0 0.0
    %553 = vmatmul.mubr.f32.gmra.mrb[0].mxu0 %v486
    %v554 = vpop.f32.mrb[0].mxu0
    %v555 = vadd.f32 %v483, %v554
    %v556 = vpop.f32.mrb[0].mxu0
    %557 = vdwg.mxu0
    %v558 = vxor.u32 %v555, 2147483648
    %v559 = vmul.f32 %v558, 1.442695
    %v560 = vpow.pop %v559
    %v561 = vadd.f32 %v560, 1.0
    %v562 = vrcp.pop %v561
    %v563 = vmul.f32 1.0, %v562
    %v564 = vtanh.pop %v555
    %566 = vrot.lane.b32.xlu0 %v248, 32
    %v567 = vpop.permute.xlu0 %566
    %v569 = vmul.f32 %v563, %v567
    %571 = vrot.lane.b32.xlu0 %v564, 32
    %v572 = vpop.permute.xlu0 %571
    %v574 = vmul.f32 %v563, %v572
    %576 = vrot.lane.b32.xlu0 %v574, 32
    %v577 = vpop.permute.xlu0 %576
    %v579 = vadd.f32 %v569, %v577
    %v580 = vtanh.pop %v579
    %582 = vrot.lane.b32.xlu0 %v580, 32
    %v583 = vpop.permute.xlu0 %582
    %v585 = vmul.f32 %v563, %v583
    %s586 = scalar_lea.vmem [#allocation2], 8
    %v587 = vld [vmem:[%s586] sm:$0xff]
    %v588 = vsel %vm250, %v355, 0
    %590 = vmatprep.subr.mxu0 0.0
    %591 = vmatpush1.msra.mxu0 %v216
    %592 = vmatprep.subr.mxu0 0.0
    %593 = vmatpush1.msra.mxu0 %v217
    %594 = vmatprep.subr.mxu0 0.0
    %595 = vmatpush1.msra.mxu0 %v218
    %596 = vmatprep.subr.mxu0 0.0
    %597 = vmatpush1.msra.mxu0 %v219
    %598 = vmatprep.subr.mxu0 0.0
    %599 = vmatpush1.msra.mxu0 0.0
    %600 = vmatprep.subr.mxu0 0.0
    %601 = vmatpush1.msra.mxu0 0.0
    %602 = vmatprep.subr.mxu0 0.0
    %603 = vmatpush1.msra.mxu0 0.0
    %604 = vmatprep.subr.mxu0 0.0
    %605 = vmatpush1.msra.mxu0 0.0
    %606 = vmatprep.subr.mxu0 0.0
    %607 = vmatpush1.msra.mxu0 0.0
    %608 = vmatprep.subr.mxu0 0.0
    %609 = vmatpush1.msra.mxu0 0.0
    %610 = vmatprep.subr.mxu0 0.0
    %611 = vmatpush1.msra.mxu0 0.0
    %612 = vmatprep.subr.mxu0 0.0
    %613 = vmatpush1.msra.mxu0 0.0
    %614 = vmatprep.subr.mxu0 0.0
    %615 = vmatpush1.msra.mxu0 0.0
    %616 = vmatprep.subr.mxu0 0.0
    %617 = vmatpush1.msra.mxu0 0.0
    %618 = vmatprep.subr.mxu0 0.0
    %619 = vmatpush1.msra.mxu0 0.0
    %620 = vmatprep.subr.mxu0 0.0
    %621 = vmatpush1.msra.mxu0 0.0
    %622 = vmatprep.subr.mxu0 0.0
    %623 = vmatpush1.msra.mxu0 0.0
    %624 = vmatprep.subr.mxu0 0.0
    %625 = vmatpush1.msra.mxu0 0.0
    %626 = vmatprep.subr.mxu0 0.0
    %627 = vmatpush1.msra.mxu0 0.0
    %628 = vmatprep.subr.mxu0 0.0
    %629 = vmatpush1.msra.mxu0 0.0
    %630 = vmatprep.subr.mxu0 0.0
    %631 = vmatpush1.msra.mxu0 0.0
    %632 = vmatprep.subr.mxu0 0.0
    %633 = vmatpush1.msra.mxu0 0.0
    %634 = vmatprep.subr.mxu0 0.0
    %635 = vmatpush1.msra.mxu0 0.0
    %636 = vmatprep.subr.mxu0 0.0
    %637 = vmatpush1.msra.mxu0 0.0
    %638 = vmatprep.subr.mxu0 0.0
    %639 = vmatpush1.msra.mxu0 0.0
    %640 = vmatprep.subr.mxu0 0.0
    %641 = vmatpush1.msra.mxu0 0.0
    %642 = vmatprep.subr.mxu0 0.0
    %643 = vmatpush1.msra.mxu0 0.0
    %644 = vmatprep.subr.mxu0 0.0
    %645 = vmatpush1.msra.mxu0 0.0
    %646 = vmatprep.subr.mxu0 0.0
    %647 = vmatpush1.msra.mxu0 0.0
    %648 = vmatprep.subr.mxu0 0.0
    %649 = vmatpush1.msra.mxu0 0.0
    %650 = vmatprep.subr.mxu0 0.0
    %651 = vmatpush1.msra.mxu0 0.0
    %652 = vmatprep.subr.mxu0 0.0
    %653 = vmatpush1.msra.mxu0 0.0
    %654 = vmatprep.mubr.f32.mxu0 0.0
    %655 = vmatmul.mubr.f32.gmra.mrb[0].mxu0 %v588
    %v656 = vpop.f32.mrb[0].mxu0
    %v657 = vadd.f32 0.0, %v656
    %v658 = vpop.f32.mrb[0].mxu0
    %659 = vdwg.mxu0
    %v660 = vadd.f32 %v587, %v657
    %v661 = vxor.u32 %v660, 2147483648
    %v662 = vmul.f32 %v661, 1.442695
    %v663 = vpow.pop %v662
    %v664 = vadd.f32 %v663, 1.0
    %v665 = vrcp.pop %v664
    %v666 = vmul.f32 1.0, %v665
    %v667 = vtanh.pop %v660
    %v668 = vmul.f32 %v666, %v346
    %670 = vrot.lane.b32.xlu0 %v667, 32
    %v671 = vpop.permute.xlu0 %670
    %v673 = vmul.f32 %v666, %v671
    %675 = vrot.lane.b32.xlu0 %v673, 32
    %v676 = vpop.permute.xlu0 %675
    %v678 = vadd.f32 %v668, %v676
    %v679 = vtanh.pop %v678
    %681 = vrot.lane.b32.xlu0 %v679, 32
    %v682 = vpop.permute.xlu0 %681
    %v684 = vmul.f32 %v666, %v682
    %686 = vrot.lane.b32.xlu0 %v684, 64
    %v687 = vpop.permute.xlu0 %686
    %689 = vrot.lane.b32.xlu0 %v469, 96
    %v690 = vpop.permute.xlu0 %689
    %v692 = vsel %vm250, %v687, %v690
    %v694 = vsel %vm368, %v692, 0
    %696 = vmatprep.subr.mxu0 0.0
    %697 = vmatpush1.msra.mxu0 %v220
    %698 = vmatprep.subr.mxu0 0.0
    %699 = vmatpush1.msra.mxu0 %v221
    %700 = vmatprep.subr.mxu0 0.0
    %701 = vmatpush1.msra.mxu0 %v222
    %702 = vmatprep.subr.mxu0 0.0
    %703 = vmatpush1.msra.mxu0 %v223
    %704 = vmatprep.subr.mxu0 0.0
    %705 = vmatpush1.msra.mxu0 %v224
    %706 = vmatprep.subr.mxu0 0.0
    %707 = vmatpush1.msra.mxu0 %v225
    %708 = vmatprep.subr.mxu0 0.0
    %709 = vmatpush1.msra.mxu0 %v226
    %710 = vmatprep.subr.mxu0 0.0
    %711 = vmatpush1.msra.mxu0 %v227
    %712 = vmatprep.subr.mxu0 0.0
    %713 = vmatpush1.msra.mxu0 0.0
    %714 = vmatprep.subr.mxu0 0.0
    %715 = vmatpush1.msra.mxu0 0.0
    %716 = vmatprep.subr.mxu0 0.0
    %717 = vmatpush1.msra.mxu0 0.0
    %718 = vmatprep.subr.mxu0 0.0
    %719 = vmatpush1.msra.mxu0 0.0
    %720 = vmatprep.subr.mxu0 0.0
    %721 = vmatpush1.msra.mxu0 0.0
    %722 = vmatprep.subr.mxu0 0.0
    %723 = vmatpush1.msra.mxu0 0.0
    %724 = vmatprep.subr.mxu0 0.0
    %725 = vmatpush1.msra.mxu0 0.0
    %726 = vmatprep.subr.mxu0 0.0
    %727 = vmatpush1.msra.mxu0 0.0
    %728 = vmatprep.subr.mxu0 0.0
    %729 = vmatpush1.msra.mxu0 0.0
    %730 = vmatprep.subr.mxu0 0.0
    %731 = vmatpush1.msra.mxu0 0.0
    %732 = vmatprep.subr.mxu0 0.0
    %733 = vmatpush1.msra.mxu0 0.0
    %734 = vmatprep.subr.mxu0 0.0
    %735 = vmatpush1.msra.mxu0 0.0
    %736 = vmatprep.subr.mxu0 0.0
    %737 = vmatpush1.msra.mxu0 0.0
    %738 = vmatprep.subr.mxu0 0.0
    %739 = vmatpush1.msra.mxu0 0.0
    %740 = vmatprep.subr.mxu0 0.0
    %741 = vmatpush1.msra.mxu0 0.0
    %742 = vmatprep.subr.mxu0 0.0
    %743 = vmatpush1.msra.mxu0 0.0
    %744 = vmatprep.subr.mxu0 0.0
    %745 = vmatpush1.msra.mxu0 0.0
    %746 = vmatprep.subr.mxu0 0.0
    %747 = vmatpush1.msra.mxu0 0.0
    %748 = vmatprep.subr.mxu0 0.0
    %749 = vmatpush1.msra.mxu0 0.0
    %750 = vmatprep.subr.mxu0 0.0
    %751 = vmatpush1.msra.mxu0 0.0
    %752 = vmatprep.subr.mxu0 0.0
    %753 = vmatpush1.msra.mxu0 0.0
    %754 = vmatprep.subr.mxu0 0.0
    %755 = vmatpush1.msra.mxu0 0.0
    %756 = vmatprep.subr.mxu0 0.0
    %757 = vmatpush1.msra.mxu0 0.0
    %758 = vmatprep.subr.mxu0 0.0
    %759 = vmatpush1.msra.mxu0 0.0
    %760 = vmatprep.mubr.f32.mxu0 0.0
    %761 = vmatmul.mubr.f32.gmra.mrb[0].mxu0 %v694
    %v762 = vpop.f32.mrb[0].mxu0
    %v763 = vadd.f32 %v366, %v762
    %v764 = vpop.f32.mrb[0].mxu0
    %765 = vdwg.mxu0
    %v766 = vxor.u32 %v763, 2147483648
    %v767 = vmul.f32 %v766, 1.442695
    %v768 = vpow.pop %v767
    %v769 = vadd.f32 %v768, 1.0
    %v770 = vrcp.pop %v769
    %v771 = vmul.f32 1.0, %v770
    %v772 = vtanh.pop %v763
    %v773 = vmul.f32 %v771, %v463
    %775 = vrot.lane.b32.xlu0 %v772, 32
    %v776 = vpop.permute.xlu0 %775
    %v778 = vmul.f32 %v771, %v776
    %780 = vrot.lane.b32.xlu0 %v778, 32
    %v781 = vpop.permute.xlu0 %780
    %v783 = vadd.f32 %v773, %v781
    %v784 = vtanh.pop %v783
    %786 = vrot.lane.b32.xlu0 %v784, 32
    %v787 = vpop.permute.xlu0 %786
    %v789 = vmul.f32 %v771, %v787
    %791 = vrot.lane.b32.xlu0 %v789, 64
    %v792 = vpop.permute.xlu0 %791
    %795 = vrot.lane.b32.xlu0 %v585, 96
    %v796 = vpop.permute.xlu0 %795
    %v798 = vsel %vm250, %v792, %v796
    %v800 = vsel %vm368, %v798, 0
    %802 = vmatprep.subr.mxu0 0.0
    %803 = vmatpush1.msra.mxu0 %v229
    %804 = vmatprep.subr.mxu0 0.0
    %805 = vmatpush1.msra.mxu0 %v230
    %806 = vmatprep.subr.mxu0 0.0
    %807 = vmatpush1.msra.mxu0 %v231
    %808 = vmatprep.subr.mxu0 0.0
    %809 = vmatpush1.msra.mxu0 %v232
    %810 = vmatprep.subr.mxu0 0.0
    %811 = vmatpush1.msra.mxu0 %v233
    %812 = vmatprep.subr.mxu0 0.0
    %813 = vmatpush1.msra.mxu0 %v234
    %814 = vmatprep.subr.mxu0 0.0
    %815 = vmatpush1.msra.mxu0 %v235
    %816 = vmatprep.subr.mxu0 0.0
    %817 = vmatpush1.msra.mxu0 %v236
    %818 = vmatprep.subr.mxu0 0.0
    %819 = vmatpush1.msra.mxu0 0.0
    %820 = vmatprep.subr.mxu0 0.0
    %821 = vmatpush1.msra.mxu0 0.0
    %822 = vmatprep.subr.mxu0 0.0
    %823 = vmatpush1.msra.mxu0 0.0
    %824 = vmatprep.subr.mxu0 0.0
    %825 = vmatpush1.msra.mxu0 0.0
    %826 = vmatprep.subr.mxu0 0.0
    %827 = vmatpush1.msra.mxu0 0.0
    %828 = vmatprep.subr.mxu0 0.0
    %829 = vmatpush1.msra.mxu0 0.0
    %830 = vmatprep.subr.mxu0 0.0
    %831 = vmatpush1.msra.mxu0 0.0
    %832 = vmatprep.subr.mxu0 0.0
    %833 = vmatpush1.msra.mxu0 0.0
    %834 = vmatprep.subr.mxu0 0.0
    %835 = vmatpush1.msra.mxu0 0.0
    %836 = vmatprep.subr.mxu0 0.0
    %837 = vmatpush1.msra.mxu0 0.0
    %838 = vmatprep.subr.mxu0 0.0
    %839 = vmatpush1.msra.mxu0 0.0
    %840 = vmatprep.subr.mxu0 0.0
    %841 = vmatpush1.msra.mxu0 0.0
    %842 = vmatprep.subr.mxu0 0.0
    %843 = vmatpush1.msra.mxu0 0.0
    %844 = vmatprep.subr.mxu0 0.0
    %845 = vmatpush1.msra.mxu0 0.0
    %846 = vmatprep.subr.mxu0 0.0
    %847 = vmatpush1.msra.mxu0 0.0
    %848 = vmatprep.subr.mxu0 0.0
    %849 = vmatpush1.msra.mxu0 0.0
    %850 = vmatprep.subr.mxu0 0.0
    %851 = vmatpush1.msra.mxu0 0.0
    %852 = vmatprep.subr.mxu0 0.0
    %853 = vmatpush1.msra.mxu0 0.0
    %854 = vmatprep.subr.mxu0 0.0
    %855 = vmatpush1.msra.mxu0 0.0
    %856 = vmatprep.subr.mxu0 0.0
    %857 = vmatpush1.msra.mxu0 0.0
    %858 = vmatprep.subr.mxu0 0.0
    %859 = vmatpush1.msra.mxu0 0.0
    %860 = vmatprep.subr.mxu0 0.0
    %861 = vmatpush1.msra.mxu0 0.0
    %862 = vmatprep.subr.mxu0 0.0
    %863 = vmatpush1.msra.mxu0 0.0
    %864 = vmatprep.subr.mxu0 0.0
    %865 = vmatpush1.msra.mxu0 0.0
    %866 = vmatprep.mubr.f32.mxu0 0.0
    %867 = vmatmul.mubr.f32.gmra.mrb[0].mxu0 %v800
    %v868 = vpop.f32.mrb[0].mxu0
    %v869 = vadd.f32 %v483, %v868
    %v870 = vpop.f32.mrb[0].mxu0
    %871 = vdwg.mxu0
    %v872 = vxor.u32 %v869, 2147483648
    %v873 = vmul.f32 %v872, 1.442695
    %v874 = vpow.pop %v873
    %v875 = vadd.f32 %v874, 1.0
    %v876 = vrcp.pop %v875
    %v877 = vmul.f32 1.0, %v876
    %v878 = vtanh.pop %v869
    %v879 = vmul.f32 %v877, %v579
    %881 = vrot.lane.b32.xlu0 %v878, 32
    %v882 = vpop.permute.xlu0 %881
    %v884 = vmul.f32 %v877, %v882
    %886 = vrot.lane.b32.xlu0 %v884, 32
    %v887 = vpop.permute.xlu0 %886
    %v889 = vadd.f32 %v879, %v887
    %v890 = vtanh.pop %v889
    %892 = vrot.lane.b32.xlu0 %v890, 32
    %v893 = vpop.permute.xlu0 %892
    %v895 = vmul.f32 %v877, %v893
    %s896 = scalar_lea.vmem [#allocation2], 16
    %v897 = vld [vmem:[%s896] sm:$0xff]
    %v898 = vsel %vm250, %v687, 0
    %900 = vmatprep.subr.mxu0 0.0
    %901 = vmatpush1.msra.mxu0 %v216
    %902 = vmatprep.subr.mxu0 0.0
    %903 = vmatpush1.msra.mxu0 %v217
    %904 = vmatprep.subr.mxu0 0.0
    %905 = vmatpush1.msra.mxu0 %v218
    %906 = vmatprep.subr.mxu0 0.0
    %907 = vmatpush1.msra.mxu0 %v219
    %908 = vmatprep.subr.mxu0 0.0
    %909 = vmatpush1.msra.mxu0 0.0
    %910 = vmatprep.subr.mxu0 0.0
    %911 = vmatpush1.msra.mxu0 0.0
    %912 = vmatprep.subr.mxu0 0.0
    %913 = vmatpush1.msra.mxu0 0.0
    %914 = vmatprep.subr.mxu0 0.0
    %915 = vmatpush1.msra.mxu0 0.0
    %916 = vmatprep.subr.mxu0 0.0
    %917 = vmatpush1.msra.mxu0 0.0
    %918 = vmatprep.subr.mxu0 0.0
    %919 = vmatpush1.msra.mxu0 0.0
    %920 = vmatprep.subr.mxu0 0.0
    %921 = vmatpush1.msra.mxu0 0.0
    %922 = vmatprep.subr.mxu0 0.0
    %923 = vmatpush1.msra.mxu0 0.0
    %924 = vmatprep.subr.mxu0 0.0
    %925 = vmatpush1.msra.mxu0 0.0
    %926 = vmatprep.subr.mxu0 0.0
    %927 = vmatpush1.msra.mxu0 0.0
    %928 = vmatprep.subr.mxu0 0.0
    %929 = vmatpush1.msra.mxu0 0.0
    %930 = vmatprep.subr.mxu0 0.0
    %931 = vmatpush1.msra.mxu0 0.0
    %932 = vmatprep.subr.mxu0 0.0
    %933 = vmatpush1.msra.mxu0 0.0
    %934 = vmatprep.subr.mxu0 0.0
    %935 = vmatpush1.msra.mxu0 0.0
    %936 = vmatprep.subr.mxu0 0.0
    %937 = vmatpush1.msra.mxu0 0.0
    %938 = vmatprep.subr.mxu0 0.0
    %939 = vmatpush1.msra.mxu0 0.0
    %940 = vmatprep.subr.mxu0 0.0
    %941 = vmatpush1.msra.mxu0 0.0
    %942 = vmatprep.subr.mxu0 0.0
    %943 = vmatpush1.msra.mxu0 0.0
    %944 = vmatprep.subr.mxu0 0.0
    %945 = vmatpush1.msra.mxu0 0.0
    %946 = vmatprep.subr.mxu0 0.0
    %947 = vmatpush1.msra.mxu0 0.0
    %948 = vmatprep.subr.mxu0 0.0
    %949 = vmatpush1.msra.mxu0 0.0
    %950 = vmatprep.subr.mxu0 0.0
    %951 = vmatpush1.msra.mxu0 0.0
    %952 = vmatprep.subr.mxu0 0.0
    %953 = vmatpush1.msra.mxu0 0.0
    %954 = vmatprep.subr.mxu0 0.0
    %955 = vmatpush1.msra.mxu0 0.0
    %956 = vmatprep.subr.mxu0 0.0
    %957 = vmatpush1.msra.mxu0 0.0
    %958 = vmatprep.subr.mxu0 0.0
    %959 = vmatpush1.msra.mxu0 0.0
    %960 = vmatprep.subr.mxu0 0.0
    %961 = vmatpush1.msra.mxu0 0.0
    %962 = vmatprep.subr.mxu0 0.0
    %963 = vmatpush1.msra.mxu0 0.0
    %964 = vmatprep.mubr.f32.mxu0 0.0
    %965 = vmatmul.mubr.f32.gmra.mrb[0].mxu0 %v898
    %v966 = vpop.f32.mrb[0].mxu0
    %v967 = vadd.f32 0.0, %v966
    %v968 = vpop.f32.mrb[0].mxu0
    %969 = vdwg.mxu0
    %v970 = vadd.f32 %v897, %v967
    %v971 = vxor.u32 %v970, 2147483648
    %v972 = vmul.f32 %v971, 1.442695
    %v973 = vpow.pop %v972
    %v974 = vadd.f32 %v973, 1.0
    %v975 = vrcp.pop %v974
    %v976 = vmul.f32 1.0, %v975
    %v977 = vtanh.pop %v970
    %v978 = vmul.f32 %v976, %v678
    %980 = vrot.lane.b32.xlu0 %v977, 32
    %v981 = vpop.permute.xlu0 %980
    %v983 = vmul.f32 %v976, %v981
    %985 = vrot.lane.b32.xlu0 %v983, 32
    %v986 = vpop.permute.xlu0 %985
    %v988 = vadd.f32 %v978, %v986
    %v989 = vtanh.pop %v988
    %991 = vrot.lane.b32.xlu0 %v989, 32
    %v992 = vpop.permute.xlu0 %991
    %v994 = vmul.f32 %v976, %v992
    %996 = vrot.lane.b32.xlu0 %v994, 64
    %v997 = vpop.permute.xlu0 %996
    %999 = vrot.lane.b32.xlu0 %v789, 96
    %v1000 = vpop.permute.xlu0 %999
    %v1002 = vsel %vm250, %v997, %v1000
    %v1004 = vsel %vm368, %v1002, 0
    %1006 = vmatprep.subr.mxu0 0.0
    %1007 = vmatpush1.msra.mxu0 %v220
    %1008 = vmatprep.subr.mxu0 0.0
    %1009 = vmatpush1.msra.mxu0 %v221
    %1010 = vmatprep.subr.mxu0 0.0
    %1011 = vmatpush1.msra.mxu0 %v222
    %1012 = vmatprep.subr.mxu0 0.0
    %1013 = vmatpush1.msra.mxu0 %v223
    %1014 = vmatprep.subr.mxu0 0.0
    %1015 = vmatpush1.msra.mxu0 %v224
    %1016 = vmatprep.subr.mxu0 0.0
    %1017 = vmatpush1.msra.mxu0 %v225
    %1018 = vmatprep.subr.mxu0 0.0
    %1019 = vmatpush1.msra.mxu0 %v226
    %1020 = vmatprep.subr.mxu0 0.0
    %1021 = vmatpush1.msra.mxu0 %v227
    %1022 = vmatprep.subr.mxu0 0.0
    %1023 = vmatpush1.msra.mxu0 0.0
    %1024 = vmatprep.subr.mxu0 0.0
    %1025 = vmatpush1.msra.mxu0 0.0
    %1026 = vmatprep.subr.mxu0 0.0
    %1027 = vmatpush1.msra.mxu0 0.0
    %1028 = vmatprep.subr.mxu0 0.0
    %1029 = vmatpush1.msra.mxu0 0.0
    %1030 = vmatprep.subr.mxu0 0.0
    %1031 = vmatpush1.msra.mxu0 0.0
    %1032 = vmatprep.subr.mxu0 0.0
    %1033 = vmatpush1.msra.mxu0 0.0
    %1034 = vmatprep.subr.mxu0 0.0
    %1035 = vmatpush1.msra.mxu0 0.0
    %1036 = vmatprep.subr.mxu0 0.0
    %1037 = vmatpush1.msra.mxu0 0.0
    %1038 = vmatprep.subr.mxu0 0.0
    %1039 = vmatpush1.msra.mxu0 0.0
    %1040 = vmatprep.subr.mxu0 0.0
    %1041 = vmatpush1.msra.mxu0 0.0
    %1042 = vmatprep.subr.mxu0 0.0
    %1043 = vmatpush1.msra.mxu0 0.0
    %1044 = vmatprep.subr.mxu0 0.0
    %1045 = vmatpush1.msra.mxu0 0.0
    %1046 = vmatprep.subr.mxu0 0.0
    %1047 = vmatpush1.msra.mxu0 0.0
    %1048 = vmatprep.subr.mxu0 0.0
    %1049 = vmatpush1.msra.mxu0 0.0
    %1050 = vmatprep.subr.mxu0 0.0
    %1051 = vmatpush1.msra.mxu0 0.0
    %1052 = vmatprep.subr.mxu0 0.0
    %1053 = vmatpush1.msra.mxu0 0.0
    %1054 = vmatprep.subr.mxu0 0.0
    %1055 = vmatpush1.msra.mxu0 0.0
    %1056 = vmatprep.subr.mxu0 0.0
    %1057 = vmatpush1.msra.mxu0 0.0
    %1058 = vmatprep.subr.mxu0 0.0
    %1059 = vmatpush1.msra.mxu0 0.0
    %1060 = vmatprep.subr.mxu0 0.0
    %1061 = vmatpush1.msra.mxu0 0.0
    %1062 = vmatprep.subr.mxu0 0.0
    %1063 = vmatpush1.msra.mxu0 0.0
    %1064 = vmatprep.subr.mxu0 0.0
    %1065 = vmatpush1.msra.mxu0 0.0
    %1066 = vmatprep.subr.mxu0 0.0
    %1067 = vmatpush1.msra.mxu0 0.0
    %1068 = vmatprep.subr.mxu0 0.0
    %1069 = vmatpush1.msra.mxu0 0.0
    %1070 = vmatprep.mubr.f32.mxu0 0.0
    %1071 = vmatmul.mubr.f32.gmra.mrb[0].mxu0 %v1004
    %v1072 = vpop.f32.mrb[0].mxu0
    %v1073 = vadd.f32 %v366, %v1072
    %v1074 = vpop.f32.mrb[0].mxu0
    %1075 = vdwg.mxu0
    %v1076 = vxor.u32 %v1073, 2147483648
    %v1077 = vmul.f32 %v1076, 1.442695
    %v1078 = vpow.pop %v1077
    %v1079 = vadd.f32 %v1078, 1.0
    %v1080 = vrcp.pop %v1079
    %v1081 = vmul.f32 1.0, %v1080
    %v1082 = vtanh.pop %v1073
    %v1083 = vmul.f32 %v1081, %v783
    %1085 = vrot.lane.b32.xlu0 %v1082, 32
    %v1086 = vpop.permute.xlu0 %1085
    %v1088 = vmul.f32 %v1081, %v1086
    %1090 = vrot.lane.b32.xlu0 %v1088, 32
    %v1091 = vpop.permute.xlu0 %1090
    %v1093 = vadd.f32 %v1083, %v1091
    %v1094 = vtanh.pop %v1093
    %1096 = vrot.lane.b32.xlu0 %v1094, 32
    %v1097 = vpop.permute.xlu0 %1096
    %v1099 = vmul.f32 %v1081, %v1097
    %1101 = vrot.lane.b32.xlu0 %v1099, 64
    %v1102 = vpop.permute.xlu0 %1101
    %1105 = vrot.lane.b32.xlu0 %v895, 96
    %v1106 = vpop.permute.xlu0 %1105
    %v1108 = vsel %vm250, %v1102, %v1106
    %v1110 = vsel %vm368, %v1108, 0
    %1112 = vmatprep.subr.mxu0 0.0
    %1113 = vmatpush1.msra.mxu0 %v229
    %1114 = vmatprep.subr.mxu0 0.0
    %1115 = vmatpush1.msra.mxu0 %v230
    %1116 = vmatprep.subr.mxu0 0.0
    %1117 = vmatpush1.msra.mxu0 %v231
    %1118 = vmatprep.subr.mxu0 0.0
    %1119 = vmatpush1.msra.mxu0 %v232
    %1120 = vmatprep.subr.mxu0 0.0
    %1121 = vmatpush1.msra.mxu0 %v233
    %1122 = vmatprep.subr.mxu0 0.0
    %1123 = vmatpush1.msra.mxu0 %v234
    %1124 = vmatprep.subr.mxu0 0.0
    %1125 = vmatpush1.msra.mxu0 %v235
    %1126 = vmatprep.subr.mxu0 0.0
    %1127 = vmatpush1.msra.mxu0 %v236
    %1128 = vmatprep.subr.mxu0 0.0
    %1129 = vmatpush1.msra.mxu0 0.0
    %1130 = vmatprep.subr.mxu0 0.0
    %1131 = vmatpush1.msra.mxu0 0.0
    %1132 = vmatprep.subr.mxu0 0.0
    %1133 = vmatpush1.msra.mxu0 0.0
    %1134 = vmatprep.subr.mxu0 0.0
    %1135 = vmatpush1.msra.mxu0 0.0
    %1136 = vmatprep.subr.mxu0 0.0
    %1137 = vmatpush1.msra.mxu0 0.0
    %1138 = vmatprep.subr.mxu0 0.0
    %1139 = vmatpush1.msra.mxu0 0.0
    %1140 = vmatprep.subr.mxu0 0.0
    %1141 = vmatpush1.msra.mxu0 0.0
    %1142 = vmatprep.subr.mxu0 0.0
    %1143 = vmatpush1.msra.mxu0 0.0
    %1144 = vmatprep.subr.mxu0 0.0
    %1145 = vmatpush1.msra.mxu0 0.0
    %1146 = vmatprep.subr.mxu0 0.0
    %1147 = vmatpush1.msra.mxu0 0.0
    %1148 = vmatprep.subr.mxu0 0.0
    %1149 = vmatpush1.msra.mxu0 0.0
    %1150 = vmatprep.subr.mxu0 0.0
    %1151 = vmatpush1.msra.mxu0 0.0
    %1152 = vmatprep.subr.mxu0 0.0
    %1153 = vmatpush1.msra.mxu0 0.0
    %1154 = vmatprep.subr.mxu0 0.0
    %1155 = vmatpush1.msra.mxu0 0.0
    %1156 = vmatprep.subr.mxu0 0.0
    %1157 = vmatpush1.msra.mxu0 0.0
    %1158 = vmatprep.subr.mxu0 0.0
    %1159 = vmatpush1.msra.mxu0 0.0
    %1160 = vmatprep.subr.mxu0 0.0
    %1161 = vmatpush1.msra.mxu0 0.0
    %1162 = vmatprep.subr.mxu0 0.0
    %1163 = vmatpush1.msra.mxu0 0.0
    %1164 = vmatprep.subr.mxu0 0.0
    %1165 = vmatpush1.msra.mxu0 0.0
    %1166 = vmatprep.subr.mxu0 0.0
    %1167 = vmatpush1.msra.mxu0 0.0
    %1168 = vmatprep.subr.mxu0 0.0
    %1169 = vmatpush1.msra.mxu0 0.0
    %1170 = vmatprep.subr.mxu0 0.0
    %1171 = vmatpush1.msra.mxu0 0.0
    %1172 = vmatprep.subr.mxu0 0.0
    %1173 = vmatpush1.msra.mxu0 0.0
    %1174 = vmatprep.subr.mxu0 0.0
    %1175 = vmatpush1.msra.mxu0 0.0
    %1176 = vmatprep.mubr.f32.mxu0 0.0
    %1177 = vmatmul.mubr.f32.gmra.mrb[0].mxu0 %v1110
    %v1178 = vpop.f32.mrb[0].mxu0
    %v1179 = vadd.f32 %v483, %v1178
    %v1180 = vpop.f32.mrb[0].mxu0
    %1181 = vdwg.mxu0
    %v1182 = vxor.u32 %v1179, 2147483648
    %v1183 = vmul.f32 %v1182, 1.442695
    %v1184 = vpow.pop %v1183
    %v1185 = vadd.f32 %v1184, 1.0
    %v1186 = vrcp.pop %v1185
    %v1187 = vmul.f32 1.0, %v1186
    %v1188 = vtanh.pop %v1179
    %v1189 = vmul.f32 %v1187, %v889
    %1191 = vrot.lane.b32.xlu0 %v1188, 32
    %v1192 = vpop.permute.xlu0 %1191
    %v1194 = vmul.f32 %v1187, %v1192
    %1196 = vrot.lane.b32.xlu0 %v1194, 32
    %v1197 = vpop.permute.xlu0 %1196
    %v1199 = vadd.f32 %v1189, %v1197
    %v1200 = vtanh.pop %v1199
    %1202 = vrot.lane.b32.xlu0 %v1200, 32
    %v1203 = vpop.permute.xlu0 %1202
    %v1205 = vmul.f32 %v1187, %v1203
    %s1206 = scalar_lea.vmem [#allocation2], 24
    %v1207 = vld [vmem:[%s1206] sm:$0xff]
    %v1208 = vsel %vm250, %v997, 0
    %1210 = vmatprep.subr.mxu0 0.0
    %1211 = vmatpush1.msra.mxu0 %v216
    %1212 = vmatprep.subr.mxu0 0.0
    %1213 = vmatpush1.msra.mxu0 %v217
    %1214 = vmatprep.subr.mxu0 0.0
    %1215 = vmatpush1.msra.mxu0 %v218
    %1216 = vmatprep.subr.mxu0 0.0
    %1217 = vmatpush1.msra.mxu0 %v219
    %1218 = vmatprep.subr.mxu0 0.0
    %1219 = vmatpush1.msra.mxu0 0.0
    %1220 = vmatprep.subr.mxu0 0.0
    %1221 = vmatpush1.msra.mxu0 0.0
    %1222 = vmatprep.subr.mxu0 0.0
    %1223 = vmatpush1.msra.mxu0 0.0
    %1224 = vmatprep.subr.mxu0 0.0
    %1225 = vmatpush1.msra.mxu0 0.0
    %1226 = vmatprep.subr.mxu0 0.0
    %1227 = vmatpush1.msra.mxu0 0.0
    %1228 = vmatprep.subr.mxu0 0.0
    %1229 = vmatpush1.msra.mxu0 0.0
    %1230 = vmatprep.subr.mxu0 0.0
    %1231 = vmatpush1.msra.mxu0 0.0
    %1232 = vmatprep.subr.mxu0 0.0
    %1233 = vmatpush1.msra.mxu0 0.0
    %1234 = vmatprep.subr.mxu0 0.0
    %1235 = vmatpush1.msra.mxu0 0.0
    %1236 = vmatprep.subr.mxu0 0.0
    %1237 = vmatpush1.msra.mxu0 0.0
    %1238 = vmatprep.subr.mxu0 0.0
    %1239 = vmatpush1.msra.mxu0 0.0
    %1240 = vmatprep.subr.mxu0 0.0
    %1241 = vmatpush1.msra.mxu0 0.0
    %1242 = vmatprep.subr.mxu0 0.0
    %1243 = vmatpush1.msra.mxu0 0.0
    %1244 = vmatprep.subr.mxu0 0.0
    %1245 = vmatpush1.msra.mxu0 0.0
    %1246 = vmatprep.subr.mxu0 0.0
    %1247 = vmatpush1.msra.mxu0 0.0
    %1248 = vmatprep.subr.mxu0 0.0
    %1249 = vmatpush1.msra.mxu0 0.0
    %1250 = vmatprep.subr.mxu0 0.0
    %1251 = vmatpush1.msra.mxu0 0.0
    %1252 = vmatprep.subr.mxu0 0.0
    %1253 = vmatpush1.msra.mxu0 0.0
    %1254 = vmatprep.subr.mxu0 0.0
    %1255 = vmatpush1.msra.mxu0 0.0
    %1256 = vmatprep.subr.mxu0 0.0
    %1257 = vmatpush1.msra.mxu0 0.0
    %1258 = vmatprep.subr.mxu0 0.0
    %1259 = vmatpush1.msra.mxu0 0.0
    %1260 = vmatprep.subr.mxu0 0.0
    %1261 = vmatpush1.msra.mxu0 0.0
    %1262 = vmatprep.subr.mxu0 0.0
    %1263 = vmatpush1.msra.mxu0 0.0
    %1264 = vmatprep.subr.mxu0 0.0
    %1265 = vmatpush1.msra.mxu0 0.0
    %1266 = vmatprep.subr.mxu0 0.0
    %1267 = vmatpush1.msra.mxu0 0.0
    %1268 = vmatprep.subr.mxu0 0.0
    %1269 = vmatpush1.msra.mxu0 0.0
    %1270 = vmatprep.subr.mxu0 0.0
    %1271 = vmatpush1.msra.mxu0 0.0
    %1272 = vmatprep.subr.mxu0 0.0
    %1273 = vmatpush1.msra.mxu0 0.0
    %1274 = vmatprep.mubr.f32.mxu0 0.0
    %1275 = vmatmul.mubr.f32.gmra.mrb[0].mxu0 %v1208
    %v1276 = vpop.f32.mrb[0].mxu0
    %v1277 = vadd.f32 0.0, %v1276
    %v1278 = vpop.f32.mrb[0].mxu0
    %1279 = vdwg.mxu0
    %v1280 = vadd.f32 %v1207, %v1277
    %v1281 = vxor.u32 %v1280, 2147483648
    %v1282 = vmul.f32 %v1281, 1.442695
    %v1283 = vpow.pop %v1282
    %v1284 = vadd.f32 %v1283, 1.0
    %v1285 = vrcp.pop %v1284
    %v1286 = vmul.f32 1.0, %v1285
    %v1287 = vtanh.pop %v1280
    %v1288 = vmul.f32 %v1286, %v988
    %1290 = vrot.lane.b32.xlu0 %v1287, 32
    %v1291 = vpop.permute.xlu0 %1290
    %v1293 = vmul.f32 %v1286, %v1291
    %1295 = vrot.lane.b32.xlu0 %v1293, 32
    %v1296 = vpop.permute.xlu0 %1295
    %v1298 = vadd.f32 %v1288, %v1296
    %v1299 = vtanh.pop %v1298
    %1301 = vrot.lane.b32.xlu0 %v1299, 32
    %v1302 = vpop.permute.xlu0 %1301
    %v1304 = vmul.f32 %v1286, %v1302
    %1306 = vrot.lane.b32.xlu0 %v1304, 64
    %v1307 = vpop.permute.xlu0 %1306
    %1309 = vrot.lane.b32.xlu0 %v1099, 96
    %v1310 = vpop.permute.xlu0 %1309
    %v1312 = vsel %vm250, %v1307, %v1310
    %v1314 = vsel %vm368, %v1312, 0
    %1316 = vmatprep.subr.mxu0 0.0
    %1317 = vmatpush1.msra.mxu0 %v220
    %1318 = vmatprep.subr.mxu0 0.0
    %1319 = vmatpush1.msra.mxu0 %v221
    %1320 = vmatprep.subr.mxu0 0.0
    %1321 = vmatpush1.msra.mxu0 %v222
    %1322 = vmatprep.subr.mxu0 0.0
    %1323 = vmatpush1.msra.mxu0 %v223
    %1324 = vmatprep.subr.mxu0 0.0
    %1325 = vmatpush1.msra.mxu0 %v224
    %1326 = vmatprep.subr.mxu0 0.0
    %1327 = vmatpush1.msra.mxu0 %v225
    %1328 = vmatprep.subr.mxu0 0.0
    %1329 = vmatpush1.msra.mxu0 %v226
    %1330 = vmatprep.subr.mxu0 0.0
    %1331 = vmatpush1.msra.mxu0 %v227
    %1332 = vmatprep.subr.mxu0 0.0
    %1333 = vmatpush1.msra.mxu0 0.0
    %1334 = vmatprep.subr.mxu0 0.0
    %1335 = vmatpush1.msra.mxu0 0.0
    %1336 = vmatprep.subr.mxu0 0.0
    %1337 = vmatpush1.msra.mxu0 0.0
    %1338 = vmatprep.subr.mxu0 0.0
    %1339 = vmatpush1.msra.mxu0 0.0
    %1340 = vmatprep.subr.mxu0 0.0
    %1341 = vmatpush1.msra.mxu0 0.0
    %1342 = vmatprep.subr.mxu0 0.0
    %1343 = vmatpush1.msra.mxu0 0.0
    %1344 = vmatprep.subr.mxu0 0.0
    %1345 = vmatpush1.msra.mxu0 0.0
    %1346 = vmatprep.subr.mxu0 0.0
    %1347 = vmatpush1.msra.mxu0 0.0
    %1348 = vmatprep.subr.mxu0 0.0
    %1349 = vmatpush1.msra.mxu0 0.0
    %1350 = vmatprep.subr.mxu0 0.0
    %1351 = vmatpush1.msra.mxu0 0.0
    %1352 = vmatprep.subr.mxu0 0.0
    %1353 = vmatpush1.msra.mxu0 0.0
    %1354 = vmatprep.subr.mxu0 0.0
    %1355 = vmatpush1.msra.mxu0 0.0
    %1356 = vmatprep.subr.mxu0 0.0
    %1357 = vmatpush1.msra.mxu0 0.0
    %1358 = vmatprep.subr.mxu0 0.0
    %1359 = vmatpush1.msra.mxu0 0.0
    %1360 = vmatprep.subr.mxu0 0.0
    %1361 = vmatpush1.msra.mxu0 0.0
    %1362 = vmatprep.subr.mxu0 0.0
    %1363 = vmatpush1.msra.mxu0 0.0
    %1364 = vmatprep.subr.mxu0 0.0
    %1365 = vmatpush1.msra.mxu0 0.0
    %1366 = vmatprep.subr.mxu0 0.0
    %1367 = vmatpush1.msra.mxu0 0.0
    %1368 = vmatprep.subr.mxu0 0.0
    %1369 = vmatpush1.msra.mxu0 0.0
    %1370 = vmatprep.subr.mxu0 0.0
    %1371 = vmatpush1.msra.mxu0 0.0
    %1372 = vmatprep.subr.mxu0 0.0
    %1373 = vmatpush1.msra.mxu0 0.0
    %1374 = vmatprep.subr.mxu0 0.0
    %1375 = vmatpush1.msra.mxu0 0.0
    %1376 = vmatprep.subr.mxu0 0.0
    %1377 = vmatpush1.msra.mxu0 0.0
    %1378 = vmatprep.subr.mxu0 0.0
    %1379 = vmatpush1.msra.mxu0 0.0
    %1380 = vmatprep.mubr.f32.mxu0 0.0
    %1381 = vmatmul.mubr.f32.gmra.mrb[0].mxu0 %v1314
    %v1382 = vpop.f32.mrb[0].mxu0
    %v1383 = vadd.f32 %v366, %v1382
    %v1384 = vpop.f32.mrb[0].mxu0
    %1385 = vdwg.mxu0
    %v1386 = vxor.u32 %v1383, 2147483648
    %v1387 = vmul.f32 %v1386, 1.442695
    %v1388 = vpow.pop %v1387
    %v1389 = vadd.f32 %v1388, 1.0
    %v1390 = vrcp.pop %v1389
    %v1391 = vmul.f32 1.0, %v1390
    %v1392 = vtanh.pop %v1383
    %v1393 = vmul.f32 %v1391, %v1093
    %1395 = vrot.lane.b32.xlu0 %v1392, 32
    %v1396 = vpop.permute.xlu0 %1395
    %v1398 = vmul.f32 %v1391, %v1396
    %1400 = vrot.lane.b32.xlu0 %v1398, 32
    %v1401 = vpop.permute.xlu0 %1400
    %v1403 = vadd.f32 %v1393, %v1401
    %v1404 = vtanh.pop %v1403
    %1406 = vrot.lane.b32.xlu0 %v1404, 32
    %v1407 = vpop.permute.xlu0 %1406
    %v1409 = vmul.f32 %v1391, %v1407
    %1411 = vrot.lane.b32.xlu0 %v1409, 64
    %v1412 = vpop.permute.xlu0 %1411
    %1415 = vrot.lane.b32.xlu0 %v1205, 96
    %v1416 = vpop.permute.xlu0 %1415
    %v1418 = vsel %vm250, %v1412, %v1416
    %v1420 = vsel %vm368, %v1418, 0
    %1422 = vmatprep.subr.mxu0 0.0
    %1423 = vmatpush1.msra.mxu0 %v229
    %1424 = vmatprep.subr.mxu0 0.0
    %1425 = vmatpush1.msra.mxu0 %v230
    %1426 = vmatprep.subr.mxu0 0.0
    %1427 = vmatpush1.msra.mxu0 %v231
    %1428 = vmatprep.subr.mxu0 0.0
    %1429 = vmatpush1.msra.mxu0 %v232
    %1430 = vmatprep.subr.mxu0 0.0
    %1431 = vmatpush1.msra.mxu0 %v233
    %1432 = vmatprep.subr.mxu0 0.0
    %1433 = vmatpush1.msra.mxu0 %v234
    %1434 = vmatprep.subr.mxu0 0.0
    %1435 = vmatpush1.msra.mxu0 %v235
    %1436 = vmatprep.subr.mxu0 0.0
    %1437 = vmatpush1.msra.mxu0 %v236
    %1438 = vmatprep.subr.mxu0 0.0
    %1439 = vmatpush1.msra.mxu0 0.0
    %1440 = vmatprep.subr.mxu0 0.0
    %1441 = vmatpush1.msra.mxu0 0.0
    %1442 = vmatprep.subr.mxu0 0.0
    %1443 = vmatpush1.msra.mxu0 0.0
    %1444 = vmatprep.subr.mxu0 0.0
    %1445 = vmatpush1.msra.mxu0 0.0
    %1446 = vmatprep.subr.mxu0 0.0
    %1447 = vmatpush1.msra.mxu0 0.0
    %1448 = vmatprep.subr.mxu0 0.0
    %1449 = vmatpush1.msra.mxu0 0.0
    %1450 = vmatprep.subr.mxu0 0.0
    %1451 = vmatpush1.msra.mxu0 0.0
    %1452 = vmatprep.subr.mxu0 0.0
    %1453 = vmatpush1.msra.mxu0 0.0
    %1454 = vmatprep.subr.mxu0 0.0
    %1455 = vmatpush1.msra.mxu0 0.0
    %1456 = vmatprep.subr.mxu0 0.0
    %1457 = vmatpush1.msra.mxu0 0.0
    %1458 = vmatprep.subr.mxu0 0.0
    %1459 = vmatpush1.msra.mxu0 0.0
    %1460 = vmatprep.subr.mxu0 0.0
    %1461 = vmatpush1.msra.mxu0 0.0
    %1462 = vmatprep.subr.mxu0 0.0
    %1463 = vmatpush1.msra.mxu0 0.0
    %1464 = vmatprep.subr.mxu0 0.0
    %1465 = vmatpush1.msra.mxu0 0.0
    %1466 = vmatprep.subr.mxu0 0.0
    %1467 = vmatpush1.msra.mxu0 0.0
    %1468 = vmatprep.subr.mxu0 0.0
    %1469 = vmatpush1.msra.mxu0 0.0
    %1470 = vmatprep.subr.mxu0 0.0
    %1471 = vmatpush1.msra.mxu0 0.0
    %1472 = vmatprep.subr.mxu0 0.0
    %1473 = vmatpush1.msra.mxu0 0.0
    %1474 = vmatprep.subr.mxu0 0.0
    %1475 = vmatpush1.msra.mxu0 0.0
    %1476 = vmatprep.subr.mxu0 0.0
    %1477 = vmatpush1.msra.mxu0 0.0
    %1478 = vmatprep.subr.mxu0 0.0
    %1479 = vmatpush1.msra.mxu0 0.0
    %1480 = vmatprep.subr.mxu0 0.0
    %1481 = vmatpush1.msra.mxu0 0.0
    %1482 = vmatprep.subr.mxu0 0.0
    %1483 = vmatpush1.msra.mxu0 0.0
    %1484 = vmatprep.subr.mxu0 0.0
    %1485 = vmatpush1.msra.mxu0 0.0
    %1486 = vmatprep.mubr.f32.mxu0 0.0
    %1487 = vmatmul.mubr.f32.gmra.mrb[0].mxu0 %v1420
    %v1488 = vpop.f32.mrb[0].mxu0
    %v1489 = vadd.f32 %v483, %v1488
    %v1490 = vpop.f32.mrb[0].mxu0
    %1491 = vdwg.mxu0
    %v1492 = vxor.u32 %v1489, 2147483648
    %v1493 = vmul.f32 %v1492, 1.442695
    %v1494 = vpow.pop %v1493
    %v1495 = vadd.f32 %v1494, 1.0
    %v1496 = vrcp.pop %v1495
    %v1497 = vmul.f32 1.0, %v1496
    %v1498 = vtanh.pop %v1489
    %v1499 = vmul.f32 %v1497, %v1199
    %1501 = vrot.lane.b32.xlu0 %v1498, 32
    %v1502 = vpop.permute.xlu0 %1501
    %v1504 = vmul.f32 %v1497, %v1502
    %1506 = vrot.lane.b32.xlu0 %v1504, 32
    %v1507 = vpop.permute.xlu0 %1506
    %v1509 = vadd.f32 %v1499, %v1507
    %v1510 = vtanh.pop %v1509
    %1512 = vrot.lane.b32.xlu0 %v1510, 32
    %v1513 = vpop.permute.xlu0 %1512
    %v1515 = vmul.f32 %v1497, %v1513
    %s1516 = scalar_lea.vmem [#allocation2], 32
    %v1517 = vld [vmem:[%s1516] sm:$0xff]
    %v1518 = vsel %vm250, %v1307, 0
    %1520 = vmatprep.subr.mxu0 0.0
    %1521 = vmatpush1.msra.mxu0 %v216
    %1522 = vmatprep.subr.mxu0 0.0
    %1523 = vmatpush1.msra.mxu0 %v217
    %1524 = vmatprep.subr.mxu0 0.0
    %1525 = vmatpush1.msra.mxu0 %v218
    %1526 = vmatprep.subr.mxu0 0.0
    %1527 = vmatpush1.msra.mxu0 %v219
    %1528 = vmatprep.subr.mxu0 0.0
    %1529 = vmatpush1.msra.mxu0 0.0
    %1530 = vmatprep.subr.mxu0 0.0
    %1531 = vmatpush1.msra.mxu0 0.0
    %1532 = vmatprep.subr.mxu0 0.0
    %1533 = vmatpush1.msra.mxu0 0.0
    %1534 = vmatprep.subr.mxu0 0.0
    %1535 = vmatpush1.msra.mxu0 0.0
    %1536 = vmatprep.subr.mxu0 0.0
    %1537 = vmatpush1.msra.mxu0 0.0
    %1538 = vmatprep.subr.mxu0 0.0
    %1539 = vmatpush1.msra.mxu0 0.0
    %1540 = vmatprep.subr.mxu0 0.0
    %1541 = vmatpush1.msra.mxu0 0.0
    %1542 = vmatprep.subr.mxu0 0.0
    %1543 = vmatpush1.msra.mxu0 0.0
    %1544 = vmatprep.subr.mxu0 0.0
    %1545 = vmatpush1.msra.mxu0 0.0
    %1546 = vmatprep.subr.mxu0 0.0
    %1547 = vmatpush1.msra.mxu0 0.0
    %1548 = vmatprep.subr.mxu0 0.0
    %1549 = vmatpush1.msra.mxu0 0.0
    %1550 = vmatprep.subr.mxu0 0.0
    %1551 = vmatpush1.msra.mxu0 0.0
    %1552 = vmatprep.subr.mxu0 0.0
    %1553 = vmatpush1.msra.mxu0 0.0
    %1554 = vmatprep.subr.mxu0 0.0
    %1555 = vmatpush1.msra.mxu0 0.0
    %1556 = vmatprep.subr.mxu0 0.0
    %1557 = vmatpush1.msra.mxu0 0.0
    %1558 = vmatprep.subr.mxu0 0.0
    %1559 = vmatpush1.msra.mxu0 0.0
    %1560 = vmatprep.subr.mxu0 0.0
    %1561 = vmatpush1.msra.mxu0 0.0
    %1562 = vmatprep.subr.mxu0 0.0
    %1563 = vmatpush1.msra.mxu0 0.0
    %1564 = vmatprep.subr.mxu0 0.0
    %1565 = vmatpush1.msra.mxu0 0.0
    %1566 = vmatprep.subr.mxu0 0.0
    %1567 = vmatpush1.msra.mxu0 0.0
    %1568 = vmatprep.subr.mxu0 0.0
    %1569 = vmatpush1.msra.mxu0 0.0
    %1570 = vmatprep.subr.mxu0 0.0
    %1571 = vmatpush1.msra.mxu0 0.0
    %1572 = vmatprep.subr.mxu0 0.0
    %1573 = vmatpush1.msra.mxu0 0.0
    %1574 = vmatprep.subr.mxu0 0.0
    %1575 = vmatpush1.msra.mxu0 0.0
    %1576 = vmatprep.subr.mxu0 0.0
    %1577 = vmatpush1.msra.mxu0 0.0
    %1578 = vmatprep.subr.mxu0 0.0
    %1579 = vmatpush1.msra.mxu0 0.0
    %1580 = vmatprep.subr.mxu0 0.0
    %1581 = vmatpush1.msra.mxu0 0.0
    %1582 = vmatprep.subr.mxu0 0.0
    %1583 = vmatpush1.msra.mxu0 0.0
    %1584 = vmatprep.mubr.f32.mxu0 0.0
    %1585 = vmatmul.mubr.f32.gmra.mrb[0].mxu0 %v1518
    %v1586 = vpop.f32.mrb[0].mxu0
    %v1587 = vadd.f32 0.0, %v1586
    %v1588 = vpop.f32.mrb[0].mxu0
    %1589 = vdwg.mxu0
    %v1590 = vadd.f32 %v1517, %v1587
    %v1591 = vxor.u32 %v1590, 2147483648
    %v1592 = vmul.f32 %v1591, 1.442695
    %v1593 = vpow.pop %v1592
    %v1594 = vadd.f32 %v1593, 1.0
    %v1595 = vrcp.pop %v1594
    %v1596 = vmul.f32 1.0, %v1595
    %v1597 = vtanh.pop %v1590
    %v1598 = vmul.f32 %v1596, %v1298
    %1600 = vrot.lane.b32.xlu0 %v1597, 32
    %v1601 = vpop.permute.xlu0 %1600
    %v1603 = vmul.f32 %v1596, %v1601
    %1605 = vrot.lane.b32.xlu0 %v1603, 32
    %v1606 = vpop.permute.xlu0 %1605
    %v1608 = vadd.f32 %v1598, %v1606
    %v1609 = vtanh.pop %v1608
    %1611 = vrot.lane.b32.xlu0 %v1609, 32
    %v1612 = vpop.permute.xlu0 %1611
    %v1614 = vmul.f32 %v1596, %v1612
    %1616 = vrot.lane.b32.xlu0 %v1614, 64
    %v1617 = vpop.permute.xlu0 %1616
    %1619 = vrot.lane.b32.xlu0 %v1409, 96
    %v1620 = vpop.permute.xlu0 %1619
    %v1622 = vsel %vm250, %v1617, %v1620
    %v1624 = vsel %vm368, %v1622, 0
    %1626 = vmatprep.subr.mxu0 0.0
    %1627 = vmatpush1.msra.mxu0 %v220
    %1628 = vmatprep.subr.mxu0 0.0
    %1629 = vmatpush1.msra.mxu0 %v221
    %1630 = vmatprep.subr.mxu0 0.0
    %1631 = vmatpush1.msra.mxu0 %v222
    %1632 = vmatprep.subr.mxu0 0.0
    %1633 = vmatpush1.msra.mxu0 %v223
    %1634 = vmatprep.subr.mxu0 0.0
    %1635 = vmatpush1.msra.mxu0 %v224
    %1636 = vmatprep.subr.mxu0 0.0
    %1637 = vmatpush1.msra.mxu0 %v225
    %1638 = vmatprep.subr.mxu0 0.0
    %1639 = vmatpush1.msra.mxu0 %v226
    %1640 = vmatprep.subr.mxu0 0.0
    %1641 = vmatpush1.msra.mxu0 %v227
    %1642 = vmatprep.subr.mxu0 0.0
    %1643 = vmatpush1.msra.mxu0 0.0
    %1644 = vmatprep.subr.mxu0 0.0
    %1645 = vmatpush1.msra.mxu0 0.0
    %1646 = vmatprep.subr.mxu0 0.0
    %1647 = vmatpush1.msra.mxu0 0.0
    %1648 = vmatprep.subr.mxu0 0.0
    %1649 = vmatpush1.msra.mxu0 0.0
    %1650 = vmatprep.subr.mxu0 0.0
    %1651 = vmatpush1.msra.mxu0 0.0
    %1652 = vmatprep.subr.mxu0 0.0
    %1653 = vmatpush1.msra.mxu0 0.0
    %1654 = vmatprep.subr.mxu0 0.0
    %1655 = vmatpush1.msra.mxu0 0.0
    %1656 = vmatprep.subr.mxu0 0.0
    %1657 = vmatpush1.msra.mxu0 0.0
    %1658 = vmatprep.subr.mxu0 0.0
    %1659 = vmatpush1.msra.mxu0 0.0
    %1660 = vmatprep.subr.mxu0 0.0
    %1661 = vmatpush1.msra.mxu0 0.0
    %1662 = vmatprep.subr.mxu0 0.0
    %1663 = vmatpush1.msra.mxu0 0.0
    %1664 = vmatprep.subr.mxu0 0.0
    %1665 = vmatpush1.msra.mxu0 0.0
    %1666 = vmatprep.subr.mxu0 0.0
    %1667 = vmatpush1.msra.mxu0 0.0
    %1668 = vmatprep.subr.mxu0 0.0
    %1669 = vmatpush1.msra.mxu0 0.0
    %1670 = vmatprep.subr.mxu0 0.0
    %1671 = vmatpush1.msra.mxu0 0.0
    %1672 = vmatprep.subr.mxu0 0.0
    %1673 = vmatpush1.msra.mxu0 0.0
    %1674 = vmatprep.subr.mxu0 0.0
    %1675 = vmatpush1.msra.mxu0 0.0
    %1676 = vmatprep.subr.mxu0 0.0
    %1677 = vmatpush1.msra.mxu0 0.0
    %1678 = vmatprep.subr.mxu0 0.0
    %1679 = vmatpush1.msra.mxu0 0.0
    %1680 = vmatprep.subr.mxu0 0.0
    %1681 = vmatpush1.msra.mxu0 0.0
    %1682 = vmatprep.subr.mxu0 0.0
    %1683 = vmatpush1.msra.mxu0 0.0
    %1684 = vmatprep.subr.mxu0 0.0
    %1685 = vmatpush1.msra.mxu0 0.0
    %1686 = vmatprep.subr.mxu0 0.0
    %1687 = vmatpush1.msra.mxu0 0.0
    %1688 = vmatprep.subr.mxu0 0.0
    %1689 = vmatpush1.msra.mxu0 0.0
    %1690 = vmatprep.mubr.f32.mxu0 0.0
    %1691 = vmatmul.mubr.f32.gmra.mrb[0].mxu0 %v1624
    %v1692 = vpop.f32.mrb[0].mxu0
    %v1693 = vadd.f32 %v366, %v1692
    %v1694 = vpop.f32.mrb[0].mxu0
    %1695 = vdwg.mxu0
    %v1696 = vxor.u32 %v1693, 2147483648
    %v1697 = vmul.f32 %v1696, 1.442695
    %v1698 = vpow.pop %v1697
    %v1699 = vadd.f32 %v1698, 1.0
    %v1700 = vrcp.pop %v1699
    %v1701 = vmul.f32 1.0, %v1700
    %v1702 = vtanh.pop %v1693
    %v1703 = vmul.f32 %v1701, %v1403
    %1705 = vrot.lane.b32.xlu0 %v1702, 32
    %v1706 = vpop.permute.xlu0 %1705
    %v1708 = vmul.f32 %v1701, %v1706
    %1710 = vrot.lane.b32.xlu0 %v1708, 32
    %v1711 = vpop.permute.xlu0 %1710
    %v1713 = vadd.f32 %v1703, %v1711
    %v1714 = vtanh.pop %v1713
    %1716 = vrot.lane.b32.xlu0 %v1714, 32
    %v1717 = vpop.permute.xlu0 %1716
    %v1719 = vmul.f32 %v1701, %v1717
    %1721 = vrot.lane.b32.xlu0 %v1719, 64
    %v1722 = vpop.permute.xlu0 %1721
    %1725 = vrot.lane.b32.xlu0 %v1515, 96
    %v1726 = vpop.permute.xlu0 %1725
    %v1728 = vsel %vm250, %v1722, %v1726
    %v1730 = vsel %vm368, %v1728, 0
    %1732 = vmatprep.subr.mxu0 0.0
    %1733 = vmatpush1.msra.mxu0 %v229
    %1734 = vmatprep.subr.mxu0 0.0
    %1735 = vmatpush1.msra.mxu0 %v230
    %1736 = vmatprep.subr.mxu0 0.0
    %1737 = vmatpush1.msra.mxu0 %v231
    %1738 = vmatprep.subr.mxu0 0.0
    %1739 = vmatpush1.msra.mxu0 %v232
    %1740 = vmatprep.subr.mxu0 0.0
    %1741 = vmatpush1.msra.mxu0 %v233
    %1742 = vmatprep.subr.mxu0 0.0
    %1743 = vmatpush1.msra.mxu0 %v234
    %1744 = vmatprep.subr.mxu0 0.0
    %1745 = vmatpush1.msra.mxu0 %v235
    %1746 = vmatprep.subr.mxu0 0.0
    %1747 = vmatpush1.msra.mxu0 %v236
    %1748 = vmatprep.subr.mxu0 0.0
    %1749 = vmatpush1.msra.mxu0 0.0
    %1750 = vmatprep.subr.mxu0 0.0
    %1751 = vmatpush1.msra.mxu0 0.0
    %1752 = vmatprep.subr.mxu0 0.0
    %1753 = vmatpush1.msra.mxu0 0.0
    %1754 = vmatprep.subr.mxu0 0.0
    %1755 = vmatpush1.msra.mxu0 0.0
    %1756 = vmatprep.subr.mxu0 0.0
    %1757 = vmatpush1.msra.mxu0 0.0
    %1758 = vmatprep.subr.mxu0 0.0
    %1759 = vmatpush1.msra.mxu0 0.0
    %1760 = vmatprep.subr.mxu0 0.0
    %1761 = vmatpush1.msra.mxu0 0.0
    %1762 = vmatprep.subr.mxu0 0.0
    %1763 = vmatpush1.msra.mxu0 0.0
    %1764 = vmatprep.subr.mxu0 0.0
    %1765 = vmatpush1.msra.mxu0 0.0
    %1766 = vmatprep.subr.mxu0 0.0
    %1767 = vmatpush1.msra.mxu0 0.0
    %1768 = vmatprep.subr.mxu0 0.0
    %1769 = vmatpush1.msra.mxu0 0.0
    %1770 = vmatprep.subr.mxu0 0.0
    %1771 = vmatpush1.msra.mxu0 0.0
    %1772 = vmatprep.subr.mxu0 0.0
    %1773 = vmatpush1.msra.mxu0 0.0
    %1774 = vmatprep.subr.mxu0 0.0
    %1775 = vmatpush1.msra.mxu0 0.0
    %1776 = vmatprep.subr.mxu0 0.0
    %1777 = vmatpush1.msra.mxu0 0.0
    %1778 = vmatprep.subr.mxu0 0.0
    %1779 = vmatpush1.msra.mxu0 0.0
    %1780 = vmatprep.subr.mxu0 0.0
    %1781 = vmatpush1.msra.mxu0 0.0
    %1782 = vmatprep.subr.mxu0 0.0
    %1783 = vmatpush1.msra.mxu0 0.0
    %1784 = vmatprep.subr.mxu0 0.0
    %1785 = vmatpush1.msra.mxu0 0.0
    %1786 = vmatprep.subr.mxu0 0.0
    %1787 = vmatpush1.msra.mxu0 0.0
    %1788 = vmatprep.subr.mxu0 0.0
    %1789 = vmatpush1.msra.mxu0 0.0
    %1790 = vmatprep.subr.mxu0 0.0
    %1791 = vmatpush1.msra.mxu0 0.0
    %1792 = vmatprep.subr.mxu0 0.0
    %1793 = vmatpush1.msra.mxu0 0.0
    %1794 = vmatprep.subr.mxu0 0.0
    %1795 = vmatpush1.msra.mxu0 0.0
    %1796 = vmatprep.mubr.f32.mxu0 0.0
    %1797 = vmatmul.mubr.f32.gmra.mrb[0].mxu0 %v1730
    %v1798 = vpop.f32.mrb[0].mxu0
    %v1799 = vadd.f32 %v483, %v1798
    %v1800 = vpop.f32.mrb[0].mxu0
    %1801 = vdwg.mxu0
    %v1802 = vxor.u32 %v1799, 2147483648
    %v1803 = vmul.f32 %v1802, 1.442695
    %v1804 = vpow.pop %v1803
    %v1805 = vadd.f32 %v1804, 1.0
    %v1806 = vrcp.pop %v1805
    %v1807 = vmul.f32 1.0, %v1806
    %v1808 = vtanh.pop %v1799
    %v1809 = vmul.f32 %v1807, %v1509
    %1811 = vrot.lane.b32.xlu0 %v1808, 32
    %v1812 = vpop.permute.xlu0 %1811
    %v1814 = vmul.f32 %v1807, %v1812
    %1816 = vrot.lane.b32.xlu0 %v1814, 32
    %v1817 = vpop.permute.xlu0 %1816
    %v1819 = vadd.f32 %v1809, %v1817
    %v1820 = vtanh.pop %v1819
    %1822 = vrot.lane.b32.xlu0 %v1820, 32
    %v1823 = vpop.permute.xlu0 %1822
    %v1825 = vmul.f32 %v1807, %v1823
    %s1826 = scalar_lea.vmem [#allocation2], 40
    %v1827 = vld [vmem:[%s1826] sm:$0xff]
    %v1828 = vsel %vm250, %v1617, 0
    %1830 = vmatprep.subr.mxu0 0.0
    %1831 = vmatpush1.msra.mxu0 %v216
    %1832 = vmatprep.subr.mxu0 0.0
    %1833 = vmatpush1.msra.mxu0 %v217
    %1834 = vmatprep.subr.mxu0 0.0
    %1835 = vmatpush1.msra.mxu0 %v218
    %1836 = vmatprep.subr.mxu0 0.0
    %1837 = vmatpush1.msra.mxu0 %v219
    %1838 = vmatprep.subr.mxu0 0.0
    %1839 = vmatpush1.msra.mxu0 0.0
    %1840 = vmatprep.subr.mxu0 0.0
    %1841 = vmatpush1.msra.mxu0 0.0
    %1842 = vmatprep.subr.mxu0 0.0
    %1843 = vmatpush1.msra.mxu0 0.0
    %1844 = vmatprep.subr.mxu0 0.0
    %1845 = vmatpush1.msra.mxu0 0.0
    %1846 = vmatprep.subr.mxu0 0.0
    %1847 = vmatpush1.msra.mxu0 0.0
    %1848 = vmatprep.subr.mxu0 0.0
    %1849 = vmatpush1.msra.mxu0 0.0
    %1850 = vmatprep.subr.mxu0 0.0
    %1851 = vmatpush1.msra.mxu0 0.0
    %1852 = vmatprep.subr.mxu0 0.0
    %1853 = vmatpush1.msra.mxu0 0.0
    %1854 = vmatprep.subr.mxu0 0.0
    %1855 = vmatpush1.msra.mxu0 0.0
    %1856 = vmatprep.subr.mxu0 0.0
    %1857 = vmatpush1.msra.mxu0 0.0
    %1858 = vmatprep.subr.mxu0 0.0
    %1859 = vmatpush1.msra.mxu0 0.0
    %1860 = vmatprep.subr.mxu0 0.0
    %1861 = vmatpush1.msra.mxu0 0.0
    %1862 = vmatprep.subr.mxu0 0.0
    %1863 = vmatpush1.msra.mxu0 0.0
    %1864 = vmatprep.subr.mxu0 0.0
    %1865 = vmatpush1.msra.mxu0 0.0
    %1866 = vmatprep.subr.mxu0 0.0
    %1867 = vmatpush1.msra.mxu0 0.0
    %1868 = vmatprep.subr.mxu0 0.0
    %1869 = vmatpush1.msra.mxu0 0.0
    %1870 = vmatprep.subr.mxu0 0.0
    %1871 = vmatpush1.msra.mxu0 0.0
    %1872 = vmatprep.subr.mxu0 0.0
    %1873 = vmatpush1.msra.mxu0 0.0
    %1874 = vmatprep.subr.mxu0 0.0
    %1875 = vmatpush1.msra.mxu0 0.0
    %1876 = vmatprep.subr.mxu0 0.0
    %1877 = vmatpush1.msra.mxu0 0.0
    %1878 = vmatprep.subr.mxu0 0.0
    %1879 = vmatpush1.msra.mxu0 0.0
    %1880 = vmatprep.subr.mxu0 0.0
    %1881 = vmatpush1.msra.mxu0 0.0
    %1882 = vmatprep.subr.mxu0 0.0
    %1883 = vmatpush1.msra.mxu0 0.0
    %1884 = vmatprep.subr.mxu0 0.0
    %1885 = vmatpush1.msra.mxu0 0.0
    %1886 = vmatprep.subr.mxu0 0.0
    %1887 = vmatpush1.msra.mxu0 0.0
    %1888 = vmatprep.subr.mxu0 0.0
    %1889 = vmatpush1.msra.mxu0 0.0
    %1890 = vmatprep.subr.mxu0 0.0
    %1891 = vmatpush1.msra.mxu0 0.0
    %1892 = vmatprep.subr.mxu0 0.0
    %1893 = vmatpush1.msra.mxu0 0.0
    %1894 = vmatprep.mubr.f32.mxu0 0.0
    %1895 = vmatmul.mubr.f32.gmra.mrb[0].mxu0 %v1828
    %v1896 = vpop.f32.mrb[0].mxu0
    %v1897 = vadd.f32 0.0, %v1896
    %v1898 = vpop.f32.mrb[0].mxu0
    %1899 = vdwg.mxu0
    %v1900 = vadd.f32 %v1827, %v1897
    %v1901 = vxor.u32 %v1900, 2147483648
    %v1902 = vmul.f32 %v1901, 1.442695
    %v1903 = vpow.pop %v1902
    %v1904 = vadd.f32 %v1903, 1.0
    %v1905 = vrcp.pop %v1904
    %v1906 = vmul.f32 1.0, %v1905
    %v1907 = vtanh.pop %v1900
    %v1908 = vmul.f32 %v1906, %v1608
    %1910 = vrot.lane.b32.xlu0 %v1907, 32
    %v1911 = vpop.permute.xlu0 %1910
    %v1913 = vmul.f32 %v1906, %v1911
    %1915 = vrot.lane.b32.xlu0 %v1913, 32
    %v1916 = vpop.permute.xlu0 %1915
    %v1918 = vadd.f32 %v1908, %v1916
    %v1919 = vtanh.pop %v1918
    %1921 = vrot.lane.b32.xlu0 %v1919, 32
    %v1922 = vpop.permute.xlu0 %1921
    %v1924 = vmul.f32 %v1906, %v1922
    %1926 = vrot.lane.b32.xlu0 %v1924, 64
    %v1927 = vpop.permute.xlu0 %1926
    %1929 = vrot.lane.b32.xlu0 %v1719, 96
    %v1930 = vpop.permute.xlu0 %1929
    %v1932 = vsel %vm250, %v1927, %v1930
    %v1934 = vsel %vm368, %v1932, 0
    %1936 = vmatprep.subr.mxu0 0.0
    %1937 = vmatpush1.msra.mxu0 %v220
    %1938 = vmatprep.subr.mxu0 0.0
    %1939 = vmatpush1.msra.mxu0 %v221
    %1940 = vmatprep.subr.mxu0 0.0
    %1941 = vmatpush1.msra.mxu0 %v222
    %1942 = vmatprep.subr.mxu0 0.0
    %1943 = vmatpush1.msra.mxu0 %v223
    %1944 = vmatprep.subr.mxu0 0.0
    %1945 = vmatpush1.msra.mxu0 %v224
    %1946 = vmatprep.subr.mxu0 0.0
    %1947 = vmatpush1.msra.mxu0 %v225
    %1948 = vmatprep.subr.mxu0 0.0
    %1949 = vmatpush1.msra.mxu0 %v226
    %1950 = vmatprep.subr.mxu0 0.0
    %1951 = vmatpush1.msra.mxu0 %v227
    %1952 = vmatprep.subr.mxu0 0.0
    %1953 = vmatpush1.msra.mxu0 0.0
    %1954 = vmatprep.subr.mxu0 0.0
    %1955 = vmatpush1.msra.mxu0 0.0
    %1956 = vmatprep.subr.mxu0 0.0
    %1957 = vmatpush1.msra.mxu0 0.0
    %1958 = vmatprep.subr.mxu0 0.0
    %1959 = vmatpush1.msra.mxu0 0.0
    %1960 = vmatprep.subr.mxu0 0.0
    %1961 = vmatpush1.msra.mxu0 0.0
    %1962 = vmatprep.subr.mxu0 0.0
    %1963 = vmatpush1.msra.mxu0 0.0
    %1964 = vmatprep.subr.mxu0 0.0
    %1965 = vmatpush1.msra.mxu0 0.0
    %1966 = vmatprep.subr.mxu0 0.0
    %1967 = vmatpush1.msra.mxu0 0.0
    %1968 = vmatprep.subr.mxu0 0.0
    %1969 = vmatpush1.msra.mxu0 0.0
    %1970 = vmatprep.subr.mxu0 0.0
    %1971 = vmatpush1.msra.mxu0 0.0
    %1972 = vmatprep.subr.mxu0 0.0
    %1973 = vmatpush1.msra.mxu0 0.0
    %1974 = vmatprep.subr.mxu0 0.0
    %1975 = vmatpush1.msra.mxu0 0.0
    %1976 = vmatprep.subr.mxu0 0.0
    %1977 = vmatpush1.msra.mxu0 0.0
    %1978 = vmatprep.subr.mxu0 0.0
    %1979 = vmatpush1.msra.mxu0 0.0
    %1980 = vmatprep.subr.mxu0 0.0
    %1981 = vmatpush1.msra.mxu0 0.0
    %1982 = vmatprep.subr.mxu0 0.0
    %1983 = vmatpush1.msra.mxu0 0.0
    %1984 = vmatprep.subr.mxu0 0.0
    %1985 = vmatpush1.msra.mxu0 0.0
    %1986 = vmatprep.subr.mxu0 0.0
    %1987 = vmatpush1.msra.mxu0 0.0
    %1988 = vmatprep.subr.mxu0 0.0
    %1989 = vmatpush1.msra.mxu0 0.0
    %1990 = vmatprep.subr.mxu0 0.0
    %1991 = vmatpush1.msra.mxu0 0.0
    %1992 = vmatprep.subr.mxu0 0.0
    %1993 = vmatpush1.msra.mxu0 0.0
    %1994 = vmatprep.subr.mxu0 0.0
    %1995 = vmatpush1.msra.mxu0 0.0
    %1996 = vmatprep.subr.mxu0 0.0
    %1997 = vmatpush1.msra.mxu0 0.0
    %1998 = vmatprep.subr.mxu0 0.0
    %1999 = vmatpush1.msra.mxu0 0.0
    %2000 = vmatprep.mubr.f32.mxu0 0.0
    %2001 = vmatmul.mubr.f32.gmra.mrb[0].mxu0 %v1934
    %v2002 = vpop.f32.mrb[0].mxu0
    %v2003 = vadd.f32 %v366, %v2002
    %v2004 = vpop.f32.mrb[0].mxu0
    %2005 = vdwg.mxu0
    %v2006 = vxor.u32 %v2003, 2147483648
    %v2007 = vmul.f32 %v2006, 1.442695
    %v2008 = vpow.pop %v2007
    %v2009 = vadd.f32 %v2008, 1.0
    %v2010 = vrcp.pop %v2009
    %v2011 = vmul.f32 1.0, %v2010
    %v2012 = vtanh.pop %v2003
    %v2013 = vmul.f32 %v2011, %v1713
    %2015 = vrot.lane.b32.xlu0 %v2012, 32
    %v2016 = vpop.permute.xlu0 %2015
    %v2018 = vmul.f32 %v2011, %v2016
    %2020 = vrot.lane.b32.xlu0 %v2018, 32
    %v2021 = vpop.permute.xlu0 %2020
    %v2023 = vadd.f32 %v2013, %v2021
    %v2024 = vtanh.pop %v2023
    %2026 = vrot.lane.b32.xlu0 %v2024, 32
    %v2027 = vpop.permute.xlu0 %2026
    %v2029 = vmul.f32 %v2011, %v2027
    %2031 = vrot.lane.b32.xlu0 %v2029, 64
    %v2032 = vpop.permute.xlu0 %2031
    %2035 = vrot.lane.b32.xlu0 %v1825, 96
    %v2036 = vpop.permute.xlu0 %2035
    %v2038 = vsel %vm250, %v2032, %v2036
    %v2040 = vsel %vm368, %v2038, 0
    %2042 = vmatprep.subr.mxu0 0.0
    %2043 = vmatpush1.msra.mxu0 %v229
    %2044 = vmatprep.subr.mxu0 0.0
    %2045 = vmatpush1.msra.mxu0 %v230
    %2046 = vmatprep.subr.mxu0 0.0
    %2047 = vmatpush1.msra.mxu0 %v231
    %2048 = vmatprep.subr.mxu0 0.0
    %2049 = vmatpush1.msra.mxu0 %v232
    %2050 = vmatprep.subr.mxu0 0.0
    %2051 = vmatpush1.msra.mxu0 %v233
    %2052 = vmatprep.subr.mxu0 0.0
    %2053 = vmatpush1.msra.mxu0 %v234
    %2054 = vmatprep.subr.mxu0 0.0
    %2055 = vmatpush1.msra.mxu0 %v235
    %2056 = vmatprep.subr.mxu0 0.0
    %2057 = vmatpush1.msra.mxu0 %v236
    %2058 = vmatprep.subr.mxu0 0.0
    %2059 = vmatpush1.msra.mxu0 0.0
    %2060 = vmatprep.subr.mxu0 0.0
    %2061 = vmatpush1.msra.mxu0 0.0
    %2062 = vmatprep.subr.mxu0 0.0
    %2063 = vmatpush1.msra.mxu0 0.0
    %2064 = vmatprep.subr.mxu0 0.0
    %2065 = vmatpush1.msra.mxu0 0.0
    %2066 = vmatprep.subr.mxu0 0.0
    %2067 = vmatpush1.msra.mxu0 0.0
    %2068 = vmatprep.subr.mxu0 0.0
    %2069 = vmatpush1.msra.mxu0 0.0
    %2070 = vmatprep.subr.mxu0 0.0
    %2071 = vmatpush1.msra.mxu0 0.0
    %2072 = vmatprep.subr.mxu0 0.0
    %2073 = vmatpush1.msra.mxu0 0.0
    %2074 = vmatprep.subr.mxu0 0.0
    %2075 = vmatpush1.msra.mxu0 0.0
    %2076 = vmatprep.subr.mxu0 0.0
    %2077 = vmatpush1.msra.mxu0 0.0
    %2078 = vmatprep.subr.mxu0 0.0
    %2079 = vmatpush1.msra.mxu0 0.0
    %2080 = vmatprep.subr.mxu0 0.0
    %2081 = vmatpush1.msra.mxu0 0.0
    %2082 = vmatprep.subr.mxu0 0.0
    %2083 = vmatpush1.msra.mxu0 0.0
    %2084 = vmatprep.subr.mxu0 0.0
    %2085 = vmatpush1.msra.mxu0 0.0
    %2086 = vmatprep.subr.mxu0 0.0
    %2087 = vmatpush1.msra.mxu0 0.0
    %2088 = vmatprep.subr.mxu0 0.0
    %2089 = vmatpush1.msra.mxu0 0.0
    %2090 = vmatprep.subr.mxu0 0.0
    %2091 = vmatpush1.msra.mxu0 0.0
    %2092 = vmatprep.subr.mxu0 0.0
    %2093 = vmatpush1.msra.mxu0 0.0
    %2094 = vmatprep.subr.mxu0 0.0
    %2095 = vmatpush1.msra.mxu0 0.0
    %2096 = vmatprep.subr.mxu0 0.0
    %2097 = vmatpush1.msra.mxu0 0.0
    %2098 = vmatprep.subr.mxu0 0.0
    %2099 = vmatpush1.msra.mxu0 0.0
    %2100 = vmatprep.subr.mxu0 0.0
    %2101 = vmatpush1.msra.mxu0 0.0
    %2102 = vmatprep.subr.mxu0 0.0
    %2103 = vmatpush1.msra.mxu0 0.0
    %2104 = vmatprep.subr.mxu0 0.0
    %2105 = vmatpush1.msra.mxu0 0.0
    %2106 = vmatprep.mubr.f32.mxu0 0.0
    %2107 = vmatmul.mubr.f32.gmra.mrb[0].mxu0 %v2040
    %v2108 = vpop.f32.mrb[0].mxu0
    %v2109 = vadd.f32 %v483, %v2108
    %v2110 = vpop.f32.mrb[0].mxu0
    %2111 = vdwg.mxu0
    %v2112 = vxor.u32 %v2109, 2147483648
    %v2113 = vmul.f32 %v2112, 1.442695
    %v2114 = vpow.pop %v2113
    %v2115 = vadd.f32 %v2114, 1.0
    %v2116 = vrcp.pop %v2115
    %v2117 = vmul.f32 1.0, %v2116
    %v2118 = vtanh.pop %v2109
    %v2119 = vmul.f32 %v2117, %v1819
    %2121 = vrot.lane.b32.xlu0 %v2118, 32
    %v2122 = vpop.permute.xlu0 %2121
    %v2124 = vmul.f32 %v2117, %v2122
    %2126 = vrot.lane.b32.xlu0 %v2124, 32
    %v2127 = vpop.permute.xlu0 %2126
    %v2129 = vadd.f32 %v2119, %v2127
    %v2130 = vtanh.pop %v2129
    %2132 = vrot.lane.b32.xlu0 %v2130, 32
    %v2133 = vpop.permute.xlu0 %2132
    %v2135 = vmul.f32 %v2117, %v2133
    %s2136 = scalar_lea.vmem [#allocation2], 48
    %v2137 = vld [vmem:[%s2136] sm:$0xff]
    %v2138 = vsel %vm250, %v1927, 0
    %2140 = vmatprep.subr.mxu0 0.0
    %2141 = vmatpush1.msra.mxu0 %v216
    %2142 = vmatprep.subr.mxu0 0.0
    %2143 = vmatpush1.msra.mxu0 %v217
    %2144 = vmatprep.subr.mxu0 0.0
    %2145 = vmatpush1.msra.mxu0 %v218
    %2146 = vmatprep.subr.mxu0 0.0
    %2147 = vmatpush1.msra.mxu0 %v219
    %2148 = vmatprep.subr.mxu0 0.0
    %2149 = vmatpush1.msra.mxu0 0.0
    %2150 = vmatprep.subr.mxu0 0.0
    %2151 = vmatpush1.msra.mxu0 0.0
    %2152 = vmatprep.subr.mxu0 0.0
    %2153 = vmatpush1.msra.mxu0 0.0
    %2154 = vmatprep.subr.mxu0 0.0
    %2155 = vmatpush1.msra.mxu0 0.0
    %2156 = vmatprep.subr.mxu0 0.0
    %2157 = vmatpush1.msra.mxu0 0.0
    %2158 = vmatprep.subr.mxu0 0.0
    %2159 = vmatpush1.msra.mxu0 0.0
    %2160 = vmatprep.subr.mxu0 0.0
    %2161 = vmatpush1.msra.mxu0 0.0
    %2162 = vmatprep.subr.mxu0 0.0
    %2163 = vmatpush1.msra.mxu0 0.0
    %2164 = vmatprep.subr.mxu0 0.0
    %2165 = vmatpush1.msra.mxu0 0.0
    %2166 = vmatprep.subr.mxu0 0.0
    %2167 = vmatpush1.msra.mxu0 0.0
    %2168 = vmatprep.subr.mxu0 0.0
    %2169 = vmatpush1.msra.mxu0 0.0
    %2170 = vmatprep.subr.mxu0 0.0
    %2171 = vmatpush1.msra.mxu0 0.0
    %2172 = vmatprep.subr.mxu0 0.0
    %2173 = vmatpush1.msra.mxu0 0.0
    %2174 = vmatprep.subr.mxu0 0.0
    %2175 = vmatpush1.msra.mxu0 0.0
    %2176 = vmatprep.subr.mxu0 0.0
    %2177 = vmatpush1.msra.mxu0 0.0
    %2178 = vmatprep.subr.mxu0 0.0
    %2179 = vmatpush1.msra.mxu0 0.0
    %2180 = vmatprep.subr.mxu0 0.0
    %2181 = vmatpush1.msra.mxu0 0.0
    %2182 = vmatprep.subr.mxu0 0.0
    %2183 = vmatpush1.msra.mxu0 0.0
    %2184 = vmatprep.subr.mxu0 0.0
    %2185 = vmatpush1.msra.mxu0 0.0
    %2186 = vmatprep.subr.mxu0 0.0
    %2187 = vmatpush1.msra.mxu0 0.0
    %2188 = vmatprep.subr.mxu0 0.0
    %2189 = vmatpush1.msra.mxu0 0.0
    %2190 = vmatprep.subr.mxu0 0.0
    %2191 = vmatpush1.msra.mxu0 0.0
    %2192 = vmatprep.subr.mxu0 0.0
    %2193 = vmatpush1.msra.mxu0 0.0
    %2194 = vmatprep.subr.mxu0 0.0
    %2195 = vmatpush1.msra.mxu0 0.0
    %2196 = vmatprep.subr.mxu0 0.0
    %2197 = vmatpush1.msra.mxu0 0.0
    %2198 = vmatprep.subr.mxu0 0.0
    %2199 = vmatpush1.msra.mxu0 0.0
    %2200 = vmatprep.subr.mxu0 0.0
    %2201 = vmatpush1.msra.mxu0 0.0
    %2202 = vmatprep.subr.mxu0 0.0
    %2203 = vmatpush1.msra.mxu0 0.0
    %2204 = vmatprep.mubr.f32.mxu0 0.0
    %2205 = vmatmul.mubr.f32.gmra.mrb[0].mxu0 %v2138
    %v2206 = vpop.f32.mrb[0].mxu0
    %v2207 = vadd.f32 0.0, %v2206
    %v2208 = vpop.f32.mrb[0].mxu0
    %2209 = vdwg.mxu0
    %v2210 = vadd.f32 %v2137, %v2207
    %v2211 = vxor.u32 %v2210, 2147483648
    %v2212 = vmul.f32 %v2211, 1.442695
    %v2213 = vpow.pop %v2212
    %v2214 = vadd.f32 %v2213, 1.0
    %v2215 = vrcp.pop %v2214
    %v2216 = vmul.f32 1.0, %v2215
    %v2217 = vtanh.pop %v2210
    %v2218 = vmul.f32 %v2216, %v1918
    %2220 = vrot.lane.b32.xlu0 %v2217, 32
    %v2221 = vpop.permute.xlu0 %2220
    %v2223 = vmul.f32 %v2216, %v2221
    %2225 = vrot.lane.b32.xlu0 %v2223, 32
    %v2226 = vpop.permute.xlu0 %2225
    %v2228 = vadd.f32 %v2218, %v2226
    %v2229 = vtanh.pop %v2228
    %2231 = vrot.lane.b32.xlu0 %v2229, 32
    %v2232 = vpop.permute.xlu0 %2231
    %v2234 = vmul.f32 %v2216, %v2232
    %2236 = vrot.lane.b32.xlu0 %v2234, 64
    %v2237 = vpop.permute.xlu0 %2236
    %2239 = vrot.lane.b32.xlu0 %v2029, 96
    %v2240 = vpop.permute.xlu0 %2239
    %v2242 = vsel %vm250, %v2237, %v2240
    %v2244 = vsel %vm368, %v2242, 0
    %2246 = vmatprep.subr.mxu0 0.0
    %2247 = vmatpush1.msra.mxu0 %v220
    %2248 = vmatprep.subr.mxu0 0.0
    %2249 = vmatpush1.msra.mxu0 %v221
    %2250 = vmatprep.subr.mxu0 0.0
    %2251 = vmatpush1.msra.mxu0 %v222
    %2252 = vmatprep.subr.mxu0 0.0
    %2253 = vmatpush1.msra.mxu0 %v223
    %2254 = vmatprep.subr.mxu0 0.0
    %2255 = vmatpush1.msra.mxu0 %v224
    %2256 = vmatprep.subr.mxu0 0.0
    %2257 = vmatpush1.msra.mxu0 %v225
    %2258 = vmatprep.subr.mxu0 0.0
    %2259 = vmatpush1.msra.mxu0 %v226
    %2260 = vmatprep.subr.mxu0 0.0
    %2261 = vmatpush1.msra.mxu0 %v227
    %2262 = vmatprep.subr.mxu0 0.0
    %2263 = vmatpush1.msra.mxu0 0.0
    %2264 = vmatprep.subr.mxu0 0.0
    %2265 = vmatpush1.msra.mxu0 0.0
    %2266 = vmatprep.subr.mxu0 0.0
    %2267 = vmatpush1.msra.mxu0 0.0
    %2268 = vmatprep.subr.mxu0 0.0
    %2269 = vmatpush1.msra.mxu0 0.0
    %2270 = vmatprep.subr.mxu0 0.0
    %2271 = vmatpush1.msra.mxu0 0.0
    %2272 = vmatprep.subr.mxu0 0.0
    %2273 = vmatpush1.msra.mxu0 0.0
    %2274 = vmatprep.subr.mxu0 0.0
    %2275 = vmatpush1.msra.mxu0 0.0
    %2276 = vmatprep.subr.mxu0 0.0
    %2277 = vmatpush1.msra.mxu0 0.0
    %2278 = vmatprep.subr.mxu0 0.0
    %2279 = vmatpush1.msra.mxu0 0.0
    %2280 = vmatprep.subr.mxu0 0.0
    %2281 = vmatpush1.msra.mxu0 0.0
    %2282 = vmatprep.subr.mxu0 0.0
    %2283 = vmatpush1.msra.mxu0 0.0
    %2284 = vmatprep.subr.mxu0 0.0
    %2285 = vmatpush1.msra.mxu0 0.0
    %2286 = vmatprep.subr.mxu0 0.0
    %2287 = vmatpush1.msra.mxu0 0.0
    %2288 = vmatprep.subr.mxu0 0.0
    %2289 = vmatpush1.msra.mxu0 0.0
    %2290 = vmatprep.subr.mxu0 0.0
    %2291 = vmatpush1.msra.mxu0 0.0
    %2292 = vmatprep.subr.mxu0 0.0
    %2293 = vmatpush1.msra.mxu0 0.0
    %2294 = vmatprep.subr.mxu0 0.0
    %2295 = vmatpush1.msra.mxu0 0.0
    %2296 = vmatprep.subr.mxu0 0.0
    %2297 = vmatpush1.msra.mxu0 0.0
    %2298 = vmatprep.subr.mxu0 0.0
    %2299 = vmatpush1.msra.mxu0 0.0
    %2300 = vmatprep.subr.mxu0 0.0
    %2301 = vmatpush1.msra.mxu0 0.0
    %2302 = vmatprep.subr.mxu0 0.0
    %2303 = vmatpush1.msra.mxu0 0.0
    %2304 = vmatprep.subr.mxu0 0.0
    %2305 = vmatpush1.msra.mxu0 0.0
    %2306 = vmatprep.subr.mxu0 0.0
    %2307 = vmatpush1.msra.mxu0 0.0
    %2308 = vmatprep.subr.mxu0 0.0
    %2309 = vmatpush1.msra.mxu0 0.0
    %2310 = vmatprep.mubr.f32.mxu0 0.0
    %2311 = vmatmul.mubr.f32.gmra.mrb[0].mxu0 %v2244
    %v2312 = vpop.f32.mrb[0].mxu0
    %v2313 = vadd.f32 %v366, %v2312
    %v2314 = vpop.f32.mrb[0].mxu0
    %2315 = vdwg.mxu0
    %v2316 = vxor.u32 %v2313, 2147483648
    %v2317 = vmul.f32 %v2316, 1.442695
    %v2318 = vpow.pop %v2317
    %v2319 = vadd.f32 %v2318, 1.0
    %v2320 = vrcp.pop %v2319
    %v2321 = vmul.f32 1.0, %v2320
    %v2322 = vtanh.pop %v2313
    %v2323 = vmul.f32 %v2321, %v2023
    %2325 = vrot.lane.b32.xlu0 %v2322, 32
    %v2326 = vpop.permute.xlu0 %2325
    %v2328 = vmul.f32 %v2321, %v2326
    %2330 = vrot.lane.b32.xlu0 %v2328, 32
    %v2331 = vpop.permute.xlu0 %2330
    %v2333 = vadd.f32 %v2323, %v2331
    %v2334 = vtanh.pop %v2333
    %2336 = vrot.lane.b32.xlu0 %v2334, 32
    %v2337 = vpop.permute.xlu0 %2336
    %v2339 = vmul.f32 %v2321, %v2337
    %2341 = vrot.lane.b32.xlu0 %v2339, 64
    %v2342 = vpop.permute.xlu0 %2341
    %2345 = vrot.lane.b32.xlu0 %v2135, 96
    %v2346 = vpop.permute.xlu0 %2345
    %v2348 = vsel %vm250, %v2342, %v2346
    %v2350 = vsel %vm368, %v2348, 0
    %2352 = vmatprep.subr.mxu0 0.0
    %2353 = vmatpush1.msra.mxu0 %v229
    %2354 = vmatprep.subr.mxu0 0.0
    %2355 = vmatpush1.msra.mxu0 %v230
    %2356 = vmatprep.subr.mxu0 0.0
    %2357 = vmatpush1.msra.mxu0 %v231
    %2358 = vmatprep.subr.mxu0 0.0
    %2359 = vmatpush1.msra.mxu0 %v232
    %2360 = vmatprep.subr.mxu0 0.0
    %2361 = vmatpush1.msra.mxu0 %v233
    %2362 = vmatprep.subr.mxu0 0.0
    %2363 = vmatpush1.msra.mxu0 %v234
    %2364 = vmatprep.subr.mxu0 0.0
    %2365 = vmatpush1.msra.mxu0 %v235
    %2366 = vmatprep.subr.mxu0 0.0
    %2367 = vmatpush1.msra.mxu0 %v236
    %2368 = vmatprep.subr.mxu0 0.0
    %2369 = vmatpush1.msra.mxu0 0.0
    %2370 = vmatprep.subr.mxu0 0.0
    %2371 = vmatpush1.msra.mxu0 0.0
    %2372 = vmatprep.subr.mxu0 0.0
    %2373 = vmatpush1.msra.mxu0 0.0
    %2374 = vmatprep.subr.mxu0 0.0
    %2375 = vmatpush1.msra.mxu0 0.0
    %2376 = vmatprep.subr.mxu0 0.0
    %2377 = vmatpush1.msra.mxu0 0.0
    %2378 = vmatprep.subr.mxu0 0.0
    %2379 = vmatpush1.msra.mxu0 0.0
    %2380 = vmatprep.subr.mxu0 0.0
    %2381 = vmatpush1.msra.mxu0 0.0
    %2382 = vmatprep.subr.mxu0 0.0
    %2383 = vmatpush1.msra.mxu0 0.0
    %2384 = vmatprep.subr.mxu0 0.0
    %2385 = vmatpush1.msra.mxu0 0.0
    %2386 = vmatprep.subr.mxu0 0.0
    %2387 = vmatpush1.msra.mxu0 0.0
    %2388 = vmatprep.subr.mxu0 0.0
    %2389 = vmatpush1.msra.mxu0 0.0
    %2390 = vmatprep.subr.mxu0 0.0
    %2391 = vmatpush1.msra.mxu0 0.0
    %2392 = vmatprep.subr.mxu0 0.0
    %2393 = vmatpush1.msra.mxu0 0.0
    %2394 = vmatprep.subr.mxu0 0.0
    %2395 = vmatpush1.msra.mxu0 0.0
    %2396 = vmatprep.subr.mxu0 0.0
    %2397 = vmatpush1.msra.mxu0 0.0
    %2398 = vmatprep.subr.mxu0 0.0
    %2399 = vmatpush1.msra.mxu0 0.0
    %2400 = vmatprep.subr.mxu0 0.0
    %2401 = vmatpush1.msra.mxu0 0.0
    %2402 = vmatprep.subr.mxu0 0.0
    %2403 = vmatpush1.msra.mxu0 0.0
    %2404 = vmatprep.subr.mxu0 0.0
    %2405 = vmatpush1.msra.mxu0 0.0
    %2406 = vmatprep.subr.mxu0 0.0
    %2407 = vmatpush1.msra.mxu0 0.0
    %2408 = vmatprep.subr.mxu0 0.0
    %2409 = vmatpush1.msra.mxu0 0.0
    %2410 = vmatprep.subr.mxu0 0.0
    %2411 = vmatpush1.msra.mxu0 0.0
    %2412 = vmatprep.subr.mxu0 0.0
    %2413 = vmatpush1.msra.mxu0 0.0
    %2414 = vmatprep.subr.mxu0 0.0
    %2415 = vmatpush1.msra.mxu0 0.0
    %2416 = vmatprep.mubr.f32.mxu0 0.0
    %2417 = vmatmul.mubr.f32.gmra.mrb[0].mxu0 %v2350
    %v2418 = vpop.f32.mrb[0].mxu0
    %v2419 = vadd.f32 %v483, %v2418
    %v2420 = vpop.f32.mrb[0].mxu0
    %2421 = vdwg.mxu0
    %v2422 = vxor.u32 %v2419, 2147483648
    %v2423 = vmul.f32 %v2422, 1.442695
    %v2424 = vpow.pop %v2423
    %v2425 = vadd.f32 %v2424, 1.0
    %v2426 = vrcp.pop %v2425
    %v2427 = vmul.f32 1.0, %v2426
    %v2428 = vtanh.pop %v2419
    %v2429 = vmul.f32 %v2427, %v2129
    %2431 = vrot.lane.b32.xlu0 %v2428, 32
    %v2432 = vpop.permute.xlu0 %2431
    %v2434 = vmul.f32 %v2427, %v2432
    %2436 = vrot.lane.b32.xlu0 %v2434, 32
    %v2437 = vpop.permute.xlu0 %2436
    %v2439 = vadd.f32 %v2429, %v2437
    %v2440 = vtanh.pop %v2439
    %2442 = vrot.lane.b32.xlu0 %v2440, 32
    %v2443 = vpop.permute.xlu0 %2442
    %v2445 = vmul.f32 %v2427, %v2443
    %s2446 = scalar_lea.vmem [#allocation2], 56
    %v2447 = vld [vmem:[%s2446] sm:$0xff]
    %v2448 = vsel %vm250, %v2237, 0
    %2450 = vmatprep.subr.mxu0 0.0
    %2451 = vmatpush1.msra.mxu0 %v216
    %2452 = vmatprep.subr.mxu0 0.0
    %2453 = vmatpush1.msra.mxu0 %v217
    %2454 = vmatprep.subr.mxu0 0.0
    %2455 = vmatpush1.msra.mxu0 %v218
    %2456 = vmatprep.subr.mxu0 0.0
    %2457 = vmatpush1.msra.mxu0 %v219
    %2458 = vmatprep.subr.mxu0 0.0
    %2459 = vmatpush1.msra.mxu0 0.0
    %2460 = vmatprep.subr.mxu0 0.0
    %2461 = vmatpush1.msra.mxu0 0.0
    %2462 = vmatprep.subr.mxu0 0.0
    %2463 = vmatpush1.msra.mxu0 0.0
    %2464 = vmatprep.subr.mxu0 0.0
    %2465 = vmatpush1.msra.mxu0 0.0
    %2466 = vmatprep.subr.mxu0 0.0
    %2467 = vmatpush1.msra.mxu0 0.0
    %2468 = vmatprep.subr.mxu0 0.0
    %2469 = vmatpush1.msra.mxu0 0.0
    %2470 = vmatprep.subr.mxu0 0.0
    %2471 = vmatpush1.msra.mxu0 0.0
    %2472 = vmatprep.subr.mxu0 0.0
    %2473 = vmatpush1.msra.mxu0 0.0
    %2474 = vmatprep.subr.mxu0 0.0
    %2475 = vmatpush1.msra.mxu0 0.0
    %2476 = vmatprep.subr.mxu0 0.0
    %2477 = vmatpush1.msra.mxu0 0.0
    %2478 = vmatprep.subr.mxu0 0.0
    %2479 = vmatpush1.msra.mxu0 0.0
    %2480 = vmatprep.subr.mxu0 0.0
    %2481 = vmatpush1.msra.mxu0 0.0
    %2482 = vmatprep.subr.mxu0 0.0
    %2483 = vmatpush1.msra.mxu0 0.0
    %2484 = vmatprep.subr.mxu0 0.0
    %2485 = vmatpush1.msra.mxu0 0.0
    %2486 = vmatprep.subr.mxu0 0.0
    %2487 = vmatpush1.msra.mxu0 0.0
    %2488 = vmatprep.subr.mxu0 0.0
    %2489 = vmatpush1.msra.mxu0 0.0
    %2490 = vmatprep.subr.mxu0 0.0
    %2491 = vmatpush1.msra.mxu0 0.0
    %2492 = vmatprep.subr.mxu0 0.0
    %2493 = vmatpush1.msra.mxu0 0.0
    %2494 = vmatprep.subr.mxu0 0.0
    %2495 = vmatpush1.msra.mxu0 0.0
    %2496 = vmatprep.subr.mxu0 0.0
    %2497 = vmatpush1.msra.mxu0 0.0
    %2498 = vmatprep.subr.mxu0 0.0
    %2499 = vmatpush1.msra.mxu0 0.0
    %2500 = vmatprep.subr.mxu0 0.0
    %2501 = vmatpush1.msra.mxu0 0.0
    %2502 = vmatprep.subr.mxu0 0.0
    %2503 = vmatpush1.msra.mxu0 0.0
    %2504 = vmatprep.subr.mxu0 0.0
    %2505 = vmatpush1.msra.mxu0 0.0
    %2506 = vmatprep.subr.mxu0 0.0
    %2507 = vmatpush1.msra.mxu0 0.0
    %2508 = vmatprep.subr.mxu0 0.0
    %2509 = vmatpush1.msra.mxu0 0.0
    %2510 = vmatprep.subr.mxu0 0.0
    %2511 = vmatpush1.msra.mxu0 0.0
    %2512 = vmatprep.subr.mxu0 0.0
    %2513 = vmatpush1.msra.mxu0 0.0
    %2514 = vmatprep.mubr.f32.mxu0 0.0
    %2515 = vmatmul.mubr.f32.gmra.mrb[0].mxu0 %v2448
    %v2516 = vpop.f32.mrb[0].mxu0
    %v2517 = vadd.f32 0.0, %v2516
    %v2518 = vpop.f32.mrb[0].mxu0
    %2519 = vdwg.mxu0
    %v2520 = vadd.f32 %v2447, %v2517
    %v2521 = vxor.u32 %v2520, 2147483648
    %v2522 = vmul.f32 %v2521, 1.442695
    %v2523 = vpow.pop %v2522
    %v2524 = vadd.f32 %v2523, 1.0
    %v2525 = vrcp.pop %v2524
    %v2526 = vmul.f32 1.0, %v2525
    %v2527 = vtanh.pop %v2520
    %v2528 = vmul.f32 %v2526, %v2228
    %2530 = vrot.lane.b32.xlu0 %v2527, 32
    %v2531 = vpop.permute.xlu0 %2530
    %v2533 = vmul.f32 %v2526, %v2531
    %2535 = vrot.lane.b32.xlu0 %v2533, 32
    %v2536 = vpop.permute.xlu0 %2535
    %v2538 = vadd.f32 %v2528, %v2536
    %v2539 = vtanh.pop %v2538
    %2541 = vrot.lane.b32.xlu0 %v2539, 32
    %v2542 = vpop.permute.xlu0 %2541
    %v2544 = vmul.f32 %v2526, %v2542
    %2546 = vrot.lane.b32.xlu0 %v2544, 64
    %v2547 = vpop.permute.xlu0 %2546
    %2549 = vrot.lane.b32.xlu0 %v2339, 96
    %v2550 = vpop.permute.xlu0 %2549
    %v2552 = vsel %vm250, %v2547, %v2550
    %v2554 = vsel %vm368, %v2552, 0
    %2556 = vmatprep.subr.mxu0 0.0
    %2557 = vmatpush1.msra.mxu0 %v220
    %2558 = vmatprep.subr.mxu0 0.0
    %2559 = vmatpush1.msra.mxu0 %v221
    %2560 = vmatprep.subr.mxu0 0.0
    %2561 = vmatpush1.msra.mxu0 %v222
    %2562 = vmatprep.subr.mxu0 0.0
    %2563 = vmatpush1.msra.mxu0 %v223
    %2564 = vmatprep.subr.mxu0 0.0
    %2565 = vmatpush1.msra.mxu0 %v224
    %2566 = vmatprep.subr.mxu0 0.0
    %2567 = vmatpush1.msra.mxu0 %v225
    %2568 = vmatprep.subr.mxu0 0.0
    %2569 = vmatpush1.msra.mxu0 %v226
    %2570 = vmatprep.subr.mxu0 0.0
    %2571 = vmatpush1.msra.mxu0 %v227
    %2572 = vmatprep.subr.mxu0 0.0
    %2573 = vmatpush1.msra.mxu0 0.0
    %2574 = vmatprep.subr.mxu0 0.0
    %2575 = vmatpush1.msra.mxu0 0.0
    %2576 = vmatprep.subr.mxu0 0.0
    %2577 = vmatpush1.msra.mxu0 0.0
    %2578 = vmatprep.subr.mxu0 0.0
    %2579 = vmatpush1.msra.mxu0 0.0
    %2580 = vmatprep.subr.mxu0 0.0
    %2581 = vmatpush1.msra.mxu0 0.0
    %2582 = vmatprep.subr.mxu0 0.0
    %2583 = vmatpush1.msra.mxu0 0.0
    %2584 = vmatprep.subr.mxu0 0.0
    %2585 = vmatpush1.msra.mxu0 0.0
    %2586 = vmatprep.subr.mxu0 0.0
    %2587 = vmatpush1.msra.mxu0 0.0
    %2588 = vmatprep.subr.mxu0 0.0
    %2589 = vmatpush1.msra.mxu0 0.0
    %2590 = vmatprep.subr.mxu0 0.0
    %2591 = vmatpush1.msra.mxu0 0.0
    %2592 = vmatprep.subr.mxu0 0.0
    %2593 = vmatpush1.msra.mxu0 0.0
    %2594 = vmatprep.subr.mxu0 0.0
    %2595 = vmatpush1.msra.mxu0 0.0
    %2596 = vmatprep.subr.mxu0 0.0
    %2597 = vmatpush1.msra.mxu0 0.0
    %2598 = vmatprep.subr.mxu0 0.0
    %2599 = vmatpush1.msra.mxu0 0.0
    %2600 = vmatprep.subr.mxu0 0.0
    %2601 = vmatpush1.msra.mxu0 0.0
    %2602 = vmatprep.subr.mxu0 0.0
    %2603 = vmatpush1.msra.mxu0 0.0
    %2604 = vmatprep.subr.mxu0 0.0
    %2605 = vmatpush1.msra.mxu0 0.0
    %2606 = vmatprep.subr.mxu0 0.0
    %2607 = vmatpush1.msra.mxu0 0.0
    %2608 = vmatprep.subr.mxu0 0.0
    %2609 = vmatpush1.msra.mxu0 0.0
    %2610 = vmatprep.subr.mxu0 0.0
    %2611 = vmatpush1.msra.mxu0 0.0
    %2612 = vmatprep.subr.mxu0 0.0
    %2613 = vmatpush1.msra.mxu0 0.0
    %2614 = vmatprep.subr.mxu0 0.0
    %2615 = vmatpush1.msra.mxu0 0.0
    %2616 = vmatprep.subr.mxu0 0.0
    %2617 = vmatpush1.msra.mxu0 0.0
    %2618 = vmatprep.subr.mxu0 0.0
    %2619 = vmatpush1.msra.mxu0 0.0
    %2620 = vmatprep.mubr.f32.mxu0 0.0
    %2621 = vmatmul.mubr.f32.gmra.mrb[0].mxu0 %v2554
    %v2622 = vpop.f32.mrb[0].mxu0
    %v2623 = vadd.f32 %v366, %v2622
    %v2624 = vpop.f32.mrb[0].mxu0
    %2625 = vdwg.mxu0
    %v2626 = vxor.u32 %v2623, 2147483648
    %v2627 = vmul.f32 %v2626, 1.442695
    %v2628 = vpow.pop %v2627
    %v2629 = vadd.f32 %v2628, 1.0
    %v2630 = vrcp.pop %v2629
    %v2631 = vmul.f32 1.0, %v2630
    %v2632 = vtanh.pop %v2623
    %v2633 = vmul.f32 %v2631, %v2333
    %2635 = vrot.lane.b32.xlu0 %v2632, 32
    %v2636 = vpop.permute.xlu0 %2635
    %v2638 = vmul.f32 %v2631, %v2636
    %2640 = vrot.lane.b32.xlu0 %v2638, 32
    %v2641 = vpop.permute.xlu0 %2640
    %v2643 = vadd.f32 %v2633, %v2641
    %v2644 = vtanh.pop %v2643
    %2646 = vrot.lane.b32.xlu0 %v2644, 32
    %v2647 = vpop.permute.xlu0 %2646
    %v2649 = vmul.f32 %v2631, %v2647
    %2651 = vrot.lane.b32.xlu0 %v2649, 64
    %v2652 = vpop.permute.xlu0 %2651
    %2655 = vrot.lane.b32.xlu0 %v2445, 96
    %v2656 = vpop.permute.xlu0 %2655
    %v2658 = vsel %vm250, %v2652, %v2656
    %v2660 = vsel %vm368, %v2658, 0
    %2662 = vmatprep.subr.mxu0 0.0
    %2663 = vmatpush1.msra.mxu0 %v229
    %2664 = vmatprep.subr.mxu0 0.0
    %2665 = vmatpush1.msra.mxu0 %v230
    %2666 = vmatprep.subr.mxu0 0.0
    %2667 = vmatpush1.msra.mxu0 %v231
    %2668 = vmatprep.subr.mxu0 0.0
    %2669 = vmatpush1.msra.mxu0 %v232
    %2670 = vmatprep.subr.mxu0 0.0
    %2671 = vmatpush1.msra.mxu0 %v233
    %2672 = vmatprep.subr.mxu0 0.0
    %2673 = vmatpush1.msra.mxu0 %v234
    %2674 = vmatprep.subr.mxu0 0.0
    %2675 = vmatpush1.msra.mxu0 %v235
    %2676 = vmatprep.subr.mxu0 0.0
    %2677 = vmatpush1.msra.mxu0 %v236
    %2678 = vmatprep.subr.mxu0 0.0
    %2679 = vmatpush1.msra.mxu0 0.0
    %2680 = vmatprep.subr.mxu0 0.0
    %2681 = vmatpush1.msra.mxu0 0.0
    %2682 = vmatprep.subr.mxu0 0.0
    %2683 = vmatpush1.msra.mxu0 0.0
    %2684 = vmatprep.subr.mxu0 0.0
    %2685 = vmatpush1.msra.mxu0 0.0
    %2686 = vmatprep.subr.mxu0 0.0
    %2687 = vmatpush1.msra.mxu0 0.0
    %2688 = vmatprep.subr.mxu0 0.0
    %2689 = vmatpush1.msra.mxu0 0.0
    %2690 = vmatprep.subr.mxu0 0.0
    %2691 = vmatpush1.msra.mxu0 0.0
    %2692 = vmatprep.subr.mxu0 0.0
    %2693 = vmatpush1.msra.mxu0 0.0
    %2694 = vmatprep.subr.mxu0 0.0
    %2695 = vmatpush1.msra.mxu0 0.0
    %2696 = vmatprep.subr.mxu0 0.0
    %2697 = vmatpush1.msra.mxu0 0.0
    %2698 = vmatprep.subr.mxu0 0.0
    %2699 = vmatpush1.msra.mxu0 0.0
    %2700 = vmatprep.subr.mxu0 0.0
    %2701 = vmatpush1.msra.mxu0 0.0
    %2702 = vmatprep.subr.mxu0 0.0
    %2703 = vmatpush1.msra.mxu0 0.0
    %2704 = vmatprep.subr.mxu0 0.0
    %2705 = vmatpush1.msra.mxu0 0.0
    %2706 = vmatprep.subr.mxu0 0.0
    %2707 = vmatpush1.msra.mxu0 0.0
    %2708 = vmatprep.subr.mxu0 0.0
    %2709 = vmatpush1.msra.mxu0 0.0
    %2710 = vmatprep.subr.mxu0 0.0
    %2711 = vmatpush1.msra.mxu0 0.0
    %2712 = vmatprep.subr.mxu0 0.0
    %2713 = vmatpush1.msra.mxu0 0.0
    %2714 = vmatprep.subr.mxu0 0.0
    %2715 = vmatpush1.msra.mxu0 0.0
    %2716 = vmatprep.subr.mxu0 0.0
    %2717 = vmatpush1.msra.mxu0 0.0
    %2718 = vmatprep.subr.mxu0 0.0
    %2719 = vmatpush1.msra.mxu0 0.0
    %2720 = vmatprep.subr.mxu0 0.0
    %2721 = vmatpush1.msra.mxu0 0.0
    %2722 = vmatprep.subr.mxu0 0.0
    %2723 = vmatpush1.msra.mxu0 0.0
    %2724 = vmatprep.subr.mxu0 0.0
    %2725 = vmatpush1.msra.mxu0 0.0
    %2726 = vmatprep.mubr.f32.mxu0 0.0
    %2727 = vmatmul.mubr.f32.gmra.mrb[0].mxu0 %v2660
    %v2728 = vpop.f32.mrb[0].mxu0
    %v2729 = vadd.f32 %v483, %v2728
    %v2730 = vpop.f32.mrb[0].mxu0
    %2731 = vdwg.mxu0
    %v2732 = vxor.u32 %v2729, 2147483648
    %v2733 = vmul.f32 %v2732, 1.442695
    %v2734 = vpow.pop %v2733
    %v2735 = vadd.f32 %v2734, 1.0
    %v2736 = vrcp.pop %v2735
    %v2737 = vmul.f32 1.0, %v2736
    %v2738 = vtanh.pop %v2729
    %v2739 = vmul.f32 %v2737, %v2439
    %2741 = vrot.lane.b32.xlu0 %v2738, 32
    %v2742 = vpop.permute.xlu0 %2741
    %v2744 = vmul.f32 %v2737, %v2742
    %2746 = vrot.lane.b32.xlu0 %v2744, 32
    %v2747 = vpop.permute.xlu0 %2746
    %v2749 = vadd.f32 %v2739, %v2747
    %v2750 = vtanh.pop %v2749
    %2752 = vrot.lane.b32.xlu0 %v2750, 32
    %v2753 = vpop.permute.xlu0 %2752
    %v2755 = vmul.f32 %v2737, %v2753
    %2756 = vst.msk [vmem:[#allocation3] sm:$0xff] %vm250, %v2547
    %2758 = vrot.lane.b32.xlu0 %v2538, 96
    %v2759 = vpop.permute.xlu0 %2758
    %2761 = vst.msk [vmem:[%s239] sm:$0xff] %vm250, %v2759
    %2762 = vst.msk [vmem:[%s241] sm:$0xff] %vm250, %v2652
    %2764 = vrot.lane.b32.xlu0 %v2643, 96
    %v2765 = vpop.permute.xlu0 %2764
    %2767 = vst.msk [vmem:[%s243] sm:$0xff] %vm250, %v2765
    %2769 = vrot.lane.b32.xlu0 %v2755, 64
    %v2770 = vpop.permute.xlu0 %2769
    %2772 = vst.msk [vmem:[%s245] sm:$0xff] %vm250, %v2770
    %2774 = vrot.lane.b32.xlu0 %v2749, 96
    %v2775 = vpop.permute.xlu0 %2774
    %2777 = vst.msk [vmem:[%s247] sm:$0xff] %vm250, %v2775
    // Predicated region
    $region58: #{tpu_custom_call.1} parent=1 // pred_check
      %p2778 = pneg %p76
    $region59: #{tpu_custom_call.1} parent=1 // pred_check_branch
      %2780 = sbr.rel (%p2778) target = $region61
    $region60: #{tpu_custom_call.1} parent=1 // pred_region
      %v2781 = vld [vmem:[%s8] sm:$0xff]
      %v2782 = vld [vmem:[%s8 + $0x8] sm:$0xff]
      %v2783 = vld [vmem:[%s8 + $0x10] sm:$0xff]
      %v2784 = vld [vmem:[%s8 + $0x18] sm:$0xff]
      %v2785 = vld [vmem:[%s9] sm:$0x1]
      %v2787 = vlaneseq
      %v2788 = vshrl.u32 %v2787, 7
      %v2789 = vsub.s32 0, %v2788
      %v2790 = vrot.slane %v2785, %v2789
      %v2792 = vsel %vm250, %v2770, 0
      %2794 = vmatprep.subr.mxu0 0.0
      %2795 = vmatpush1.msra.mxu0 %v2781
      %2796 = vmatprep.subr.mxu0 0.0
      %2797 = vmatpush1.msra.mxu0 %v2782
      %2798 = vmatprep.subr.mxu0 0.0
      %2799 = vmatpush1.msra.mxu0 %v2783
      %2800 = vmatprep.subr.mxu0 0.0
      %2801 = vmatpush1.msra.mxu0 %v2784
      %2802 = vmatprep.subr.mxu0 0.0
      %2803 = vmatpush1.msra.mxu0 0.0
      %2804 = vmatprep.subr.mxu0 0.0
      %2805 = vmatpush1.msra.mxu0 0.0
      %2806 = vmatprep.subr.mxu0 0.0
      %2807 = vmatpush1.msra.mxu0 0.0
      %2808 = vmatprep.subr.mxu0 0.0
      %2809 = vmatpush1.msra.mxu0 0.0
      %2810 = vmatprep.subr.mxu0 0.0
      %2811 = vmatpush1.msra.mxu0 0.0
      %2812 = vmatprep.subr.mxu0 0.0
      %2813 = vmatpush1.msra.mxu0 0.0
      %2814 = vmatprep.subr.mxu0 0.0
      %2815 = vmatpush1.msra.mxu0 0.0
      %2816 = vmatprep.subr.mxu0 0.0
      %2817 = vmatpush1.msra.mxu0 0.0
      %2818 = vmatprep.subr.mxu0 0.0
      %2819 = vmatpush1.msra.mxu0 0.0
      %2820 = vmatprep.subr.mxu0 0.0
      %2821 = vmatpush1.msra.mxu0 0.0
      %2822 = vmatprep.subr.mxu0 0.0
      %2823 = vmatpush1.msra.mxu0 0.0
      %2824 = vmatprep.subr.mxu0 0.0
      %2825 = vmatpush1.msra.mxu0 0.0
      %2826 = vmatprep.subr.mxu0 0.0
      %2827 = vmatpush1.msra.mxu0 0.0
      %2828 = vmatprep.subr.mxu0 0.0
      %2829 = vmatpush1.msra.mxu0 0.0
      %2830 = vmatprep.subr.mxu0 0.0
      %2831 = vmatpush1.msra.mxu0 0.0
      %2832 = vmatprep.subr.mxu0 0.0
      %2833 = vmatpush1.msra.mxu0 0.0
      %2834 = vmatprep.subr.mxu0 0.0
      %2835 = vmatpush1.msra.mxu0 0.0
      %2836 = vmatprep.subr.mxu0 0.0
      %2837 = vmatpush1.msra.mxu0 0.0
      %2838 = vmatprep.subr.mxu0 0.0
      %2839 = vmatpush1.msra.mxu0 0.0
      %2840 = vmatprep.subr.mxu0 0.0
      %2841 = vmatpush1.msra.mxu0 0.0
      %2842 = vmatprep.subr.mxu0 0.0
      %2843 = vmatpush1.msra.mxu0 0.0
      %2844 = vmatprep.subr.mxu0 0.0
      %2845 = vmatpush1.msra.mxu0 0.0
      %2846 = vmatprep.subr.mxu0 0.0
      %2847 = vmatpush1.msra.mxu0 0.0
      %2848 = vmatprep.subr.mxu0 0.0
      %2849 = vmatpush1.msra.mxu0 0.0
      %2850 = vmatprep.subr.mxu0 0.0
      %2851 = vmatpush1.msra.mxu0 0.0
      %2852 = vmatprep.subr.mxu0 0.0
      %2853 = vmatpush1.msra.mxu0 0.0
      %2854 = vmatprep.subr.mxu0 0.0
      %2855 = vmatpush1.msra.mxu0 0.0
      %2856 = vmatprep.subr.mxu0 0.0
      %2857 = vmatpush1.msra.mxu0 0.0
      %2858 = vmatprep.mubr.f32.mxu0 0.0
      %2859 = vmatmul.mubr.f32.gmra.mrb[0].mxu0 %v2792
      %v2860 = vpop.f32.mrb[0].mxu0
      %v2861 = vadd.f32 %v2790, %v2860
      %v2862 = vpop.f32.mrb[0].mxu0
      %2863 = vdwg.mxu0
      %v2864 = vmax.f32 %v2861, 0.0
      %v2865 = vmul.f32 %v2864, %v2864
      %v2866 = vsel %vm250, %v2865, 0.0
      %2867 = vadd.xlane.f32.xlu0 %v2866
      %v2868 = vpop.xlane.xlu0 %2867
      %v2869 = vmax.f32 %v2868, 1e-12
      %v2870 = vrsqrt.pop %v2869
      %v2871 = vmul.f32 %v2864, %v2870
      %2872 = vst.msk [vmem:[#allocation10] sm:$0xff] %vm250, %v2871
    $region61: #{tpu_custom_call.1} parent=1 // pred_fallthru
      _
    // Predicated region
    $region62: #{tpu_custom_call.1} parent=1 // pred_check
      _
    $region63: #{tpu_custom_call.1} parent=1 // pred_check_branch
      %2874 = sbr.rel (0) target = $region65
    $region64: #{tpu_custom_call.1} parent=1 // pred_region
      %s2876 = ssub.s32 128, 128
      %2877 = vsyncadd [#allocation6], %s2876
      %s2879 = sshll.u32 [#allocation10], 4
      %s2880 = int_to_ptr.vmem [resolvable:$true] %s2879
      %2882 = dma.vmem_to_hbm [thread:$0]  %s2880, 128, %s10, [#allocation6]
    $region65: #{tpu_custom_call.1} parent=1 // pred_fallthru
      _
    // Predicated region
    $region66: #{tpu_custom_call.1} parent=1 // pred_check
      _
    $region67: #{tpu_custom_call.1} parent=1 // pred_check_branch
      %2884 = sbr.rel (0) target = $region69
    $region68: #{tpu_custom_call.1} parent=1 // pred_region
      %2885 = dma.done [#allocation6], 128
    $region69: #{tpu_custom_call.1} parent=1 // pred_fallthru
      _
    %2886 = vsyncpa [#allocation5], 1
    %2887 = vsyncpa [#allocation8], 1
    %2888 = vsyncpa [#allocation6], 1

</llo_original>
